<compile_context>
chip_gen: v5e
topology: v5e:2x2
jax: 0.10.0
libtpu: 0.0.40
codegen_flags: <defaults>
</compile_context>

<pallas_src>
import functools

import jax
import jax.numpy as jnp
from jax.experimental import pallas as pl
from jax.experimental.pallas import tpu as pltpu


_VMEM = pl.BlockSpec(memory_space=pltpu.MemorySpace.VMEM)   # whole-array, single-buffered
_VMEM_LIMIT = 32 * 1024 * 1024                              # <= half of v7x's 64 MiB VMEM


def _exp_dtype_for_device():
    """bf16 exp only on chips with a bf16 EUP/VPU (v6e / v7x); f32 elsewhere (v5e, older)."""
    try:
        kind = jax.devices()[0].device_kind.lower()
    except Exception:
        return jnp.float32
    return jnp.bfloat16 if ("v6" in kind or "v7" in kind) else jnp.float32


# -----------------------------------------------------------------------------
# Phase 1: feature transform + per-node attention scores (gridded over node tiles)
# -----------------------------------------------------------------------------
def gat_transform_kernel(x_ref, w1_ref, w2_ref, attn_ref,
                         ft_ref, asrc_ref, adst_ref,
                         *, num_heads, out_dim, alpha):
    """One node tile of t_n nodes (nodes on lanes).

    x_ref   : (in_dim, t_n) bf16   node features, feature-major
    w1_ref  : (in_dim, in_dim)     fc1 weight, torch layout (out, in), bf16
    w2_ref  : (H*D, in_dim)        fc2 weight, torch layout, bf16
    attn_ref: (2H, H*D)            block-diag [attn_l; attn_r] projection, bf16
    ft_ref  : (H, D+1, t_n) bf16   out: head-major ft2 with a ones row appended
    asrc_ref: (t_n, H) f32         out: src scores, column layout (src on sublanes)
    adst_ref: (H, t_n) f32         out: dst scores, row layout (dst on lanes)
    """
    t_n = x_ref.shape[1]
    x = x_ref[...]
    ft1 = jnp.dot(w1_ref[...], x, preferred_element_type=jnp.float32)      # (in, t_n)
    h2 = jnp.maximum(ft1, alpha * ft1)                                     # leaky_relu
    ft2 = jnp.dot(w2_ref[...], h2.astype(jnp.bfloat16),
                  preferred_element_type=jnp.float32)                      # (H*D, t_n)
    scores = jnp.dot(attn_ref[...], ft2.astype(jnp.bfloat16),
                     preferred_element_type=jnp.float32)                   # (2H, t_n)

    # Head-major bf16 features; slice ft2 on aligned f32 8-row boundaries.
    for h in range(num_heads):
        ft_ref[h, :out_dim, :] = ft2[h * out_dim:(h + 1) * out_dim, :].astype(jnp.bfloat16)
    # Ones row: folds the softmax denominator into the phase-2 aggregation matmul.
    ft_ref[:, out_dim:out_dim + 1, :] = jnp.ones((num_heads, 1, t_n), jnp.bfloat16)

    asrc_ref[...] = scores[:num_heads, :].T                                # (t_n, H)
    adst_ref[...] = scores[num_heads:, :]                                  # (H, t_n)


# -----------------------------------------------------------------------------
# Phase 2: masked edge-softmax + aggregation, tiled over destination nodes
# -----------------------------------------------------------------------------
def gat_attention_kernel(ft_ref, asrc_ref, adst_ref, adj_ref, out_ref,
                         *, num_heads, out_dim, alpha, apply_elu, exp_dtype):
    """One dst tile (T dst nodes on lanes):

    ft_ref  : (H, D+1, N) bf16  all-node features + ones row (VMEM resident, single copy)
    asrc_ref: (N, H)  f32       src scores, column layout
    adst_ref: (H, T)  f32       dst scores for this tile
    adj_ref : (N, T)  int8      adjacency slice, adj[u, v] = 1 for edge u -> v
    out_ref : (H*D, T)          lane-dense output slab (feature-major)
    """
    mask = adj_ref[...] != 0                                   # int8 compare, no i32 unpack
    a_src = asrc_ref[...]                                      # (N, H)
    a_dst = adst_ref[...]                                      # (H, T)
    neg_inf = jnp.float32(-1e30)

    outs = []
    for h in range(num_heads):
        ft_h = ft_ref[h]                                       # (D+1, N) bf16, ones row last

        # edge_attention: rows = src (sublanes), lanes = dst.
        e = a_dst[h:h + 1, :] + a_src[:, h:h + 1]              # (N, T) f32
        e = jnp.maximum(e, alpha * e)                          # leaky_relu
        e = jnp.where(mask, e, neg_inf)

        # edge_softmax over incoming edges (src axis); masked entries give exp == 0.
        m = jnp.max(e, axis=0, keepdims=True)                  # (1, T)
        p = jnp.exp((e - m).astype(exp_dtype)).astype(jnp.bfloat16)   # (N, T)

        # update_all(u_mul_e, sum) + denominator folded into ONE MXU matmul.
        r = jnp.dot(ft_h, p, preferred_element_type=jnp.float32)      # (D+1, T) f32
        num = r[:out_dim, :]                                   # un-normalized output
        den = r[out_dim:out_dim + 1, :]                        # softmax denominator
        outs.append(num * pl.reciprocal(den, approx=True))     # (D, T)

    out = outs[0] if num_heads == 1 else jnp.concatenate(outs, axis=0)   # (H*D, T)
    if apply_elu:                                              # fused inter-layer ELU
        out = jnp.where(out > 0, out, jnp.exp(out) - 1.0)
    out_ref[...] = out.astype(out_ref.dtype)                   # lane-dense store


# -----------------------------------------------------------------------------
# Wrappers
# -----------------------------------------------------------------------------
def gat_layer(x_t, w1, w2, attn_l, attn_r, adj_i8, *,
              num_heads, out_dim, alpha, t_n, t_dst, apply_elu, out_dtype, exp_dtype):
    in_dim, n = x_t.shape
    hd = num_heads * out_dim
    assert n % t_n == 0 and n % t_dst == 0, "tile sizes must divide node count"

    # Host-side (outside-kernel) prep: bf16 weights, block-diag attention projection.
    x_bf = x_t.astype(jnp.bfloat16)
    w1_bf = w1.astype(jnp.bfloat16)
    w2_bf = w2.astype(jnp.bfloat16)
    eye = jnp.eye(num_heads, dtype=jnp.float32)
    a_l = (eye[:, :, None] * attn_l[:, None, :]).reshape(num_heads, hd)
    a_r = (eye[:, :, None] * attn_r[:, None, :]).reshape(num_heads, hd)
    attn_mat = jnp.concatenate([a_l, a_r], axis=0).astype(jnp.bfloat16)     # (2H, H*D)

    # Phase 1: transform, gridded over node tiles (pipelines x DMA, shards on v7x).
    ft_aug, a_src, a_dst = pl.pallas_call(
        functools.partial(gat_transform_kernel,
                          num_heads=num_heads, out_dim=out_dim, alpha=alpha),
        out_shape=(jax.ShapeDtypeStruct((num_heads, out_dim + 1, n), jnp.bfloat16),
                   jax.ShapeDtypeStruct((n, num_heads), jnp.float32),
                   jax.ShapeDtypeStruct((num_heads, n), jnp.float32)),
        grid=(n // t_n,),
        in_specs=[pl.BlockSpec((in_dim, t_n), lambda i: (0, i)),
                  _VMEM, _VMEM, _VMEM],                          # weights: single-buffered
        out_specs=(pl.BlockSpec((num_heads, out_dim + 1, t_n), lambda i: (0, 0, i)),
                   pl.BlockSpec((t_n, num_heads), lambda i: (i, 0)),
                   pl.BlockSpec((num_heads, t_n), lambda i: (0, i))),
        compiler_params=pltpu.CompilerParams(
            dimension_semantics=("parallel",), vmem_limit_bytes=_VMEM_LIMIT),
    )(x_bf, w1_bf, w2_bf, attn_mat)

    # Phase 2: attention + aggregation, gridded over dst tiles.
    return pl.pallas_call(
        functools.partial(gat_attention_kernel, num_heads=num_heads, out_dim=out_dim,
                          alpha=alpha, apply_elu=apply_elu, exp_dtype=exp_dtype),
        out_shape=jax.ShapeDtypeStruct((hd, n), out_dtype),
        grid=(n // t_dst,),
        in_specs=[
            _VMEM,                                               # ft_aug: whole-array, single copy
            _VMEM,                                               # a_src : whole-array, single copy
            pl.BlockSpec((num_heads, t_dst), lambda i: (0, i)),  # a_dst tile
            pl.BlockSpec((n, t_dst), lambda i: (0, i)),          # adj (src, dst) tile, int8
        ],
        out_specs=pl.BlockSpec((hd, t_dst), lambda i: (0, i)),
        compiler_params=pltpu.CompilerParams(
            dimension_semantics=("parallel",), vmem_limit_bytes=_VMEM_LIMIT),
    )(ft_aug, a_src, a_dst, adj_i8)


def gat2_forward(x, adj_i8, params, *, heads, num_hidden, num_classes, alpha,
                 t_n, t_dst, exp_dtype):
    """GAT2.forward: num_layers=2, activation=ELU, final_activation=None."""
    n = x.shape[0]
    x_t = x.T                                                    # feature-major (in_dim, N)
    p0 = params[0]
    h_t = gat_layer(x_t, p0['w1'], p0['w2'], p0['attn_l'], p0['attn_r'], adj_i8,
                    num_heads=heads[0], out_dim=num_hidden[0], alpha=alpha,
                    t_n=t_n, t_dst=t_dst, apply_elu=True,        # ELU fused into epilogue
                    out_dtype=jnp.bfloat16, exp_dtype=exp_dtype)
    p1 = params[1]
    out_t = gat_layer(h_t, p1['w1'], p1['w2'], p1['attn_l'], p1['attn_r'], adj_i8,
                      num_heads=1, out_dim=num_classes, alpha=alpha,
                      t_n=t_n, t_dst=t_dst, apply_elu=False,
                      out_dtype=jnp.float32, exp_dtype=exp_dtype)
    # torch returns g.ndata['ft'] of shape (N, num_heads=1, num_classes)
    return out_t.T.reshape(n, 1, num_classes)


# -----------------------------------------------------------------------------
# Synthetic parameter init (matches module parameter shapes; xavier_normal gain 1.414)
# -----------------------------------------------------------------------------
def xavier_normal(key, shape, fan_in, fan_out, gain=1.414):
    std = gain * jnp.sqrt(2.0 / (fan_in + fan_out))
    return jax.random.normal(key, shape, dtype=jnp.float32) * std


def init_gat_layer_params(key, in_dim, out_dim, num_heads):
    k1, k2, k3, k4 = jax.random.split(key, 4)
    # nn.Linear weights kept in torch (out, in) layout: exactly what the
    # feature-major kernels consume (ft^T = W @ x^T).
    w1 = xavier_normal(k1, (in_dim, in_dim), in_dim, in_dim)
    w2 = xavier_normal(k2, (num_heads * out_dim, in_dim), in_dim, num_heads * out_dim)
    attn_l = xavier_normal(k3, (num_heads, out_dim), out_dim, 1)
    attn_r = xavier_normal(k4, (num_heads, out_dim), out_dim, 1)
    return dict(w1=w1, w2=w2, attn_l=attn_l, attn_r=attn_r)


if __name__ == "__main__":
    # Small deterministic config.
    N = 256          # number of graph nodes
    IN_DIM = 32
    NUM_HIDDEN = [8]
    HEADS = [4]
    NUM_CLASSES = 8
    ALPHA = 0.2      # leaky-relu negative slope
    T_N = 128        # node tile for phase 1
    T_DST = 128      # dst tile for phase 2 (grid size 2 -> both TCs busy on v7x)

    key = jax.random.PRNGKey(0)
    kx, kadj, kp0, kp1 = jax.random.split(key, 4)

    # Node features.
    x = jax.random.normal(kx, (N, IN_DIM), dtype=jnp.float32)

    # Dense adjacency adj[u, v] = 1 for edge u -> v, with guaranteed self-loops
    # (every node has >= 1 in-edge so the softmax denominator is >= 1).
    adj = (jax.random.uniform(kadj, (N, N)) < 0.05).astype(jnp.float32)
    adj = jnp.maximum(adj, jnp.eye(N, dtype=jnp.float32))
    adj_i8 = adj.astype(jnp.int8)            # (src, dst) int8: 4x less HBM DMA than f32

    # Parameters (deterministic synthetic init matching module shapes).
    params = [
        init_gat_layer_params(kp0, IN_DIM, NUM_HIDDEN[0], HEADS[0]),
        init_gat_layer_params(kp1, NUM_HIDDEN[-1] * HEADS[-1], NUM_CLASSES, 1),
    ]

    exp_dtype = _exp_dtype_for_device()
    fwd = jax.jit(functools.partial(gat2_forward, heads=HEADS, num_hidden=NUM_HIDDEN,
                                    num_classes=NUM_CLASSES, alpha=ALPHA,
                                    t_n=T_N, t_dst=T_DST, exp_dtype=exp_dtype))
    logits = fwd(x, adj_i8, params)
    logits = jax.block_until_ready(logits)
    assert logits.shape == (N, 1, NUM_CLASSES)
    assert bool(jnp.all(jnp.isfinite(logits)))
    print("KERNEL_OK")
</pallas_src>

<mosaic_0001>
module attributes {stable_mosaic.version = 11 : i64} {
  func.func @gat_attention_kernel(%arg0: i32, %arg1: memref<1x9x256xbf16, #tpu.memory_space<vmem>>, %arg2: memref<256x1xf32, #tpu.memory_space<vmem>>, %arg3: memref<1x128xf32, #tpu.memory_space<vmem>>, %arg4: memref<256x128xi8, #tpu.memory_space<vmem>>, %arg5: memref<8x128xf32, #tpu.memory_space<vmem>>) attributes {dimension_semantics = [#tpu.dimension_semantics<parallel>], iteration_bounds = array<i64: 2>, scalar_prefetch = 0 : i64, scratch_operands = 0 : i64, tpu.core_type = #tpu.core_type<tc>, window_params = [{pipeline_mode = #tpu.pipeline_mode<synchronous>, transform_indices = @transform_0, window_bounds = array<i64: 1, 9, 256>}, {pipeline_mode = #tpu.pipeline_mode<synchronous>, transform_indices = @transform_1, window_bounds = array<i64: 256, 1>}, {transform_indices = @transform_2, window_bounds = array<i64: 1, 128>}, {transform_indices = @transform_3, window_bounds = array<i64: 256, 128>}, {transform_indices = @transform_4, window_bounds = array<i64: 8, 128>}]} {
    %c0 = arith.constant 0 : index
    %c0_0 = arith.constant 0 : index
    %0 = vector.load %arg4[%c0, %c0_0] : memref<256x128xi8, #tpu.memory_space<vmem>>, vector<256x128xi8>
    %c0_i8 = arith.constant 0 : i8
    %1 = vector.broadcast %c0_i8 : i8 to vector<256x128xi8>
    %2 = arith.cmpi ne, %0, %1 : vector<256x128xi8>
    %c0_1 = arith.constant 0 : index
    %c0_2 = arith.constant 0 : index
    %3 = vector.load %arg2[%c0_1, %c0_2] : memref<256x1xf32, #tpu.memory_space<vmem>>, vector<256x1xf32>
    %c0_3 = arith.constant 0 : index
    %c0_4 = arith.constant 0 : index
    %4 = vector.load %arg3[%c0_3, %c0_4] : memref<1x128xf32, #tpu.memory_space<vmem>>, vector<1x128xf32>
    %c0_5 = arith.constant 0 : index
    %c0_6 = arith.constant 0 : index
    %c0_7 = arith.constant 0 : index
    %5 = vector.load %arg1[%c0_5, %c0_6, %c0_7] : memref<1x9x256xbf16, #tpu.memory_space<vmem>>, vector<1x9x256xbf16>
    %6 = vector.shape_cast %5 : vector<1x9x256xbf16> to vector<9x256xbf16>
    %7 = vector.broadcast %4 : vector<1x128xf32> to vector<256x128xf32>
    %8 = vector.broadcast %3 : vector<256x1xf32> to vector<256x128xf32>
    %9 = arith.addf %7, %8 : vector<256x128xf32>
    %cst = arith.constant 2.000000e-01 : f32
    %10 = vector.broadcast %cst : f32 to vector<256x128xf32>
    %11 = arith.mulf %10, %9 : vector<256x128xf32>
    %12 = arith.maximumf %9, %11 : vector<256x128xf32>
    %cst_8 = arith.constant -1.000000e+30 : f32
    %13 = vector.broadcast %cst_8 : f32 to vector<256x128xf32>
    %14 = arith.select %2, %12, %13 : vector<256x128xi1>, vector<256x128xf32>
    %cst_9 = arith.constant dense<0xFF800000> : vector<128xf32>
    %15 = vector.multi_reduction <maximumf>, %14, %cst_9 [0] : vector<256x128xf32> to vector<128xf32>
    %16 = vector.shape_cast %15 : vector<128xf32> to vector<1x128xf32>
    %17 = vector.broadcast %16 : vector<1x128xf32> to vector<256x128xf32>
    %18 = arith.subf %14, %17 : vector<256x128xf32>
    %19 = math.exp %18 : vector<256x128xf32>
    %20 = arith.truncf %19 : vector<256x128xf32> to vector<256x128xbf16>
    %cst_10 = arith.constant dense<0.000000e+00> : vector<9x128xf32>
    %21 = tpu.matmul %6, %20, %cst_10 {dimension_numbers = #tpu.dot_dimension_numbers<[1], [0], [0], [1], [0, 0, 1, 1], [], []>} : vector<9x256xbf16>, vector<256x128xbf16>, vector<9x128xf32> -> vector<9x128xf32>
    %22 = vector.extract_strided_slice %21 {offsets = [0, 0], sizes = [8, 128], strides = [1, 1]} : vector<9x128xf32> to vector<8x128xf32>
    %23 = vector.extract_strided_slice %21 {offsets = [8, 0], sizes = [1, 128], strides = [1, 1]} : vector<9x128xf32> to vector<1x128xf32>
    %24 = tpu.reciprocal %23 {approx = true} : vector<1x128xf32> -> vector<1x128xf32>
    %25 = vector.broadcast %24 : vector<1x128xf32> to vector<8x128xf32>
    %26 = arith.mulf %22, %25 : vector<8x128xf32>
    %c0_11 = arith.constant 0 : index
    %c0_12 = arith.constant 0 : index
    %27 = vector.load %arg5[%c0_11, %c0_12] : memref<8x128xf32, #tpu.memory_space<vmem>>, vector<8x128xf32>
    tpu.vector_store %arg5[%c0_11, %c0_12], %26 {strides = array<i32>} : memref<8x128xf32, #tpu.memory_space<vmem>>, vector<8x128xf32>,
    return
  }
  func.func @transform_0(%arg0: i32) -> (i32, i32, i32) {
    %c0_i32 = arith.constant 0 : i32
    %c0_i32_0 = arith.constant 0 : i32
    %c0_i32_1 = arith.constant 0 : i32
    %c0_i32_2 = arith.constant 0 : i32
    return %c0_i32, %c0_i32_0, %c0_i32_1 : i32, i32, i32
  }
  func.func @transform_1(%arg0: i32) -> (i32, i32) {
    %c0_i32 = arith.constant 0 : i32
    %c0_i32_0 = arith.constant 0 : i32
    %c0_i32_1 = arith.constant 0 : i32
    return %c0_i32, %c0_i32_0 : i32, i32
  }
  func.func @transform_2(%arg0: i32) -> (i32, i32) {
    %c0_i32 = arith.constant 0 : i32
    %c0_i32_0 = arith.constant 0 : i32
    return %c0_i32, %arg0 : i32, i32
  }
  func.func @transform_3(%arg0: i32) -> (i32, i32) {
    %c0_i32 = arith.constant 0 : i32
    %c0_i32_0 = arith.constant 0 : i32
    return %c0_i32, %arg0 : i32, i32
  }
  func.func @transform_4(%arg0: i32) -> (i32, i32) {
    %c0_i32 = arith.constant 0 : i32
    %c0_i32_0 = arith.constant 0 : i32
    return %c0_i32, %arg0 : i32, i32
  }
}

module attributes {stable_mosaic.version = 11 : i64} {
  func.func @gat_attention_kernel(%arg0: i32, %arg1: memref<4x9x256xbf16, #tpu.memory_space<vmem>>, %arg2: memref<256x4xf32, #tpu.memory_space<vmem>>, %arg3: memref<4x128xf32, #tpu.memory_space<vmem>>, %arg4: memref<256x128xi8, #tpu.memory_space<vmem>>, %arg5: memref<32x128xbf16, #tpu.memory_space<vmem>>) attributes {dimension_semantics = [#tpu.dimension_semantics<parallel>], iteration_bounds = array<i64: 2>, scalar_prefetch = 0 : i64, scratch_operands = 0 : i64, tpu.core_type = #tpu.core_type<tc>, window_params = [{pipeline_mode = #tpu.pipeline_mode<synchronous>, transform_indices = @transform_0, window_bounds = array<i64: 4, 9, 256>}, {pipeline_mode = #tpu.pipeline_mode<synchronous>, transform_indices = @transform_1, window_bounds = array<i64: 256, 4>}, {transform_indices = @transform_2, window_bounds = array<i64: 4, 128>}, {transform_indices = @transform_3, window_bounds = array<i64: 256, 128>}, {transform_indices = @transform_4, window_bounds = array<i64: 32, 128>}]} {
    %c0 = arith.constant 0 : index
    %c0_0 = arith.constant 0 : index
    %0 = vector.load %arg4[%c0, %c0_0] : memref<256x128xi8, #tpu.memory_space<vmem>>, vector<256x128xi8>
    %c0_i8 = arith.constant 0 : i8
    %1 = vector.broadcast %c0_i8 : i8 to vector<256x128xi8>
    %2 = arith.cmpi ne, %0, %1 : vector<256x128xi8>
    %c0_1 = arith.constant 0 : index
    %c0_2 = arith.constant 0 : index
    %3 = vector.load %arg2[%c0_1, %c0_2] : memref<256x4xf32, #tpu.memory_space<vmem>>, vector<256x4xf32>
    %c0_3 = arith.constant 0 : index
    %c0_4 = arith.constant 0 : index
    %4 = vector.load %arg3[%c0_3, %c0_4] : memref<4x128xf32, #tpu.memory_space<vmem>>, vector<4x128xf32>
    %c0_5 = arith.constant 0 : index
    %c0_6 = arith.constant 0 : index
    %c0_7 = arith.constant 0 : index
    %5 = vector.load %arg1[%c0_5, %c0_6, %c0_7] : memref<4x9x256xbf16, #tpu.memory_space<vmem>>, vector<1x9x256xbf16>
    %6 = vector.shape_cast %5 : vector<1x9x256xbf16> to vector<9x256xbf16>
    %7 = vector.extract_strided_slice %4 {offsets = [0, 0], sizes = [1, 128], strides = [1, 1]} : vector<4x128xf32> to vector<1x128xf32>
    %8 = vector.extract_strided_slice %3 {offsets = [0, 0], sizes = [256, 1], strides = [1, 1]} : vector<256x4xf32> to vector<256x1xf32>
    %9 = vector.broadcast %7 : vector<1x128xf32> to vector<256x128xf32>
    %10 = vector.broadcast %8 : vector<256x1xf32> to vector<256x128xf32>
    %11 = arith.addf %9, %10 : vector<256x128xf32>
    %cst = arith.constant 2.000000e-01 : f32
    %12 = vector.broadcast %cst : f32 to vector<256x128xf32>
    %13 = arith.mulf %12, %11 : vector<256x128xf32>
    %14 = arith.maximumf %11, %13 : vector<256x128xf32>
    %cst_8 = arith.constant -1.000000e+30 : f32
    %15 = vector.broadcast %cst_8 : f32 to vector<256x128xf32>
    %16 = arith.select %2, %14, %15 : vector<256x128xi1>, vector<256x128xf32>
    %cst_9 = arith.constant dense<0xFF800000> : vector<128xf32>
    %17 = vector.multi_reduction <maximumf>, %16, %cst_9 [0] : vector<256x128xf32> to vector<128xf32>
    %18 = vector.shape_cast %17 : vector<128xf32> to vector<1x128xf32>
    %19 = vector.broadcast %18 : vector<1x128xf32> to vector<256x128xf32>
    %20 = arith.subf %16, %19 : vector<256x128xf32>
    %21 = math.exp %20 : vector<256x128xf32>
    %22 = arith.truncf %21 : vector<256x128xf32> to vector<256x128xbf16>
    %cst_10 = arith.constant dense<0.000000e+00> : vector<9x128xf32>
    %23 = tpu.matmul %6, %22, %cst_10 {dimension_numbers = #tpu.dot_dimension_numbers<[1], [0], [0], [1], [0, 0, 1, 1], [], []>} : vector<9x256xbf16>, vector<256x128xbf16>, vector<9x128xf32> -> vector<9x128xf32>
    %24 = vector.extract_strided_slice %23 {offsets = [0, 0], sizes = [8, 128], strides = [1, 1]} : vector<9x128xf32> to vector<8x128xf32>
    %25 = vector.extract_strided_slice %23 {offsets = [8, 0], sizes = [1, 128], strides = [1, 1]} : vector<9x128xf32> to vector<1x128xf32>
    %26 = tpu.reciprocal %25 {approx = true} : vector<1x128xf32> -> vector<1x128xf32>
    %27 = vector.broadcast %26 : vector<1x128xf32> to vector<8x128xf32>
    %28 = arith.mulf %24, %27 : vector<8x128xf32>
    %c1 = arith.constant 1 : index
    %c0_11 = arith.constant 0 : index
    %c0_12 = arith.constant 0 : index
    %29 = vector.load %arg1[%c1, %c0_11, %c0_12] : memref<4x9x256xbf16, #tpu.memory_space<vmem>>, vector<1x9x256xbf16>
    %30 = vector.shape_cast %29 : vector<1x9x256xbf16> to vector<9x256xbf16>
    %31 = vector.extract_strided_slice %4 {offsets = [1, 0], sizes = [1, 128], strides = [1, 1]} : vector<4x128xf32> to vector<1x128xf32>
    %32 = vector.extract_strided_slice %3 {offsets = [0, 1], sizes = [256, 1], strides = [1, 1]} : vector<256x4xf32> to vector<256x1xf32>
    %33 = vector.broadcast %31 : vector<1x128xf32> to vector<256x128xf32>
    %34 = vector.broadcast %32 : vector<256x1xf32> to vector<256x128xf32>
    %35 = arith.addf %33, %34 : vector<256x128xf32>
    %cst_13 = arith.constant 2.000000e-01 : f32
    %36 = vector.broadcast %cst_13 : f32 to vector<256x128xf32>
    %37 = arith.mulf %36, %35 : vector<256x128xf32>
    %38 = arith.maximumf %35, %37 : vector<256x128xf32>
    %cst_14 = arith.constant -1.000000e+30 : f32
    %39 = vector.broadcast %cst_14 : f32 to vector<256x128xf32>
    %40 = arith.select %2, %38, %39 : vector<256x128xi1>, vector<256x128xf32>
    %cst_15 = arith.constant dense<0xFF800000> : vector<128xf32>
    %41 = vector.multi_reduction <maximumf>, %40, %cst_15 [0] : vector<256x128xf32> to vector<128xf32>
    %42 = vector.shape_cast %41 : vector<128xf32> to vector<1x128xf32>
    %43 = vector.broadcast %42 : vector<1x128xf32> to vector<256x128xf32>
    %44 = arith.subf %40, %43 : vector<256x128xf32>
    %45 = math.exp %44 : vector<256x128xf32>
    %46 = arith.truncf %45 : vector<256x128xf32> to vector<256x128xbf16>
    %cst_16 = arith.constant dense<0.000000e+00> : vector<9x128xf32>
    %47 = tpu.matmul %30, %46, %cst_16 {dimension_numbers = #tpu.dot_dimension_numbers<[1], [0], [0], [1], [0, 0, 1, 1], [], []>} : vector<9x256xbf16>, vector<256x128xbf16>, vector<9x128xf32> -> vector<9x128xf32>
    %48 = vector.extract_strided_slice %47 {offsets = [0, 0], sizes = [8, 128], strides = [1, 1]} : vector<9x128xf32> to vector<8x128xf32>
    %49 = vector.extract_strided_slice %47 {offsets = [8, 0], sizes = [1, 128], strides = [1, 1]} : vector<9x128xf32> to vector<1x128xf32>
    %50 = tpu.reciprocal %49 {approx = true} : vector<1x128xf32> -> vector<1x128xf32>
    %51 = vector.broadcast %50 : vector<1x128xf32> to vector<8x128xf32>
    %52 = arith.mulf %48, %51 : vector<8x128xf32>
    %c2 = arith.constant 2 : index
    %c0_17 = arith.constant 0 : index
    %c0_18 = arith.constant 0 : index
    %53 = vector.load %arg1[%c2, %c0_17, %c0_18] : memref<4x9x256xbf16, #tpu.memory_space<vmem>>, vector<1x9x256xbf16>
    %54 = vector.shape_cast %53 : vector<1x9x256xbf16> to vector<9x256xbf16>
    %55 = vector.extract_strided_slice %4 {offsets = [2, 0], sizes = [1, 128], strides = [1, 1]} : vector<4x128xf32> to vector<1x128xf32>
    %56 = vector.extract_strided_slice %3 {offsets = [0, 2], sizes = [256, 1], strides = [1, 1]} : vector<256x4xf32> to vector<256x1xf32>
    %57 = vector.broadcast %55 : vector<1x128xf32> to vector<256x128xf32>
    %58 = vector.broadcast %56 : vector<256x1xf32> to vector<256x128xf32>
    %59 = arith.addf %57, %58 : vector<256x128xf32>
    %cst_19 = arith.constant 2.000000e-01 : f32
    %60 = vector.broadcast %cst_19 : f32 to vector<256x128xf32>
    %61 = arith.mulf %60, %59 : vector<256x128xf32>
    %62 = arith.maximumf %59, %61 : vector<256x128xf32>
    %cst_20 = arith.constant -1.000000e+30 : f32
    %63 = vector.broadcast %cst_20 : f32 to vector<256x128xf32>
    %64 = arith.select %2, %62, %63 : vector<256x128xi1>, vector<256x128xf32>
    %cst_21 = arith.constant dense<0xFF800000> : vector<128xf32>
    %65 = vector.multi_reduction <maximumf>, %64, %cst_21 [0] : vector<256x128xf32> to vector<128xf32>
    %66 = vector.shape_cast %65 : vector<128xf32> to vector<1x128xf32>
    %67 = vector.broadcast %66 : vector<1x128xf32> to vector<256x128xf32>
    %68 = arith.subf %64, %67 : vector<256x128xf32>
    %69 = math.exp %68 : vector<256x128xf32>
    %70 = arith.truncf %69 : vector<256x128xf32> to vector<256x128xbf16>
    %cst_22 = arith.constant dense<0.000000e+00> : vector<9x128xf32>
    %71 = tpu.matmul %54, %70, %cst_22 {dimension_numbers = #tpu.dot_dimension_numbers<[1], [0], [0], [1], [0, 0, 1, 1], [], []>} : vector<9x256xbf16>, vector<256x128xbf16>, vector<9x128xf32> -> vector<9x128xf32>
    %72 = vector.extract_strided_slice %71 {offsets = [0, 0], sizes = [8, 128], strides = [1, 1]} : vector<9x128xf32> to vector<8x128xf32>
    %73 = vector.extract_strided_slice %71 {offsets = [8, 0], sizes = [1, 128], strides = [1, 1]} : vector<9x128xf32> to vector<1x128xf32>
    %74 = tpu.reciprocal %73 {approx = true} : vector<1x128xf32> -> vector<1x128xf32>
    %75 = vector.broadcast %74 : vector<1x128xf32> to vector<8x128xf32>
    %76 = arith.mulf %72, %75 : vector<8x128xf32>
    %c3 = arith.constant 3 : index
    %c0_23 = arith.constant 0 : index
    %c0_24 = arith.constant 0 : index
    %77 = vector.load %arg1[%c3, %c0_23, %c0_24] : memref<4x9x256xbf16, #tpu.memory_space<vmem>>, vector<1x9x256xbf16>
    %78 = vector.shape_cast %77 : vector<1x9x256xbf16> to vector<9x256xbf16>
    %79 = vector.extract_strided_slice %4 {offsets = [3, 0], sizes = [1, 128], strides = [1, 1]} : vector<4x128xf32> to vector<1x128xf32>
    %80 = vector.extract_strided_slice %3 {offsets = [0, 3], sizes = [256, 1], strides = [1, 1]} : vector<256x4xf32> to vector<256x1xf32>
    %81 = vector.broadcast %79 : vector<1x128xf32> to vector<256x128xf32>
    %82 = vector.broadcast %80 : vector<256x1xf32> to vector<256x128xf32>
    %83 = arith.addf %81, %82 : vector<256x128xf32>
    %cst_25 = arith.constant 2.000000e-01 : f32
    %84 = vector.broadcast %cst_25 : f32 to vector<256x128xf32>
    %85 = arith.mulf %84, %83 : vector<256x128xf32>
    %86 = arith.maximumf %83, %85 : vector<256x128xf32>
    %cst_26 = arith.constant -1.000000e+30 : f32
    %87 = vector.broadcast %cst_26 : f32 to vector<256x128xf32>
    %88 = arith.select %2, %86, %87 : vector<256x128xi1>, vector<256x128xf32>
    %cst_27 = arith.constant dense<0xFF800000> : vector<128xf32>
    %89 = vector.multi_reduction <maximumf>, %88, %cst_27 [0] : vector<256x128xf32> to vector<128xf32>
    %90 = vector.shape_cast %89 : vector<128xf32> to vector<1x128xf32>
    %91 = vector.broadcast %90 : vector<1x128xf32> to vector<256x128xf32>
    %92 = arith.subf %88, %91 : vector<256x128xf32>
    %93 = math.exp %92 : vector<256x128xf32>
    %94 = arith.truncf %93 : vector<256x128xf32> to vector<256x128xbf16>
    %cst_28 = arith.constant dense<0.000000e+00> : vector<9x128xf32>
    %95 = tpu.matmul %78, %94, %cst_28 {dimension_numbers = #tpu.dot_dimension_numbers<[1], [0], [0], [1], [0, 0, 1, 1], [], []>} : vector<9x256xbf16>, vector<256x128xbf16>, vector<9x128xf32> -> vector<9x128xf32>
    %96 = vector.extract_strided_slice %95 {offsets = [0, 0], sizes = [8, 128], strides = [1, 1]} : vector<9x128xf32> to vector<8x128xf32>
    %97 = vector.extract_strided_slice %95 {offsets = [8, 0], sizes = [1, 128], strides = [1, 1]} : vector<9x128xf32> to vector<1x128xf32>
    %98 = tpu.reciprocal %97 {approx = true} : vector<1x128xf32> -> vector<1x128xf32>
    %99 = vector.broadcast %98 : vector<1x128xf32> to vector<8x128xf32>
    %100 = arith.mulf %96, %99 : vector<8x128xf32>
    %101 = tpu.concatenate %28, %52, %76, %100 in 0 : vector<8x128xf32>, vector<8x128xf32>, vector<8x128xf32>, vector<8x128xf32> -> vector<32x128xf32>
    %cst_29 = arith.constant 0.000000e+00 : f32
    %102 = vector.broadcast %cst_29 : f32 to vector<32x128xf32>
    %103 = arith.cmpf ogt, %101, %102 : vector<32x128xf32>
    %104 = math.exp %101 : vector<32x128xf32>
    %cst_30 = arith.constant 1.000000e+00 : f32
    %105 = vector.broadcast %cst_30 : f32 to vector<32x128xf32>
    %106 = arith.subf %104, %105 : vector<32x128xf32>
    %107 = arith.select %103, %101, %106 : vector<32x128xi1>, vector<32x128xf32>
    %108 = arith.truncf %107 : vector<32x128xf32> to vector<32x128xbf16>
    %c0_31 = arith.constant 0 : index
    %c0_32 = arith.constant 0 : index
    %109 = vector.load %arg5[%c0_31, %c0_32] : memref<32x128xbf16, #tpu.memory_space<vmem>>, vector<32x128xbf16>
    tpu.vector_store %arg5[%c0_31, %c0_32], %108 {strides = array<i32>} : memref<32x128xbf16, #tpu.memory_space<vmem>>, vector<32x128xbf16>,
    return
  }
  func.func @transform_0(%arg0: i32) -> (i32, i32, i32) {
    %c0_i32 = arith.constant 0 : i32
    %c0_i32_0 = arith.constant 0 : i32
    %c0_i32_1 = arith.constant 0 : i32
    %c0_i32_2 = arith.constant 0 : i32
    return %c0_i32, %c0_i32_0, %c0_i32_1 : i32, i32, i32
  }
  func.func @transform_1(%arg0: i32) -> (i32, i32) {
    %c0_i32 = arith.constant 0 : i32
    %c0_i32_0 = arith.constant 0 : i32
    %c0_i32_1 = arith.constant 0 : i32
    return %c0_i32, %c0_i32_0 : i32, i32
  }
  func.func @transform_2(%arg0: i32) -> (i32, i32) {
    %c0_i32 = arith.constant 0 : i32
    %c0_i32_0 = arith.constant 0 : i32
    return %c0_i32, %arg0 : i32, i32
  }
  func.func @transform_3(%arg0: i32) -> (i32, i32) {
    %c0_i32 = arith.constant 0 : i32
    %c0_i32_0 = arith.constant 0 : i32
    return %c0_i32, %arg0 : i32, i32
  }
  func.func @transform_4(%arg0: i32) -> (i32, i32) {
    %c0_i32 = arith.constant 0 : i32
    %c0_i32_0 = arith.constant 0 : i32
    return %c0_i32, %arg0 : i32, i32
  }
}

module attributes {stable_mosaic.version = 11 : i64} {
  func.func @gat_transform_kernel(%arg0: i32, %arg1: memref<32x128xbf16, #tpu.memory_space<vmem>>, %arg2: memref<32x32xbf16, #tpu.memory_space<vmem>>, %arg3: memref<8x32xbf16, #tpu.memory_space<vmem>>, %arg4: memref<2x8xbf16, #tpu.memory_space<vmem>>, %arg5: memref<1x9x128xbf16, #tpu.memory_space<vmem>>, %arg6: memref<128x1xf32, #tpu.memory_space<vmem>>, %arg7: memref<1x128xf32, #tpu.memory_space<vmem>>) attributes {dimension_semantics = [#tpu.dimension_semantics<parallel>], iteration_bounds = array<i64: 2>, scalar_prefetch = 0 : i64, scratch_operands = 0 : i64, tpu.core_type = #tpu.core_type<tc>, window_params = [{transform_indices = @transform_0, window_bounds = array<i64: 32, 128>}, {pipeline_mode = #tpu.pipeline_mode<synchronous>, transform_indices = @transform_1, window_bounds = array<i64: 32, 32>}, {pipeline_mode = #tpu.pipeline_mode<synchronous>, transform_indices = @transform_2, window_bounds = array<i64: 8, 32>}, {pipeline_mode = #tpu.pipeline_mode<synchronous>, transform_indices = @transform_3, window_bounds = array<i64: 2, 8>}, {transform_indices = @transform_4, window_bounds = array<i64: 1, 9, 128>}, {transform_indices = @transform_5, window_bounds = array<i64: 128, 1>}, {transform_indices = @transform_6, window_bounds = array<i64: 1, 128>}]} {
    %c0 = arith.constant 0 : index
    %c0_0 = arith.constant 0 : index
    %0 = vector.load %arg1[%c0, %c0_0] : memref<32x128xbf16, #tpu.memory_space<vmem>>, vector<32x128xbf16>
    %c0_1 = arith.constant 0 : index
    %c0_2 = arith.constant 0 : index
    %1 = vector.load %arg2[%c0_1, %c0_2] : memref<32x32xbf16, #tpu.memory_space<vmem>>, vector<32x32xbf16>
    %cst = arith.constant dense<0.000000e+00> : vector<32x128xf32>
    %2 = tpu.matmul %1, %0, %cst {dimension_numbers = #tpu.dot_dimension_numbers<[1], [0], [0], [1], [0, 0, 1, 1], [], []>} : vector<32x32xbf16>, vector<32x128xbf16>, vector<32x128xf32> -> vector<32x128xf32>
    %cst_3 = arith.constant 2.000000e-01 : f32
    %3 = vector.broadcast %cst_3 : f32 to vector<32x128xf32>
    %4 = arith.mulf %3, %2 : vector<32x128xf32>
    %5 = arith.maximumf %2, %4 : vector<32x128xf32>
    %c0_4 = arith.constant 0 : index
    %c0_5 = arith.constant 0 : index
    %6 = vector.load %arg3[%c0_4, %c0_5] : memref<8x32xbf16, #tpu.memory_space<vmem>>, vector<8x32xbf16>
    %7 = arith.truncf %5 : vector<32x128xf32> to vector<32x128xbf16>
    %cst_6 = arith.constant dense<0.000000e+00> : vector<8x128xf32>
    %8 = tpu.matmul %6, %7, %cst_6 {dimension_numbers = #tpu.dot_dimension_numbers<[1], [0], [0], [1], [0, 0, 1, 1], [], []>} : vector<8x32xbf16>, vector<32x128xbf16>, vector<8x128xf32> -> vector<8x128xf32>
    %c0_7 = arith.constant 0 : index
    %c0_8 = arith.constant 0 : index
    %9 = vector.load %arg4[%c0_7, %c0_8] : memref<2x8xbf16, #tpu.memory_space<vmem>>, vector<2x8xbf16>
    %10 = arith.truncf %8 : vector<8x128xf32> to vector<8x128xbf16>
    %cst_9 = arith.constant dense<0.000000e+00> : vector<2x128xf32>
    %11 = tpu.matmul %9, %10, %cst_9 {dimension_numbers = #tpu.dot_dimension_numbers<[1], [0], [0], [1], [0, 0, 1, 1], [], []>} : vector<2x8xbf16>, vector<8x128xbf16>, vector<2x128xf32> -> vector<2x128xf32>
    %12 = arith.truncf %8 : vector<8x128xf32> to vector<8x128xbf16>
    %c0_10 = arith.constant 0 : index
    %c0_11 = arith.constant 0 : index
    %c0_12 = arith.constant 0 : index
    %13 = vector.load %arg5[%c0_10, %c0_11, %c0_12] : memref<1x9x128xbf16, #tpu.memory_space<vmem>>, vector<1x8x128xbf16>
    %14 = vector.shape_cast %13 : vector<1x8x128xbf16> to vector<8x128xbf16>
    %15 = vector.shape_cast %12 : vector<8x128xbf16> to vector<1x8x128xbf16>
    tpu.vector_store %arg5[%c0_10, %c0_11, %c0_12], %15 {strides = array<i32>} : memref<1x9x128xbf16, #tpu.memory_space<vmem>>, vector<1x8x128xbf16>,
    %cst_13 = arith.constant 1.000000e+00 : bf16
    %16 = vector.broadcast %cst_13 : bf16 to vector<1x1x128xbf16>
    %c0_14 = arith.constant 0 : index
    %c8 = arith.constant 8 : index
    %c0_15 = arith.constant 0 : index
    %17 = vector.load %arg5[%c0_14, %c8, %c0_15] : memref<1x9x128xbf16, #tpu.memory_space<vmem>>, vector<1x1x128xbf16>
    tpu.vector_store %arg5[%c0_14, %c8, %c0_15], %16 {strides = array<i32>} : memref<1x9x128xbf16, #tpu.memory_space<vmem>>, vector<1x1x128xbf16>,
    %18 = vector.extract_strided_slice %11 {offsets = [0, 0], sizes = [1, 128], strides = [1, 1]} : vector<2x128xf32> to vector<1x128xf32>
    %19 = tpu.transpose %18, [1, 0] : vector<1x128xf32> -> vector<128x1xf32>
    %c0_16 = arith.constant 0 : index
    %c0_17 = arith.constant 0 : index
    %20 = vector.load %arg6[%c0_16, %c0_17] : memref<128x1xf32, #tpu.memory_space<vmem>>, vector<128x1xf32>
    tpu.vector_store %arg6[%c0_16, %c0_17], %19 {strides = array<i32>} : memref<128x1xf32, #tpu.memory_space<vmem>>, vector<128x1xf32>,
    %21 = vector.extract_strided_slice %11 {offsets = [1, 0], sizes = [1, 128], strides = [1, 1]} : vector<2x128xf32> to vector<1x128xf32>
    %c0_18 = arith.constant 0 : index
    %c0_19 = arith.constant 0 : index
    %22 = vector.load %arg7[%c0_18, %c0_19] : memref<1x128xf32, #tpu.memory_space<vmem>>, vector<1x128xf32>
    tpu.vector_store %arg7[%c0_18, %c0_19], %21 {strides = array<i32>} : memref<1x128xf32, #tpu.memory_space<vmem>>, vector<1x128xf32>,
    return
  }
  func.func @transform_0(%arg0: i32) -> (i32, i32) {
    %c0_i32 = arith.constant 0 : i32
    %c0_i32_0 = arith.constant 0 : i32
    return %c0_i32, %arg0 : i32, i32
  }
  func.func @transform_1(%arg0: i32) -> (i32, i32) {
    %c0_i32 = arith.constant 0 : i32
    %c0_i32_0 = arith.constant 0 : i32
    %c0_i32_1 = arith.constant 0 : i32
    return %c0_i32, %c0_i32_0 : i32, i32
  }
  func.func @transform_2(%arg0: i32) -> (i32, i32) {
    %c0_i32 = arith.constant 0 : i32
    %c0_i32_0 = arith.constant 0 : i32
    %c0_i32_1 = arith.constant 0 : i32
    return %c0_i32, %c0_i32_0 : i32, i32
  }
  func.func @transform_3(%arg0: i32) -> (i32, i32) {
    %c0_i32 = arith.constant 0 : i32
    %c0_i32_0 = arith.constant 0 : i32
    %c0_i32_1 = arith.constant 0 : i32
    return %c0_i32, %c0_i32_0 : i32, i32
  }
  func.func @transform_4(%arg0: i32) -> (i32, i32, i32) {
    %c0_i32 = arith.constant 0 : i32
    %c0_i32_0 = arith.constant 0 : i32
    %c0_i32_1 = arith.constant 0 : i32
    return %c0_i32, %c0_i32_0, %arg0 : i32, i32, i32
  }
  func.func @transform_5(%arg0: i32) -> (i32, i32) {
    %c0_i32 = arith.constant 0 : i32
    %c0_i32_0 = arith.constant 0 : i32
    return %arg0, %c0_i32 : i32, i32
  }
  func.func @transform_6(%arg0: i32) -> (i32, i32) {
    %c0_i32 = arith.constant 0 : i32
    %c0_i32_0 = arith.constant 0 : i32
    return %c0_i32, %arg0 : i32, i32
  }
}

module attributes {stable_mosaic.version = 11 : i64} {
  func.func @gat_transform_kernel(%arg0: i32, %arg1: memref<32x128xbf16, #tpu.memory_space<vmem>>, %arg2: memref<32x32xbf16, #tpu.memory_space<vmem>>, %arg3: memref<32x32xbf16, #tpu.memory_space<vmem>>, %arg4: memref<8x32xbf16, #tpu.memory_space<vmem>>, %arg5: memref<4x9x128xbf16, #tpu.memory_space<vmem>>, %arg6: memref<128x4xf32, #tpu.memory_space<vmem>>, %arg7: memref<4x128xf32, #tpu.memory_space<vmem>>) attributes {dimension_semantics = [#tpu.dimension_semantics<parallel>], iteration_bounds = array<i64: 2>, scalar_prefetch = 0 : i64, scratch_operands = 0 : i64, tpu.core_type = #tpu.core_type<tc>, window_params = [{transform_indices = @transform_0, window_bounds = array<i64: 32, 128>}, {pipeline_mode = #tpu.pipeline_mode<synchronous>, transform_indices = @transform_1, window_bounds = array<i64: 32, 32>}, {pipeline_mode = #tpu.pipeline_mode<synchronous>, transform_indices = @transform_2, window_bounds = array<i64: 32, 32>}, {pipeline_mode = #tpu.pipeline_mode<synchronous>, transform_indices = @transform_3, window_bounds = array<i64: 8, 32>}, {transform_indices = @transform_4, window_bounds = array<i64: 4, 9, 128>}, {transform_indices = @transform_5, window_bounds = array<i64: 128, 4>}, {transform_indices = @transform_6, window_bounds = array<i64: 4, 128>}]} {
    %c0 = arith.constant 0 : index
    %c0_0 = arith.constant 0 : index
    %0 = vector.load %arg1[%c0, %c0_0] : memref<32x128xbf16, #tpu.memory_space<vmem>>, vector<32x128xbf16>
    %c0_1 = arith.constant 0 : index
    %c0_2 = arith.constant 0 : index
    %1 = vector.load %arg2[%c0_1, %c0_2] : memref<32x32xbf16, #tpu.memory_space<vmem>>, vector<32x32xbf16>
    %cst = arith.constant dense<0.000000e+00> : vector<32x128xf32>
    %2 = tpu.matmul %1, %0, %cst {dimension_numbers = #tpu.dot_dimension_numbers<[1], [0], [0], [1], [0, 0, 1, 1], [], []>} : vector<32x32xbf16>, vector<32x128xbf16>, vector<32x128xf32> -> vector<32x128xf32>
    %cst_3 = arith.constant 2.000000e-01 : f32
    %3 = vector.broadcast %cst_3 : f32 to vector<32x128xf32>
    %4 = arith.mulf %3, %2 : vector<32x128xf32>
    %5 = arith.maximumf %2, %4 : vector<32x128xf32>
    %c0_4 = arith.constant 0 : index
    %c0_5 = arith.constant 0 : index
    %6 = vector.load %arg3[%c0_4, %c0_5] : memref<32x32xbf16, #tpu.memory_space<vmem>>, vector<32x32xbf16>
    %7 = arith.truncf %5 : vector<32x128xf32> to vector<32x128xbf16>
    %cst_6 = arith.constant dense<0.000000e+00> : vector<32x128xf32>
    %8 = tpu.matmul %6, %7, %cst_6 {dimension_numbers = #tpu.dot_dimension_numbers<[1], [0], [0], [1], [0, 0, 1, 1], [], []>} : vector<32x32xbf16>, vector<32x128xbf16>, vector<32x128xf32> -> vector<32x128xf32>
    %c0_7 = arith.constant 0 : index
    %c0_8 = arith.constant 0 : index
    %9 = vector.load %arg4[%c0_7, %c0_8] : memref<8x32xbf16, #tpu.memory_space<vmem>>, vector<8x32xbf16>
    %10 = arith.truncf %8 : vector<32x128xf32> to vector<32x128xbf16>
    %cst_9 = arith.constant dense<0.000000e+00> : vector<8x128xf32>
    %11 = tpu.matmul %9, %10, %cst_9 {dimension_numbers = #tpu.dot_dimension_numbers<[1], [0], [0], [1], [0, 0, 1, 1], [], []>} : vector<8x32xbf16>, vector<32x128xbf16>, vector<8x128xf32> -> vector<8x128xf32>
    %12 = vector.extract_strided_slice %8 {offsets = [0, 0], sizes = [8, 128], strides = [1, 1]} : vector<32x128xf32> to vector<8x128xf32>
    %13 = arith.truncf %12 : vector<8x128xf32> to vector<8x128xbf16>
    %c0_10 = arith.constant 0 : index
    %c0_11 = arith.constant 0 : index
    %c0_12 = arith.constant 0 : index
    %14 = vector.load %arg5[%c0_10, %c0_11, %c0_12] : memref<4x9x128xbf16, #tpu.memory_space<vmem>>, vector<1x8x128xbf16>
    %15 = vector.shape_cast %14 : vector<1x8x128xbf16> to vector<8x128xbf16>
    %16 = vector.shape_cast %13 : vector<8x128xbf16> to vector<1x8x128xbf16>
    tpu.vector_store %arg5[%c0_10, %c0_11, %c0_12], %16 {strides = array<i32>} : memref<4x9x128xbf16, #tpu.memory_space<vmem>>, vector<1x8x128xbf16>,
    %17 = vector.extract_strided_slice %8 {offsets = [8, 0], sizes = [8, 128], strides = [1, 1]} : vector<32x128xf32> to vector<8x128xf32>
    %18 = arith.truncf %17 : vector<8x128xf32> to vector<8x128xbf16>
    %c1 = arith.constant 1 : index
    %c0_13 = arith.constant 0 : index
    %c0_14 = arith.constant 0 : index
    %19 = vector.load %arg5[%c1, %c0_13, %c0_14] : memref<4x9x128xbf16, #tpu.memory_space<vmem>>, vector<1x8x128xbf16>
    %20 = vector.shape_cast %19 : vector<1x8x128xbf16> to vector<8x128xbf16>
    %21 = vector.shape_cast %18 : vector<8x128xbf16> to vector<1x8x128xbf16>
    tpu.vector_store %arg5[%c1, %c0_13, %c0_14], %21 {strides = array<i32>} : memref<4x9x128xbf16, #tpu.memory_space<vmem>>, vector<1x8x128xbf16>,
    %22 = vector.extract_strided_slice %8 {offsets = [16, 0], sizes = [8, 128], strides = [1, 1]} : vector<32x128xf32> to vector<8x128xf32>
    %23 = arith.truncf %22 : vector<8x128xf32> to vector<8x128xbf16>
    %c2 = arith.constant 2 : index
    %c0_15 = arith.constant 0 : index
    %c0_16 = arith.constant 0 : index
    %24 = vector.load %arg5[%c2, %c0_15, %c0_16] : memref<4x9x128xbf16, #tpu.memory_space<vmem>>, vector<1x8x128xbf16>
    %25 = vector.shape_cast %24 : vector<1x8x128xbf16> to vector<8x128xbf16>
    %26 = vector.shape_cast %23 : vector<8x128xbf16> to vector<1x8x128xbf16>
    tpu.vector_store %arg5[%c2, %c0_15, %c0_16], %26 {strides = array<i32>} : memref<4x9x128xbf16, #tpu.memory_space<vmem>>, vector<1x8x128xbf16>,
    %27 = vector.extract_strided_slice %8 {offsets = [24, 0], sizes = [8, 128], strides = [1, 1]} : vector<32x128xf32> to vector<8x128xf32>
    %28 = arith.truncf %27 : vector<8x128xf32> to vector<8x128xbf16>
    %c3 = arith.constant 3 : index
    %c0_17 = arith.constant 0 : index
    %c0_18 = arith.constant 0 : index
    %29 = vector.load %arg5[%c3, %c0_17, %c0_18] : memref<4x9x128xbf16, #tpu.memory_space<vmem>>, vector<1x8x128xbf16>
    %30 = vector.shape_cast %29 : vector<1x8x128xbf16> to vector<8x128xbf16>
    %31 = vector.shape_cast %28 : vector<8x128xbf16> to vector<1x8x128xbf16>
    tpu.vector_store %arg5[%c3, %c0_17, %c0_18], %31 {strides = array<i32>} : memref<4x9x128xbf16, #tpu.memory_space<vmem>>, vector<1x8x128xbf16>,
    %cst_19 = arith.constant 1.000000e+00 : bf16
    %32 = vector.broadcast %cst_19 : bf16 to vector<4x1x128xbf16>
    %c0_20 = arith.constant 0 : index
    %c8 = arith.constant 8 : index
    %c0_21 = arith.constant 0 : index
    %33 = vector.load %arg5[%c0_20, %c8, %c0_21] : memref<4x9x128xbf16, #tpu.memory_space<vmem>>, vector<4x1x128xbf16>
    tpu.vector_store %arg5[%c0_20, %c8, %c0_21], %32 {strides = array<i32>} : memref<4x9x128xbf16, #tpu.memory_space<vmem>>, vector<4x1x128xbf16>,
    %34 = vector.extract_strided_slice %11 {offsets = [0, 0], sizes = [4, 128], strides = [1, 1]} : vector<8x128xf32> to vector<4x128xf32>
    %35 = tpu.transpose %34, [1, 0] : vector<4x128xf32> -> vector<128x4xf32>
    %c0_22 = arith.constant 0 : index
    %c0_23 = arith.constant 0 : index
    %36 = vector.load %arg6[%c0_22, %c0_23] : memref<128x4xf32, #tpu.memory_space<vmem>>, vector<128x4xf32>
    tpu.vector_store %arg6[%c0_22, %c0_23], %35 {strides = array<i32>} : memref<128x4xf32, #tpu.memory_space<vmem>>, vector<128x4xf32>,
    %37 = vector.extract_strided_slice %11 {offsets = [4, 0], sizes = [4, 128], strides = [1, 1]} : vector<8x128xf32> to vector<4x128xf32>
    %c0_24 = arith.constant 0 : index
    %c0_25 = arith.constant 0 : index
    %38 = vector.load %arg7[%c0_24, %c0_25] : memref<4x128xf32, #tpu.memory_space<vmem>>, vector<4x128xf32>
    tpu.vector_store %arg7[%c0_24, %c0_25], %37 {strides = array<i32>} : memref<4x128xf32, #tpu.memory_space<vmem>>, vector<4x128xf32>,
    return
  }
  func.func @transform_0(%arg0: i32) -> (i32, i32) {
    %c0_i32 = arith.constant 0 : i32
    %c0_i32_0 = arith.constant 0 : i32
    return %c0_i32, %arg0 : i32, i32
  }
  func.func @transform_1(%arg0: i32) -> (i32, i32) {
    %c0_i32 = arith.constant 0 : i32
    %c0_i32_0 = arith.constant 0 : i32
    %c0_i32_1 = arith.constant 0 : i32
    return %c0_i32, %c0_i32_0 : i32, i32
  }
  func.func @transform_2(%arg0: i32) -> (i32, i32) {
    %c0_i32 = arith.constant 0 : i32
    %c0_i32_0 = arith.constant 0 : i32
    %c0_i32_1 = arith.constant 0 : i32
    return %c0_i32, %c0_i32_0 : i32, i32
  }
  func.func @transform_3(%arg0: i32) -> (i32, i32) {
    %c0_i32 = arith.constant 0 : i32
    %c0_i32_0 = arith.constant 0 : i32
    %c0_i32_1 = arith.constant 0 : i32
    return %c0_i32, %c0_i32_0 : i32, i32
  }
  func.func @transform_4(%arg0: i32) -> (i32, i32, i32) {
    %c0_i32 = arith.constant 0 : i32
    %c0_i32_0 = arith.constant 0 : i32
    %c0_i32_1 = arith.constant 0 : i32
    return %c0_i32, %c0_i32_0, %arg0 : i32, i32, i32
  }
  func.func @transform_5(%arg0: i32) -> (i32, i32) {
    %c0_i32 = arith.constant 0 : i32
    %c0_i32_0 = arith.constant 0 : i32
    return %arg0, %c0_i32 : i32, i32
  }
  func.func @transform_6(%arg0: i32) -> (i32, i32) {
    %c0_i32 = arith.constant 0 : i32
    %c0_i32_0 = arith.constant 0 : i32
    return %c0_i32, %arg0 : i32, i32
  }
}

</mosaic_0001>

<llo_original>
// kernel: gat2_forward.4
$region0: #{gat2_forward.4}
  #allocation0 [shape = 'u32[]', space=smem, size = 0x4, offset = 0x4, fixed_abs, tag = 'smem constant byte address 0x4 - core index']
  #allocation1 [shape = 'u32[72,128]{1,0:T(1,128)}', space=vmem, size = 0x9000, scoped, tag = 'internal scratch']
  %s0 = inlined_call_operand.vmem [shape: bf16[32,256], index: 0, kind: input, shape index: {}]
  %s1 = inlined_call_operand.vmem [shape: bf16[32,32], index: 1, kind: input, shape index: {}]
  %s2 = inlined_call_operand.vmem [shape: bf16[32,32], index: 2, kind: input, shape index: {}]
  %s3 = inlined_call_operand.vmem [shape: bf16[8,32], index: 3, kind: input, shape index: {}]
  %s4 = inlined_call_operand.vmem [shape: bf16[4,9,256], index: 4, kind: output, shape index: {0}]
  %s5 = inlined_call_operand.vmem [shape: f32[256,4], index: 5, kind: output, shape index: {1}]
  %s6 = inlined_call_operand.vmem [shape: f32[4,256], index: 6, kind: output, shape index: {2}]
  %7 = xla_tuple %s4, %s5, %s6
  %s8 = sld [smem:[#allocation0]]
  $region143: #{gat2_forward.4} parent=0
    _
  %s10 = ssub.s32 1, %s8
  %s11 = scalar_select 0, %s10, %s8
  $region1: #{gat2_forward.4} parent=0
    #allocation2 [shape = 'u8[16384]{0}', space=vmem, size = 0x4000, scoped, tag = 'input window, operand 0']
    #allocation3 [shape = 'u8[32768]{0}', space=vmem, size = 0x8000, scoped, tag = 'output window, operand 0']
    loop: start=0, step=1, limit=4
    $region2: #{gat2_forward.4} parent=1 // loop_pre_header
      _
    $region3: #{gat2_forward.4} parent=1 // loop_header
      %s13 = sphi 0, %s17
      %p14 = scmp.ge.s32.totalorder %s13, 4
      %s23 = sphi 0, %s25
      %s26 = sphi 0, %s23
      %s27 = sphi 0, %s26
      %s43 = sphi 0, %s27
      %s47 = sphi 0, %s47
      %s49 = sphi 0, %s47
      %s50 = sphi 0, %s49
      %s64 = sphi 0, %s50
      %s68 = sphi 0, %s68
      %s70 = sphi 0, %s68
      %s71 = sphi 0, %s70
      %s85 = sphi 0, %s71
      %s89 = sphi 0, %s89
      %s91 = sphi 0, %s89
      %s92 = sphi 0, %s91
      %s106 = sphi 0, %s92
      %s112 = sphi 0, %s114
      %s115 = sphi 0, %s112
      %s116 = sphi 0, %s115
      %s132 = sphi 0, %s116
      %s138 = sphi 0, %s140
      %s141 = sphi 0, %s138
      %s142 = sphi 0, %s141
      %s158 = sphi 0, %s142
      %s164 = sphi 0, %s166
      %s167 = sphi 0, %s164
      %s168 = sphi 0, %s167
      %s184 = sphi 0, %s168
    $region4: #{gat2_forward.4} parent=1 // loop_header_branch
      %16 = sbr.rel (%p14) target = $region8
    $region5: #{gat2_forward.4} parent=1 // loop_body
      %s18 = ssub.s32 %s13, 1
      %s19 = ssub.s32 %s13, 2
      %s20 = sadd.s32 %s13, 1
      %s21 = ssub.s32 %s13, %s20
      %p22 = scmp.eq.s32.totalorder %s21, 0
      %s24 = sadd.s32 %s23, 1
      %s25 = scalar_select %p22, %s23, %s24
      %p28 = pneg %p22
      %p29 = scmp.eq.s32.totalorder %s13, 1
      %p30 = por %p28, %p29
      %p31 = scmp.ne.s32.totalorder %s23, %s26
      %p32 = scmp.eq.s32.totalorder %s13, 0
      %p33 = por %p31, %p32
      %p34 = scmp.ne.s32.totalorder %s23, %s26
      %p35 = scmp.eq.s32.totalorder %s18, 1
      %p36 = por %p34, %p35
      %p37 = scmp.ne.s32.totalorder %s26, %s27
      %p38 = scmp.eq.s32.totalorder %s18, 0
      %p39 = por %p37, %p38
      %p40 = scmp.ne.s32.totalorder %s26, %s27
      %p41 = scmp.eq.s32.totalorder %s19, 1
      %p42 = por %p40, %p41
      %p44 = scmp.ne.s32.totalorder %s27, %s43
      %p45 = scmp.eq.s32.totalorder %s19, 0
      %p46 = por %p44, %p45
      %s48 = sadd.s32 %s47, 1
      %p51 = scmp.eq.s32.totalorder %s13, 1
      %p52 = scmp.ne.s32.totalorder %s47, %s49
      %p53 = scmp.eq.s32.totalorder %s13, 0
      %p54 = por %p52, %p53
      %p55 = scmp.ne.s32.totalorder %s47, %s49
      %p56 = scmp.eq.s32.totalorder %s18, 1
      %p57 = por %p55, %p56
      %p58 = scmp.ne.s32.totalorder %s49, %s50
      %p59 = scmp.eq.s32.totalorder %s18, 0
      %p60 = por %p58, %p59
      %p61 = scmp.ne.s32.totalorder %s49, %s50
      %p62 = scmp.eq.s32.totalorder %s19, 1
      %p63 = por %p61, %p62
      %p65 = scmp.ne.s32.totalorder %s50, %s64
      %p66 = scmp.eq.s32.totalorder %s19, 0
      %p67 = por %p65, %p66
      %s69 = sadd.s32 %s68, 1
      %p72 = scmp.eq.s32.totalorder %s13, 1
      %p73 = scmp.ne.s32.totalorder %s68, %s70
      %p74 = scmp.eq.s32.totalorder %s13, 0
      %p75 = por %p73, %p74
      %p76 = scmp.ne.s32.totalorder %s68, %s70
      %p77 = scmp.eq.s32.totalorder %s18, 1
      %p78 = por %p76, %p77
      %p79 = scmp.ne.s32.totalorder %s70, %s71
      %p80 = scmp.eq.s32.totalorder %s18, 0
      %p81 = por %p79, %p80
      %p82 = scmp.ne.s32.totalorder %s70, %s71
      %p83 = scmp.eq.s32.totalorder %s19, 1
      %p84 = por %p82, %p83
      %p86 = scmp.ne.s32.totalorder %s71, %s85
      %p87 = scmp.eq.s32.totalorder %s19, 0
      %p88 = por %p86, %p87
      %s90 = sadd.s32 %s89, 1
      %p93 = scmp.eq.s32.totalorder %s13, 1
      %p94 = scmp.ne.s32.totalorder %s89, %s91
      %p95 = scmp.eq.s32.totalorder %s13, 0
      %p96 = por %p94, %p95
      %p97 = scmp.ne.s32.totalorder %s89, %s91
      %p98 = scmp.eq.s32.totalorder %s18, 1
      %p99 = por %p97, %p98
      %p100 = scmp.ne.s32.totalorder %s91, %s92
      %p101 = scmp.eq.s32.totalorder %s18, 0
      %p102 = por %p100, %p101
      %p103 = scmp.ne.s32.totalorder %s91, %s92
      %p104 = scmp.eq.s32.totalorder %s19, 1
      %p105 = por %p103, %p104
      %p107 = scmp.ne.s32.totalorder %s92, %s106
      %p108 = scmp.eq.s32.totalorder %s19, 0
      %p109 = por %p107, %p108
      %s110 = ssub.s32 %s13, %s20
      %p111 = scmp.eq.s32.totalorder %s110, 0
      %s113 = sadd.s32 %s112, 1
      %s114 = scalar_select %p111, %s112, %s113
      %p117 = pneg %p111
      %p118 = scmp.eq.s32.totalorder %s13, 1
      %p119 = por %p117, %p118
      %p120 = scmp.ne.s32.totalorder %s112, %s115
      %p121 = scmp.eq.s32.totalorder %s13, 0
      %p122 = por %p120, %p121
      %p123 = scmp.ne.s32.totalorder %s112, %s115
      %p124 = scmp.eq.s32.totalorder %s18, 1
      %p125 = por %p123, %p124
      %p126 = scmp.ne.s32.totalorder %s115, %s116
      %p127 = scmp.eq.s32.totalorder %s18, 0
      %p128 = por %p126, %p127
      %p129 = scmp.ne.s32.totalorder %s115, %s116
      %p130 = scmp.eq.s32.totalorder %s19, 1
      %p131 = por %p129, %p130
      %p133 = scmp.ne.s32.totalorder %s116, %s132
      %p134 = scmp.eq.s32.totalorder %s19, 0
      %p135 = por %p133, %p134
      %s136 = ssub.s32 %s13, %s20
      %p137 = scmp.eq.s32.totalorder %s136, 0
      %s139 = sadd.s32 %s138, 1
      %s140 = scalar_select %p137, %s138, %s139
      %p143 = pneg %p137
      %p144 = scmp.eq.s32.totalorder %s13, 1
      %p145 = por %p143, %p144
      %p146 = scmp.ne.s32.totalorder %s138, %s141
      %p147 = scmp.eq.s32.totalorder %s13, 0
      %p148 = por %p146, %p147
      %p149 = scmp.ne.s32.totalorder %s138, %s141
      %p150 = scmp.eq.s32.totalorder %s18, 1
      %p151 = por %p149, %p150
      %p152 = scmp.ne.s32.totalorder %s141, %s142
      %p153 = scmp.eq.s32.totalorder %s18, 0
      %p154 = por %p152, %p153
      %p155 = scmp.ne.s32.totalorder %s141, %s142
      %p156 = scmp.eq.s32.totalorder %s19, 1
      %p157 = por %p155, %p156
      %p159 = scmp.ne.s32.totalorder %s142, %s158
      %p160 = scmp.eq.s32.totalorder %s19, 0
      %p161 = por %p159, %p160
      %s162 = ssub.s32 %s13, %s20
      %p163 = scmp.eq.s32.totalorder %s162, 0
      %s165 = sadd.s32 %s164, 1
      %s166 = scalar_select %p163, %s164, %s165
      %p169 = pneg %p163
      %p170 = scmp.eq.s32.totalorder %s13, 1
      %p171 = por %p169, %p170
      %p172 = scmp.ne.s32.totalorder %s164, %s167
      %p173 = scmp.eq.s32.totalorder %s13, 0
      %p174 = por %p172, %p173
      %p175 = scmp.ne.s32.totalorder %s164, %s167
      %p176 = scmp.eq.s32.totalorder %s18, 1
      %p177 = por %p175, %p176
      %p178 = scmp.ne.s32.totalorder %s167, %s168
      %p179 = scmp.eq.s32.totalorder %s18, 0
      %p180 = por %p178, %p179
      %p181 = scmp.ne.s32.totalorder %s167, %s168
      %p182 = scmp.eq.s32.totalorder %s19, 1
      %p183 = por %p181, %p182
      %p185 = scmp.ne.s32.totalorder %s168, %s184
      %p186 = scmp.eq.s32.totalorder %s19, 0
      %p187 = por %p185, %p186
      %p188 = scmp.le.s32.totalorder 1, %s13
      %p189 = scmp.lt.s32.totalorder %s13, 3
      %p190 = pnand %p188, %p189
      %p191 = pneg %p190
      // Predicated region
      $region9: #{gat2_forward.4} parent=5 // pred_check
        _
      $region10: #{gat2_forward.4} parent=5 // pred_check_branch
        %193 = sbr.rel (%p190) target = $region12
      $region11: #{gat2_forward.4} parent=5 // pred_region
        %s194 = ssub.s32 %s13, 1
        // Predicated region
        $region13: #{gat2_forward.4} parent=11 // pred_check
          %p195 = pneg %p60
        $region14: #{gat2_forward.4} parent=11 // pred_check_branch
          %197 = sbr.rel (%p195) target = $region16
        $region15: #{gat2_forward.4} parent=11 // pred_region
          _
        $region16: #{gat2_forward.4} parent=11 // pred_fallthru
          _
        // Predicated region
        $region17: #{gat2_forward.4} parent=11 // pred_check
          %p198 = pneg %p81
        $region18: #{gat2_forward.4} parent=11 // pred_check_branch
          %200 = sbr.rel (%p198) target = $region20
        $region19: #{gat2_forward.4} parent=11 // pred_region
          _
        $region20: #{gat2_forward.4} parent=11 // pred_fallthru
          _
        // Predicated region
        $region21: #{gat2_forward.4} parent=11 // pred_check
          %p201 = pneg %p102
        $region22: #{gat2_forward.4} parent=11 // pred_check_branch
          %203 = sbr.rel (%p201) target = $region24
        $region23: #{gat2_forward.4} parent=11 // pred_region
          _
        $region24: #{gat2_forward.4} parent=11 // pred_fallthru
          _
      $region12: #{gat2_forward.4} parent=5 // pred_fallthru
        _
      %p204 = scmp.lt.s32.totalorder %s13, 2
      // Predicated region
      $region25: #{gat2_forward.4} parent=5 // pred_check
        %p205 = pneg %p204
      $region26: #{gat2_forward.4} parent=5 // pred_check_branch
        %207 = sbr.rel (%p205) target = $region28
      $region27: #{gat2_forward.4} parent=5 // pred_region
        // Predicated region
        $region29: #{gat2_forward.4} parent=27 // pred_check
          %p208 = pneg %p33
        $region30: #{gat2_forward.4} parent=27 // pred_check_branch
          %210 = sbr.rel (%p208) target = $region32
        $region31: #{gat2_forward.4} parent=27 // pred_region
          %s211 = sand.u32 %s23, 1
          %s212 = sand.u32 %s23, 1
          %s213 = smul.addr %s212, 16
          %s214 = scalar_lea.vmem [#allocation2], %s213
          %s215 = smul.addr %s13, 4
          %s216 = scalar_lea.vmem %s0, %s215
          // Predicated region
          $region33: #{gat2_forward.4} parent=31 // pred_check
            _
          $region34: #{gat2_forward.4} parent=31 // pred_check_branch
            %218 = sbr.rel (0) target = $region36
          $region35: #{gat2_forward.4} parent=31 // pred_region
            // Predicated region
            $region37: #{gat2_forward.4} parent=35 // pred_check
              _
            $region38: #{gat2_forward.4} parent=35 // pred_check_branch
              %220 = sbr.rel target = $region40
            $region39: #{gat2_forward.4} parent=35 // pred_region
              // Predicated region
              $region52: #{gat2_forward.4} parent=39 // pred_check
                _
              $region53: #{gat2_forward.4} parent=39 // pred_check_branch
                %242 = sbr.rel (0) target = $region55
              $region54: #{gat2_forward.4} parent=39 // pred_region
                loop: start=0, step=1, limit=1
                $region56: #{gat2_forward.4} parent=54 // loop_pre_header
                  _
                $region57: #{gat2_forward.4} parent=54 // loop_header
                  %s244 = sphi 0, %s248
                  %p245 = scmp.ge.s32.totalorder %s244, 1
                  %s249 = sphi %s216, %s216
                  %s250 = sphi %s214, %s214
                $region58: #{gat2_forward.4} parent=54 // loop_header_branch
                  %247 = sbr.rel (%p245) target = $region62
                $region59: #{gat2_forward.4} parent=54 // loop_body
                  _
                $region60: #{gat2_forward.4} parent=54 // loop_footer
                  %s248 = sadd.s32 1, %s244
                $region61: #{gat2_forward.4} parent=54 // loop_footer_branch
                  %243 = sbr.rel target = $region57
                $region62: #{gat2_forward.4} parent=54 // loop_exit
                  _
                %s252 = ssub.s32 16, 1
                loop: start=0, step=1, limit=1
                $region63: #{gat2_forward.4} parent=54 // loop_pre_header
                  _
                $region64: #{gat2_forward.4} parent=54 // loop_header
                  %s254 = sphi 0, %s258
                  %p255 = scmp.ge.s32.totalorder %s254, 1
                  %s259 = sphi %s216, %s216
                  %s260 = sphi %s214, %s214
                $region65: #{gat2_forward.4} parent=54 // loop_header_branch
                  %257 = sbr.rel (%p255) target = $region69
                $region66: #{gat2_forward.4} parent=54 // loop_body
                  %v261 = vld [vmem:[%s259] sm:%s252]
                  %262 = vst [vmem:[%s260] sm:%s252] %v261
                  %v263 = vld [vmem:[%s259 + $0x8] sm:%s252]
                  %264 = vst [vmem:[%s260 + $0x4] sm:%s252] %v263
                  %v265 = vld [vmem:[%s259 + $0x10] sm:%s252]
                  %266 = vst [vmem:[%s260 + $0x8] sm:%s252] %v265
                  %v267 = vld [vmem:[%s259 + $0x18] sm:%s252]
                  %268 = vst [vmem:[%s260 + $0xc] sm:%s252] %v267
                $region67: #{gat2_forward.4} parent=54 // loop_footer
                  %s258 = sadd.s32 1, %s254
                $region68: #{gat2_forward.4} parent=54 // loop_footer_branch
                  %253 = sbr.rel target = $region64
                $region69: #{gat2_forward.4} parent=54 // loop_exit
                  _
              $region55: #{gat2_forward.4} parent=39 // pred_fallthru
                _
            $region40: #{gat2_forward.4} parent=35 // pred_fallthru
              _
            // Predicated region
            $region41: #{gat2_forward.4} parent=35 // pred_check
              _
            $region42: #{gat2_forward.4} parent=35 // pred_check_branch
              %222 = sbr.rel (0) target = $region44
            $region43: #{gat2_forward.4} parent=35 // pred_region
              %s224 = ssub.s32 16, 1
              loop: start=0, step=1, limit=1
              $region45: #{gat2_forward.4} parent=43 // loop_pre_header
                _
              $region46: #{gat2_forward.4} parent=43 // loop_header
                %s226 = sphi 0, %s230
                %p227 = scmp.ge.s32.totalorder %s226, 1
                %s231 = sphi %s216, %s216
                %s232 = sphi %s214, %s214
              $region47: #{gat2_forward.4} parent=43 // loop_header_branch
                %229 = sbr.rel (%p227) target = $region51
              $region48: #{gat2_forward.4} parent=43 // loop_body
                %v233 = vld [vmem:[%s231] sm:%s224]
                %234 = vst [vmem:[%s232] sm:%s224] %v233
                %v235 = vld [vmem:[%s231 + $0x8] sm:%s224]
                %236 = vst [vmem:[%s232 + $0x4] sm:%s224] %v235
                %v237 = vld [vmem:[%s231 + $0x10] sm:%s224]
                %238 = vst [vmem:[%s232 + $0x8] sm:%s224] %v237
                %v239 = vld [vmem:[%s231 + $0x18] sm:%s224]
                %240 = vst [vmem:[%s232 + $0xc] sm:%s224] %v239
              $region49: #{gat2_forward.4} parent=43 // loop_footer
                %s230 = sadd.s32 1, %s226
              $region50: #{gat2_forward.4} parent=43 // loop_footer_branch
                %225 = sbr.rel target = $region46
              $region51: #{gat2_forward.4} parent=43 // loop_exit
                _
            $region44: #{gat2_forward.4} parent=35 // pred_fallthru
              _
          $region36: #{gat2_forward.4} parent=31 // pred_fallthru
            _
          %269 = vnop
        $region32: #{gat2_forward.4} parent=27 // pred_fallthru
          _
      $region28: #{gat2_forward.4} parent=5 // pred_fallthru
        _
      %p270 = scmp.le.s32.totalorder 1, %s13
      %p271 = scmp.lt.s32.totalorder %s13, 3
      %p272 = pnand %p270, %p271
      %p273 = pneg %p272
      // Predicated region
      $region70: #{gat2_forward.4} parent=5 // pred_check
        _
      $region71: #{gat2_forward.4} parent=5 // pred_check_branch
        %275 = sbr.rel (%p272) target = $region73
      $region72: #{gat2_forward.4} parent=5 // pred_region
        %s276 = ssub.s32 %s13, 1
        %s277 = sand.u32 %s26, 1
        %s278 = sand.u32 %s26, 1
        %s279 = smul.addr %s278, 16
        %s280 = scalar_lea.vmem [#allocation2], %s279
        // Predicated region
        $region74: #{gat2_forward.4} parent=72 // pred_check
          %p281 = pneg %p39
        $region75: #{gat2_forward.4} parent=72 // pred_check_branch
          %283 = sbr.rel (%p281) target = $region77
        $region76: #{gat2_forward.4} parent=72 // pred_region
          _
        $region77: #{gat2_forward.4} parent=72 // pred_fallthru
          _
        %s284 = sand.u32 %s26, 1
        %s285 = sand.u32 %s26, 1
        %s286 = smul.addr %s285, 16
        %s287 = scalar_lea.vmem [#allocation2], %s286
        %p288 = pneg %p39
        %p289 = pneg %p36
        %p290 = pneg %p60
        %p291 = pneg %p57
        %p292 = pneg %p81
        %p293 = pneg %p78
        %p294 = pneg %p102
        %p295 = pneg %p99
        %p296 = pneg %p128
        %p297 = pneg %p125
        %s298 = sand.u32 %s115, 1
        %s299 = sand.u32 %s115, 1
        %s300 = smul.addr %s299, 32
        %s301 = scalar_lea.vmem [#allocation3], %s300
        %p302 = pneg %p154
        %p303 = pneg %p151
        %s304 = smul.u32 16, %s18
        %p305 = scmp.lt.s32.totalorder %s304, 31
        %s306 = scalar_select %p305, %s304, 31
        %s307 = smul.addr %s306, 8
        %s308 = scalar_lea.vmem %s5, %s307
        %p309 = pneg %p180
        %p310 = pneg %p177
        %p311 = scmp.lt.s32.totalorder %s18, 1
        %s312 = scalar_select %p311, %s18, 1
        %s313 = smul.addr %s312, 4
        %s314 = scalar_lea.vmem %s6, %s313
        %s315 = smul.u32 16, %s18
        %p316 = scmp.lt.s32.totalorder %s315, 31
        %s317 = scalar_select %p316, %s315, 31
        %s318 = smul.addr %s317, 8
        %s319 = scalar_lea.vmem %s5, %s318
        %s320 = smul.u32 16, %s18
        %p321 = scmp.lt.s32.totalorder %s18, 1
        %s322 = scalar_select %p321, %s18, 1
        %s323 = smul.addr %s322, 4
        %s324 = scalar_lea.vmem %s6, %s323
        %v327 = vld [vmem:[%s280] sm:$0xf]
        %v328 = vld [vmem:[%s280 + $0x4] sm:$0xf]
        %v329 = vld [vmem:[%s280 + $0x8] sm:$0xf]
        %v330 = vld [vmem:[%s280 + $0xc] sm:$0xf]
        %v331 = vld [vmem:[%s1] sm:$0xf]
        %v332 = vld [vmem:[%s1 + $0x4] sm:$0xf]
        %v333 = vld [vmem:[%s1 + $0x8] sm:$0xf]
        %v334 = vld [vmem:[%s1 + $0xc] sm:$0xf]
        %v339 = vunpack.c.l.b16 %v331
        %v340 = vunpack.c.l.b16 %v332
        %v341 = vunpack.c.l.b16 %v333
        %v342 = vunpack.c.l.b16 %v334
        %v343 = vpack.c.b16 %v340, %v339
        %v344 = vpack.c.b16 %v342, %v341
        %v349 = vunpack.c.l.b16 %v327
        %v350 = vunpack.c.l.b16 %v328
        %v351 = vunpack.c.l.b16 %v329
        %v352 = vunpack.c.l.b16 %v330
        %v353 = vpack.c.b16 %v350, %v349
        %v354 = vpack.c.b16 %v352, %v351
        %vm357 = vcmask 261120
        %v359 = vsel %vm357, %v343, 0
        %v362 = vsel %vm357, %v344, 0
        %364 = vmatpush.bf16.msra.mxu0 0
        %365 = vmatpush.bf16.msra.mxu0 0
        %366 = vmatpush.bf16.msra.mxu0 0
        %367 = vmatpush.bf16.msra.mxu0 0
        %368 = vmatpush.bf16.msra.mxu0 0
        %369 = vmatpush.bf16.msra.mxu0 0
        %370 = vmatpush.bf16.msra.mxu0 %v354
        %371 = vmatpush.bf16.msra.mxu0 %v353
        %372 = vmatmul.bf16.gmra.mxu0 %v359
        %v373 = vpop.f32.mrf.mxu0
        %v374 = vadd.f32 0.0, %v373
        %v375 = vpop.f32.mrf.mxu0
        %v376 = vadd.f32 0.0, %v375
        %377 = vmatmul.bf16.gmra.mxu0 %v362
        %v378 = vpop.f32.mrf.mxu0
        %v379 = vadd.f32 0.0, %v378
        %v380 = vpop.f32.mrf.mxu0
        %v381 = vadd.f32 0.0, %v380
        %382 = vdwg.mxu0
        %v383 = vmul.f32 %v374, 0.2
        %v384 = vmul.f32 %v376, 0.2
        %v385 = vmul.f32 %v379, 0.2
        %v386 = vmul.f32 %v381, 0.2
        %v387 = vmax.f32 %v374, %v383
        %v388 = vmax.f32 %v376, %v384
        %v389 = vmax.f32 %v379, %v385
        %v390 = vmax.f32 %v381, %v386
        %v391 = vld [vmem:[%s2] sm:$0xf]
        %v392 = vld [vmem:[%s2 + $0x4] sm:$0xf]
        %v393 = vld [vmem:[%s2 + $0x8] sm:$0xf]
        %v394 = vld [vmem:[%s2 + $0xc] sm:$0xf]
        %v395 = vpack.c.bf16 %v388, %v387
        %v396 = vpack.c.bf16 %v390, %v389
        %v401 = vunpack.c.l.b16 %v391
        %v402 = vunpack.c.l.b16 %v392
        %v403 = vunpack.c.l.b16 %v393
        %v404 = vunpack.c.l.b16 %v394
        %v405 = vpack.c.b16 %v402, %v401
        %v406 = vpack.c.b16 %v404, %v403
        %v408 = vsel %vm357, %v405, 0
        %v411 = vsel %vm357, %v406, 0
        %413 = vmatpush.bf16.msra.mxu0 0
        %414 = vmatpush.bf16.msra.mxu0 0
        %415 = vmatpush.bf16.msra.mxu0 0
        %416 = vmatpush.bf16.msra.mxu0 0
        %417 = vmatpush.bf16.msra.mxu0 0
        %418 = vmatpush.bf16.msra.mxu0 0
        %419 = vmatpush.bf16.msra.mxu0 %v396
        %420 = vmatpush.bf16.msra.mxu0 %v395
        %421 = vmatmul.bf16.gmra.mxu0 %v408
        %v422 = vpop.f32.mrf.mxu0
        %v423 = vadd.f32 0.0, %v422
        %v424 = vpop.f32.mrf.mxu0
        %v425 = vadd.f32 0.0, %v424
        %426 = vmatmul.bf16.gmra.mxu0 %v411
        %v427 = vpop.f32.mrf.mxu0
        %v428 = vadd.f32 0.0, %v427
        %v429 = vpop.f32.mrf.mxu0
        %v430 = vadd.f32 0.0, %v429
        %431 = vdwg.mxu0
        %v432 = vld [vmem:[%s3] sm:$0xf]
        %v433 = vpack.c.bf16 %v425, %v423
        %v434 = vpack.c.bf16 %v430, %v428
        %v436 = vsel %vm357, %v432, 0
        %438 = vmatpush.bf16.msra.mxu0 0
        %439 = vmatpush.bf16.msra.mxu0 0
        %440 = vmatpush.bf16.msra.mxu0 0
        %441 = vmatpush.bf16.msra.mxu0 0
        %442 = vmatpush.bf16.msra.mxu0 0
        %443 = vmatpush.bf16.msra.mxu0 0
        %444 = vmatpush.bf16.msra.mxu0 %v434
        %445 = vmatpush.bf16.msra.mxu0 %v433
        %446 = vmatmul.bf16.gmra.mxu0 %v436
        %v447 = vpop.f32.mrf.mxu0
        %v448 = vadd.f32 0.0, %v447
        %v449 = vpop.f32.mrf.mxu0
        %450 = vdwg.mxu0
        %v451 = vpack.c.bf16 %v423, %v423
        %452 = vst [vmem:[%s301] sm:$0xf] %v451
        %v453 = vpack.c.bf16 %v425, %v425
        %s454 = scalar_lea.vmem %s301, 8 [#allocation3]
        %455 = vst [vmem:[%s454] sm:$0xf] %v453
        %v456 = vpack.c.bf16 %v428, %v428
        %s457 = scalar_lea.vmem %s301, 16 [#allocation3]
        %458 = vst [vmem:[%s457] sm:$0xf] %v456
        %v459 = vpack.c.bf16 %v430, %v430
        %s460 = scalar_lea.vmem %s301, 24 [#allocation3]
        %461 = vst [vmem:[%s460] sm:$0xf] %v459
        %vm462 = vcmask 1040384
        %vm463 = vsmask.f32 256
        %vm464 = vmand %vm462, %vm463
        %v465 = vld [vmem:[%s301 + $0x4] sm:$0x1]
        %v466 = vsel %vm464, 1065369472, %v465
        %467 = vst [vmem:[%s301 + $0x4] sm:$0x1] %v466
        %v468 = vld [vmem:[%s301 + $0xc] sm:$0x1]
        %v469 = vsel %vm464, 1065369472, %v468
        %470 = vst [vmem:[%s301 + $0xc] sm:$0x1] %v469
        %v471 = vld [vmem:[%s301 + $0x14] sm:$0x1]
        %v472 = vsel %vm464, 1065369472, %v471
        %473 = vst [vmem:[%s301 + $0x14] sm:$0x1] %v472
        %v474 = vld [vmem:[%s301 + $0x1c] sm:$0x1]
        %v475 = vsel %vm464, 1065369472, %v474
        %476 = vst [vmem:[%s301 + $0x1c] sm:$0x1] %v475
        %477 = vxpose.xlu0.b32.start [1/16] %v448, 128
        %478 = vxpose.xlu0.b32.cont [2/16] 0.0, 128
        %479 = vxpose.xlu0.b32.cont [3/16] 0.0, 128
        %480 = vxpose.xlu0.b32.cont [4/16] 0.0, 128
        %481 = vxpose.xlu0.b32.cont [5/16] 0.0, 128
        %482 = vxpose.xlu0.b32.cont [6/16] 0.0, 128
        %483 = vxpose.xlu0.b32.cont [7/16] 0.0, 128
        %484 = vxpose.xlu0.b32.cont [8/16] 0.0, 128
        %485 = vxpose.xlu0.b32.cont [9/16] 0.0, 128
        %486 = vxpose.xlu0.b32.cont [10/16] 0.0, 128
        %487 = vxpose.xlu0.b32.cont [11/16] 0.0, 128
        %488 = vxpose.xlu0.b32.cont [12/16] 0.0, 128
        %489 = vxpose.xlu0.b32.cont [13/16] 0.0, 128
        %490 = vxpose.xlu0.b32.cont [14/16] 0.0, 128
        %491 = vxpose.xlu0.b32.cont [15/16] 0.0, 128
        %492 = vxpose.xlu0.b32.end [16/16] 0.0, 128
        %v493 = vpop.trf.xlu0
        %v494 = vpop.trf.xlu0
        %v495 = vpop.trf.xlu0
        %v496 = vpop.trf.xlu0
        %v497 = vpop.trf.xlu0
        %v498 = vpop.trf.xlu0
        %v499 = vpop.trf.xlu0
        %v500 = vpop.trf.xlu0
        %v501 = vpop.trf.xlu0
        %v502 = vpop.trf.xlu0
        %v503 = vpop.trf.xlu0
        %v504 = vpop.trf.xlu0
        %v505 = vpop.trf.xlu0
        %v506 = vpop.trf.xlu0
        %v507 = vpop.trf.xlu0
        %v508 = vpop.trf.xlu0
        %vm509 = vcmask 31744
        %510 = vst.msk [vmem:[%s319] sm:$0xff] %vm509, %v493
        %511 = vst.msk [vmem:[%s319 + $0x8] sm:$0xff] %vm509, %v494
        %512 = vst.msk [vmem:[%s319 + $0x10] sm:$0xff] %vm509, %v495
        %513 = vst.msk [vmem:[%s319 + $0x18] sm:$0xff] %vm509, %v496
        %514 = vst.msk [vmem:[%s319 + $0x20] sm:$0xff] %vm509, %v497
        %515 = vst.msk [vmem:[%s319 + $0x28] sm:$0xff] %vm509, %v498
        %516 = vst.msk [vmem:[%s319 + $0x30] sm:$0xff] %vm509, %v499
        %517 = vst.msk [vmem:[%s319 + $0x38] sm:$0xff] %vm509, %v500
        %518 = vst.msk [vmem:[%s319 + $0x40] sm:$0xff] %vm509, %v501
        %519 = vst.msk [vmem:[%s319 + $0x48] sm:$0xff] %vm509, %v502
        %520 = vst.msk [vmem:[%s319 + $0x50] sm:$0xff] %vm509, %v503
        %521 = vst.msk [vmem:[%s319 + $0x58] sm:$0xff] %vm509, %v504
        %522 = vst.msk [vmem:[%s319 + $0x60] sm:$0xff] %vm509, %v505
        %523 = vst.msk [vmem:[%s319 + $0x68] sm:$0xff] %vm509, %v506
        %524 = vst.msk [vmem:[%s319 + $0x70] sm:$0xff] %vm509, %v507
        %525 = vst.msk [vmem:[%s319 + $0x78] sm:$0xff] %vm509, %v508
        %526 = vst [vmem:[%s324 - $0x4] sm:$0xf0] %v448
        %s527 = sand.u32 %s115, 1
        %s528 = sand.u32 %s115, 1
        %s529 = smul.addr %s528, 32
        %s530 = scalar_lea.vmem [#allocation3], %s529
        %s531 = smul.u32 16, %s18
        %p532 = scmp.lt.s32.totalorder %s531, 31
        %s533 = scalar_select %p532, %s531, 31
        %s534 = smul.addr %s533, 8
        %s535 = scalar_lea.vmem %s5, %s534
        %p536 = scmp.lt.s32.totalorder %s18, 1
        %s537 = scalar_select %p536, %s18, 1
        %s538 = smul.addr %s537, 4
        %s539 = scalar_lea.vmem %s6, %s538
        // Predicated region
        $region78: #{gat2_forward.4} parent=72 // pred_check
          %p540 = pneg %p125
        $region79: #{gat2_forward.4} parent=72 // pred_check_branch
          %542 = sbr.rel (%p540) target = $region81
        $region80: #{gat2_forward.4} parent=72 // pred_region
          %s543 = smul.addr %s18, 4
          %s544 = scalar_lea.vmem %s4, %s543
          // Predicated region
          $region82: #{gat2_forward.4} parent=80 // pred_check
            _
          $region83: #{gat2_forward.4} parent=80 // pred_check_branch
            %546 = sbr.rel (0) target = $region85
          $region84: #{gat2_forward.4} parent=80 // pred_region
            // Predicated region
            $region86: #{gat2_forward.4} parent=84 // pred_check
              _
            $region87: #{gat2_forward.4} parent=84 // pred_check_branch
              %548 = sbr.rel target = $region89
            $region88: #{gat2_forward.4} parent=84 // pred_region
              // Predicated region
              $region101: #{gat2_forward.4} parent=88 // pred_check
                _
              $region102: #{gat2_forward.4} parent=88 // pred_check_branch
                %578 = sbr.rel (0) target = $region104
              $region103: #{gat2_forward.4} parent=88 // pred_region
                loop: start=0, step=1, limit=1
                $region105: #{gat2_forward.4} parent=103 // loop_pre_header
                  _
                $region106: #{gat2_forward.4} parent=103 // loop_header
                  %s580 = sphi 0, %s584
                  %p581 = scmp.ge.s32.totalorder %s580, 1
                  %s585 = sphi %s530, %s530
                  %s586 = sphi %s544, %s544
                $region107: #{gat2_forward.4} parent=103 // loop_header_branch
                  %583 = sbr.rel (%p581) target = $region111
                $region108: #{gat2_forward.4} parent=103 // loop_body
                  _
                $region109: #{gat2_forward.4} parent=103 // loop_footer
                  %s584 = sadd.s32 1, %s580
                $region110: #{gat2_forward.4} parent=103 // loop_footer_branch
                  %579 = sbr.rel target = $region106
                $region111: #{gat2_forward.4} parent=103 // loop_exit
                  _
                %s588 = ssub.s32 16, 1
                loop: start=0, step=1, limit=1
                $region112: #{gat2_forward.4} parent=103 // loop_pre_header
                  _
                $region113: #{gat2_forward.4} parent=103 // loop_header
                  %s590 = sphi 0, %s594
                  %p591 = scmp.ge.s32.totalorder %s590, 1
                  %s595 = sphi %s530, %s530
                  %s596 = sphi %s544, %s544
                $region114: #{gat2_forward.4} parent=103 // loop_header_branch
                  %593 = sbr.rel (%p591) target = $region118
                $region115: #{gat2_forward.4} parent=103 // loop_body
                  %v597 = vld [vmem:[%s595] sm:%s588]
                  %598 = vst [vmem:[%s596] sm:%s588] %v597
                  %v599 = vld [vmem:[%s595 + $0x4] sm:%s588]
                  %600 = vst [vmem:[%s596 + $0x8] sm:%s588] %v599
                  %v601 = vld [vmem:[%s595 + $0x8] sm:%s588]
                  %602 = vst [vmem:[%s596 + $0x10] sm:%s588] %v601
                  %v603 = vld [vmem:[%s595 + $0xc] sm:%s588]
                  %604 = vst [vmem:[%s596 + $0x18] sm:%s588] %v603
                  %v605 = vld [vmem:[%s595 + $0x10] sm:%s588]
                  %606 = vst [vmem:[%s596 + $0x20] sm:%s588] %v605
                  %v607 = vld [vmem:[%s595 + $0x14] sm:%s588]
                  %608 = vst [vmem:[%s596 + $0x28] sm:%s588] %v607
                  %v609 = vld [vmem:[%s595 + $0x18] sm:%s588]
                  %610 = vst [vmem:[%s596 + $0x30] sm:%s588] %v609
                  %v611 = vld [vmem:[%s595 + $0x1c] sm:%s588]
                  %612 = vst [vmem:[%s596 + $0x38] sm:%s588] %v611
                $region116: #{gat2_forward.4} parent=103 // loop_footer
                  %s594 = sadd.s32 1, %s590
                $region117: #{gat2_forward.4} parent=103 // loop_footer_branch
                  %589 = sbr.rel target = $region113
                $region118: #{gat2_forward.4} parent=103 // loop_exit
                  _
              $region104: #{gat2_forward.4} parent=88 // pred_fallthru
                _
            $region89: #{gat2_forward.4} parent=84 // pred_fallthru
              _
            // Predicated region
            $region90: #{gat2_forward.4} parent=84 // pred_check
              _
            $region91: #{gat2_forward.4} parent=84 // pred_check_branch
              %550 = sbr.rel (0) target = $region93
            $region92: #{gat2_forward.4} parent=84 // pred_region
              %s552 = ssub.s32 16, 1
              loop: start=0, step=1, limit=1
              $region94: #{gat2_forward.4} parent=92 // loop_pre_header
                _
              $region95: #{gat2_forward.4} parent=92 // loop_header
                %s554 = sphi 0, %s558
                %p555 = scmp.ge.s32.totalorder %s554, 1
                %s559 = sphi %s530, %s530
                %s560 = sphi %s544, %s544
              $region96: #{gat2_forward.4} parent=92 // loop_header_branch
                %557 = sbr.rel (%p555) target = $region100
              $region97: #{gat2_forward.4} parent=92 // loop_body
                %v561 = vld [vmem:[%s559] sm:%s552]
                %562 = vst [vmem:[%s560] sm:%s552] %v561
                %v563 = vld [vmem:[%s559 + $0x4] sm:%s552]
                %564 = vst [vmem:[%s560 + $0x8] sm:%s552] %v563
                %v565 = vld [vmem:[%s559 + $0x8] sm:%s552]
                %566 = vst [vmem:[%s560 + $0x10] sm:%s552] %v565
                %v567 = vld [vmem:[%s559 + $0xc] sm:%s552]
                %568 = vst [vmem:[%s560 + $0x18] sm:%s552] %v567
                %v569 = vld [vmem:[%s559 + $0x10] sm:%s552]
                %570 = vst [vmem:[%s560 + $0x20] sm:%s552] %v569
                %v571 = vld [vmem:[%s559 + $0x14] sm:%s552]
                %572 = vst [vmem:[%s560 + $0x28] sm:%s552] %v571
                %v573 = vld [vmem:[%s559 + $0x18] sm:%s552]
                %574 = vst [vmem:[%s560 + $0x30] sm:%s552] %v573
                %v575 = vld [vmem:[%s559 + $0x1c] sm:%s552]
                %576 = vst [vmem:[%s560 + $0x38] sm:%s552] %v575
              $region98: #{gat2_forward.4} parent=92 // loop_footer
                %s558 = sadd.s32 1, %s554
              $region99: #{gat2_forward.4} parent=92 // loop_footer_branch
                %553 = sbr.rel target = $region95
              $region100: #{gat2_forward.4} parent=92 // loop_exit
                _
            $region93: #{gat2_forward.4} parent=84 // pred_fallthru
              _
          $region85: #{gat2_forward.4} parent=80 // pred_fallthru
            _
          %613 = vnop
        $region81: #{gat2_forward.4} parent=72 // pred_fallthru
          _
        // Predicated region
        $region119: #{gat2_forward.4} parent=72 // pred_check
          %p614 = pneg %p151
        $region120: #{gat2_forward.4} parent=72 // pred_check_branch
          %616 = sbr.rel (%p614) target = $region122
        $region121: #{gat2_forward.4} parent=72 // pred_region
          %s617 = smul.u32 16, %s18
        $region122: #{gat2_forward.4} parent=72 // pred_fallthru
          _
        // Predicated region
        $region123: #{gat2_forward.4} parent=72 // pred_check
          %p618 = pneg %p177
        $region124: #{gat2_forward.4} parent=72 // pred_check_branch
          %620 = sbr.rel (%p618) target = $region126
        $region125: #{gat2_forward.4} parent=72 // pred_region
          _
        $region126: #{gat2_forward.4} parent=72 // pred_fallthru
          _
      $region73: #{gat2_forward.4} parent=5 // pred_fallthru
        _
      %p621 = scmp.le.s32.totalorder 2, %s13
      // Predicated region
      $region127: #{gat2_forward.4} parent=5 // pred_check
        %p622 = pneg %p621
      $region128: #{gat2_forward.4} parent=5 // pred_check_branch
        %624 = sbr.rel (%p622) target = $region130
      $region129: #{gat2_forward.4} parent=5 // pred_region
        %s625 = ssub.s32 %s13, 2
        // Predicated region
        $region131: #{gat2_forward.4} parent=129 // pred_check
          %p626 = pneg %p131
        $region132: #{gat2_forward.4} parent=129 // pred_check_branch
          %628 = sbr.rel (%p626) target = $region134
        $region133: #{gat2_forward.4} parent=129 // pred_region
          %s629 = sand.u32 %s116, 1
          %s630 = sand.u32 %s116, 1
          %s631 = smul.addr %s630, 32
          %s632 = scalar_lea.vmem [#allocation3], %s631
        $region134: #{gat2_forward.4} parent=129 // pred_fallthru
          _
        // Predicated region
        $region135: #{gat2_forward.4} parent=129 // pred_check
          %p633 = pneg %p157
        $region136: #{gat2_forward.4} parent=129 // pred_check_branch
          %635 = sbr.rel (%p633) target = $region138
        $region137: #{gat2_forward.4} parent=129 // pred_region
          %s636 = smul.u32 16, %s19
          %p637 = scmp.lt.s32.totalorder %s636, 31
          %s638 = scalar_select %p637, %s636, 31
          %s639 = smul.addr %s638, 8
          %s640 = scalar_lea.vmem %s5, %s639
        $region138: #{gat2_forward.4} parent=129 // pred_fallthru
          _
        // Predicated region
        $region139: #{gat2_forward.4} parent=129 // pred_check
          %p641 = pneg %p183
        $region140: #{gat2_forward.4} parent=129 // pred_check_branch
          %643 = sbr.rel (%p641) target = $region142
        $region141: #{gat2_forward.4} parent=129 // pred_region
          %p644 = scmp.lt.s32.totalorder %s19, 1
          %s645 = scalar_select %p644, %s19, 1
          %s646 = smul.addr %s645, 4
          %s647 = scalar_lea.vmem %s6, %s646
        $region142: #{gat2_forward.4} parent=129 // pred_fallthru
          _
      $region130: #{gat2_forward.4} parent=5 // pred_fallthru
        _
    $region6: #{gat2_forward.4} parent=1 // loop_footer
      %s17 = sadd.s32 1, %s13
    $region7: #{gat2_forward.4} parent=1 // loop_footer_branch
      %12 = sbr.rel target = $region3
    $region8: #{gat2_forward.4} parent=1 // loop_exit
      _

// kernel: gat2_forward.6
$region0: #{gat2_forward.6}
  #allocation0 [shape = 'u32[]', space=smem, size = 0x4, offset = 0x4, fixed_abs, tag = 'smem constant byte address 0x4 - core index']
  #allocation1 [shape = 'u32[72,128]{1,0:T(1,128)}', space=vmem, size = 0x9000, scoped, tag = 'internal scratch']
  %s0 = inlined_call_operand.vmem [shape: bf16[32,256], index: 0, kind: input, shape index: {}]
  %s1 = inlined_call_operand.vmem [shape: bf16[32,32], index: 1, kind: input, shape index: {}]
  %s2 = inlined_call_operand.vmem [shape: bf16[8,32], index: 2, kind: input, shape index: {}]
  %s3 = inlined_call_operand.vmem [shape: bf16[2,8], index: 3, kind: input, shape index: {}]
  %s4 = inlined_call_operand.vmem [shape: bf16[1,9,256], index: 4, kind: output, shape index: {0}]
  %s5 = inlined_call_operand.vmem [shape: f32[256,1], index: 5, kind: output, shape index: {1}]
  %s6 = inlined_call_operand.vmem [shape: f32[1,256], index: 6, kind: output, shape index: {2}]
  %7 = xla_tuple %s4, %s5, %s6
  %s8 = sld [smem:[#allocation0]]
  $region143: #{gat2_forward.6} parent=0
    _
  %s10 = ssub.s32 1, %s8
  %s11 = scalar_select 0, %s10, %s8
  $region1: #{gat2_forward.6} parent=0
    #allocation2 [shape = 'u8[16384]{0}', space=vmem, size = 0x4000, scoped, tag = 'input window, operand 0']
    #allocation3 [shape = 'u8[8192]{0}', space=vmem, size = 0x2000, scoped, tag = 'output window, operand 0']
    loop: start=0, step=1, limit=4
    $region2: #{gat2_forward.6} parent=1 // loop_pre_header
      _
    $region3: #{gat2_forward.6} parent=1 // loop_header
      %s13 = sphi 0, %s17
      %p14 = scmp.ge.s32.totalorder %s13, 4
      %s23 = sphi 0, %s25
      %s26 = sphi 0, %s23
      %s27 = sphi 0, %s26
      %s43 = sphi 0, %s27
      %s47 = sphi 0, %s47
      %s49 = sphi 0, %s47
      %s50 = sphi 0, %s49
      %s64 = sphi 0, %s50
      %s68 = sphi 0, %s68
      %s70 = sphi 0, %s68
      %s71 = sphi 0, %s70
      %s85 = sphi 0, %s71
      %s89 = sphi 0, %s89
      %s91 = sphi 0, %s89
      %s92 = sphi 0, %s91
      %s106 = sphi 0, %s92
      %s112 = sphi 0, %s114
      %s115 = sphi 0, %s112
      %s116 = sphi 0, %s115
      %s132 = sphi 0, %s116
      %s138 = sphi 0, %s140
      %s141 = sphi 0, %s138
      %s142 = sphi 0, %s141
      %s158 = sphi 0, %s142
      %s164 = sphi 0, %s166
      %s167 = sphi 0, %s164
      %s168 = sphi 0, %s167
      %s184 = sphi 0, %s168
    $region4: #{gat2_forward.6} parent=1 // loop_header_branch
      %16 = sbr.rel (%p14) target = $region8
    $region5: #{gat2_forward.6} parent=1 // loop_body
      %s18 = ssub.s32 %s13, 1
      %s19 = ssub.s32 %s13, 2
      %s20 = sadd.s32 %s13, 1
      %s21 = ssub.s32 %s13, %s20
      %p22 = scmp.eq.s32.totalorder %s21, 0
      %s24 = sadd.s32 %s23, 1
      %s25 = scalar_select %p22, %s23, %s24
      %p28 = pneg %p22
      %p29 = scmp.eq.s32.totalorder %s13, 1
      %p30 = por %p28, %p29
      %p31 = scmp.ne.s32.totalorder %s23, %s26
      %p32 = scmp.eq.s32.totalorder %s13, 0
      %p33 = por %p31, %p32
      %p34 = scmp.ne.s32.totalorder %s23, %s26
      %p35 = scmp.eq.s32.totalorder %s18, 1
      %p36 = por %p34, %p35
      %p37 = scmp.ne.s32.totalorder %s26, %s27
      %p38 = scmp.eq.s32.totalorder %s18, 0
      %p39 = por %p37, %p38
      %p40 = scmp.ne.s32.totalorder %s26, %s27
      %p41 = scmp.eq.s32.totalorder %s19, 1
      %p42 = por %p40, %p41
      %p44 = scmp.ne.s32.totalorder %s27, %s43
      %p45 = scmp.eq.s32.totalorder %s19, 0
      %p46 = por %p44, %p45
      %s48 = sadd.s32 %s47, 1
      %p51 = scmp.eq.s32.totalorder %s13, 1
      %p52 = scmp.ne.s32.totalorder %s47, %s49
      %p53 = scmp.eq.s32.totalorder %s13, 0
      %p54 = por %p52, %p53
      %p55 = scmp.ne.s32.totalorder %s47, %s49
      %p56 = scmp.eq.s32.totalorder %s18, 1
      %p57 = por %p55, %p56
      %p58 = scmp.ne.s32.totalorder %s49, %s50
      %p59 = scmp.eq.s32.totalorder %s18, 0
      %p60 = por %p58, %p59
      %p61 = scmp.ne.s32.totalorder %s49, %s50
      %p62 = scmp.eq.s32.totalorder %s19, 1
      %p63 = por %p61, %p62
      %p65 = scmp.ne.s32.totalorder %s50, %s64
      %p66 = scmp.eq.s32.totalorder %s19, 0
      %p67 = por %p65, %p66
      %s69 = sadd.s32 %s68, 1
      %p72 = scmp.eq.s32.totalorder %s13, 1
      %p73 = scmp.ne.s32.totalorder %s68, %s70
      %p74 = scmp.eq.s32.totalorder %s13, 0
      %p75 = por %p73, %p74
      %p76 = scmp.ne.s32.totalorder %s68, %s70
      %p77 = scmp.eq.s32.totalorder %s18, 1
      %p78 = por %p76, %p77
      %p79 = scmp.ne.s32.totalorder %s70, %s71
      %p80 = scmp.eq.s32.totalorder %s18, 0
      %p81 = por %p79, %p80
      %p82 = scmp.ne.s32.totalorder %s70, %s71
      %p83 = scmp.eq.s32.totalorder %s19, 1
      %p84 = por %p82, %p83
      %p86 = scmp.ne.s32.totalorder %s71, %s85
      %p87 = scmp.eq.s32.totalorder %s19, 0
      %p88 = por %p86, %p87
      %s90 = sadd.s32 %s89, 1
      %p93 = scmp.eq.s32.totalorder %s13, 1
      %p94 = scmp.ne.s32.totalorder %s89, %s91
      %p95 = scmp.eq.s32.totalorder %s13, 0
      %p96 = por %p94, %p95
      %p97 = scmp.ne.s32.totalorder %s89, %s91
      %p98 = scmp.eq.s32.totalorder %s18, 1
      %p99 = por %p97, %p98
      %p100 = scmp.ne.s32.totalorder %s91, %s92
      %p101 = scmp.eq.s32.totalorder %s18, 0
      %p102 = por %p100, %p101
      %p103 = scmp.ne.s32.totalorder %s91, %s92
      %p104 = scmp.eq.s32.totalorder %s19, 1
      %p105 = por %p103, %p104
      %p107 = scmp.ne.s32.totalorder %s92, %s106
      %p108 = scmp.eq.s32.totalorder %s19, 0
      %p109 = por %p107, %p108
      %s110 = ssub.s32 %s13, %s20
      %p111 = scmp.eq.s32.totalorder %s110, 0
      %s113 = sadd.s32 %s112, 1
      %s114 = scalar_select %p111, %s112, %s113
      %p117 = pneg %p111
      %p118 = scmp.eq.s32.totalorder %s13, 1
      %p119 = por %p117, %p118
      %p120 = scmp.ne.s32.totalorder %s112, %s115
      %p121 = scmp.eq.s32.totalorder %s13, 0
      %p122 = por %p120, %p121
      %p123 = scmp.ne.s32.totalorder %s112, %s115
      %p124 = scmp.eq.s32.totalorder %s18, 1
      %p125 = por %p123, %p124
      %p126 = scmp.ne.s32.totalorder %s115, %s116
      %p127 = scmp.eq.s32.totalorder %s18, 0
      %p128 = por %p126, %p127
      %p129 = scmp.ne.s32.totalorder %s115, %s116
      %p130 = scmp.eq.s32.totalorder %s19, 1
      %p131 = por %p129, %p130
      %p133 = scmp.ne.s32.totalorder %s116, %s132
      %p134 = scmp.eq.s32.totalorder %s19, 0
      %p135 = por %p133, %p134
      %s136 = ssub.s32 %s13, %s20
      %p137 = scmp.eq.s32.totalorder %s136, 0
      %s139 = sadd.s32 %s138, 1
      %s140 = scalar_select %p137, %s138, %s139
      %p143 = pneg %p137
      %p144 = scmp.eq.s32.totalorder %s13, 1
      %p145 = por %p143, %p144
      %p146 = scmp.ne.s32.totalorder %s138, %s141
      %p147 = scmp.eq.s32.totalorder %s13, 0
      %p148 = por %p146, %p147
      %p149 = scmp.ne.s32.totalorder %s138, %s141
      %p150 = scmp.eq.s32.totalorder %s18, 1
      %p151 = por %p149, %p150
      %p152 = scmp.ne.s32.totalorder %s141, %s142
      %p153 = scmp.eq.s32.totalorder %s18, 0
      %p154 = por %p152, %p153
      %p155 = scmp.ne.s32.totalorder %s141, %s142
      %p156 = scmp.eq.s32.totalorder %s19, 1
      %p157 = por %p155, %p156
      %p159 = scmp.ne.s32.totalorder %s142, %s158
      %p160 = scmp.eq.s32.totalorder %s19, 0
      %p161 = por %p159, %p160
      %s162 = ssub.s32 %s13, %s20
      %p163 = scmp.eq.s32.totalorder %s162, 0
      %s165 = sadd.s32 %s164, 1
      %s166 = scalar_select %p163, %s164, %s165
      %p169 = pneg %p163
      %p170 = scmp.eq.s32.totalorder %s13, 1
      %p171 = por %p169, %p170
      %p172 = scmp.ne.s32.totalorder %s164, %s167
      %p173 = scmp.eq.s32.totalorder %s13, 0
      %p174 = por %p172, %p173
      %p175 = scmp.ne.s32.totalorder %s164, %s167
      %p176 = scmp.eq.s32.totalorder %s18, 1
      %p177 = por %p175, %p176
      %p178 = scmp.ne.s32.totalorder %s167, %s168
      %p179 = scmp.eq.s32.totalorder %s18, 0
      %p180 = por %p178, %p179
      %p181 = scmp.ne.s32.totalorder %s167, %s168
      %p182 = scmp.eq.s32.totalorder %s19, 1
      %p183 = por %p181, %p182
      %p185 = scmp.ne.s32.totalorder %s168, %s184
      %p186 = scmp.eq.s32.totalorder %s19, 0
      %p187 = por %p185, %p186
      %p188 = scmp.le.s32.totalorder 1, %s13
      %p189 = scmp.lt.s32.totalorder %s13, 3
      %p190 = pnand %p188, %p189
      %p191 = pneg %p190
      // Predicated region
      $region9: #{gat2_forward.6} parent=5 // pred_check
        _
      $region10: #{gat2_forward.6} parent=5 // pred_check_branch
        %193 = sbr.rel (%p190) target = $region12
      $region11: #{gat2_forward.6} parent=5 // pred_region
        %s194 = ssub.s32 %s13, 1
        // Predicated region
        $region13: #{gat2_forward.6} parent=11 // pred_check
          %p195 = pneg %p60
        $region14: #{gat2_forward.6} parent=11 // pred_check_branch
          %197 = sbr.rel (%p195) target = $region16
        $region15: #{gat2_forward.6} parent=11 // pred_region
          _
        $region16: #{gat2_forward.6} parent=11 // pred_fallthru
          _
        // Predicated region
        $region17: #{gat2_forward.6} parent=11 // pred_check
          %p198 = pneg %p81
        $region18: #{gat2_forward.6} parent=11 // pred_check_branch
          %200 = sbr.rel (%p198) target = $region20
        $region19: #{gat2_forward.6} parent=11 // pred_region
          _
        $region20: #{gat2_forward.6} parent=11 // pred_fallthru
          _
        // Predicated region
        $region21: #{gat2_forward.6} parent=11 // pred_check
          %p201 = pneg %p102
        $region22: #{gat2_forward.6} parent=11 // pred_check_branch
          %203 = sbr.rel (%p201) target = $region24
        $region23: #{gat2_forward.6} parent=11 // pred_region
          _
        $region24: #{gat2_forward.6} parent=11 // pred_fallthru
          _
      $region12: #{gat2_forward.6} parent=5 // pred_fallthru
        _
      %p204 = scmp.lt.s32.totalorder %s13, 2
      // Predicated region
      $region25: #{gat2_forward.6} parent=5 // pred_check
        %p205 = pneg %p204
      $region26: #{gat2_forward.6} parent=5 // pred_check_branch
        %207 = sbr.rel (%p205) target = $region28
      $region27: #{gat2_forward.6} parent=5 // pred_region
        // Predicated region
        $region29: #{gat2_forward.6} parent=27 // pred_check
          %p208 = pneg %p33
        $region30: #{gat2_forward.6} parent=27 // pred_check_branch
          %210 = sbr.rel (%p208) target = $region32
        $region31: #{gat2_forward.6} parent=27 // pred_region
          %s211 = sand.u32 %s23, 1
          %s212 = sand.u32 %s23, 1
          %s213 = smul.addr %s212, 16
          %s214 = scalar_lea.vmem [#allocation2], %s213
          %s215 = smul.addr %s13, 4
          %s216 = scalar_lea.vmem %s0, %s215
          // Predicated region
          $region33: #{gat2_forward.6} parent=31 // pred_check
            _
          $region34: #{gat2_forward.6} parent=31 // pred_check_branch
            %218 = sbr.rel (0) target = $region36
          $region35: #{gat2_forward.6} parent=31 // pred_region
            // Predicated region
            $region37: #{gat2_forward.6} parent=35 // pred_check
              _
            $region38: #{gat2_forward.6} parent=35 // pred_check_branch
              %220 = sbr.rel target = $region40
            $region39: #{gat2_forward.6} parent=35 // pred_region
              // Predicated region
              $region52: #{gat2_forward.6} parent=39 // pred_check
                _
              $region53: #{gat2_forward.6} parent=39 // pred_check_branch
                %242 = sbr.rel (0) target = $region55
              $region54: #{gat2_forward.6} parent=39 // pred_region
                loop: start=0, step=1, limit=1
                $region56: #{gat2_forward.6} parent=54 // loop_pre_header
                  _
                $region57: #{gat2_forward.6} parent=54 // loop_header
                  %s244 = sphi 0, %s248
                  %p245 = scmp.ge.s32.totalorder %s244, 1
                  %s249 = sphi %s216, %s216
                  %s250 = sphi %s214, %s214
                $region58: #{gat2_forward.6} parent=54 // loop_header_branch
                  %247 = sbr.rel (%p245) target = $region62
                $region59: #{gat2_forward.6} parent=54 // loop_body
                  _
                $region60: #{gat2_forward.6} parent=54 // loop_footer
                  %s248 = sadd.s32 1, %s244
                $region61: #{gat2_forward.6} parent=54 // loop_footer_branch
                  %243 = sbr.rel target = $region57
                $region62: #{gat2_forward.6} parent=54 // loop_exit
                  _
                %s252 = ssub.s32 16, 1
                loop: start=0, step=1, limit=1
                $region63: #{gat2_forward.6} parent=54 // loop_pre_header
                  _
                $region64: #{gat2_forward.6} parent=54 // loop_header
                  %s254 = sphi 0, %s258
                  %p255 = scmp.ge.s32.totalorder %s254, 1
                  %s259 = sphi %s216, %s216
                  %s260 = sphi %s214, %s214
                $region65: #{gat2_forward.6} parent=54 // loop_header_branch
                  %257 = sbr.rel (%p255) target = $region69
                $region66: #{gat2_forward.6} parent=54 // loop_body
                  %v261 = vld [vmem:[%s259] sm:%s252]
                  %262 = vst [vmem:[%s260] sm:%s252] %v261
                  %v263 = vld [vmem:[%s259 + $0x8] sm:%s252]
                  %264 = vst [vmem:[%s260 + $0x4] sm:%s252] %v263
                  %v265 = vld [vmem:[%s259 + $0x10] sm:%s252]
                  %266 = vst [vmem:[%s260 + $0x8] sm:%s252] %v265
                  %v267 = vld [vmem:[%s259 + $0x18] sm:%s252]
                  %268 = vst [vmem:[%s260 + $0xc] sm:%s252] %v267
                $region67: #{gat2_forward.6} parent=54 // loop_footer
                  %s258 = sadd.s32 1, %s254
                $region68: #{gat2_forward.6} parent=54 // loop_footer_branch
                  %253 = sbr.rel target = $region64
                $region69: #{gat2_forward.6} parent=54 // loop_exit
                  _
              $region55: #{gat2_forward.6} parent=39 // pred_fallthru
                _
            $region40: #{gat2_forward.6} parent=35 // pred_fallthru
              _
            // Predicated region
            $region41: #{gat2_forward.6} parent=35 // pred_check
              _
            $region42: #{gat2_forward.6} parent=35 // pred_check_branch
              %222 = sbr.rel (0) target = $region44
            $region43: #{gat2_forward.6} parent=35 // pred_region
              %s224 = ssub.s32 16, 1
              loop: start=0, step=1, limit=1
              $region45: #{gat2_forward.6} parent=43 // loop_pre_header
                _
              $region46: #{gat2_forward.6} parent=43 // loop_header
                %s226 = sphi 0, %s230
                %p227 = scmp.ge.s32.totalorder %s226, 1
                %s231 = sphi %s216, %s216
                %s232 = sphi %s214, %s214
              $region47: #{gat2_forward.6} parent=43 // loop_header_branch
                %229 = sbr.rel (%p227) target = $region51
              $region48: #{gat2_forward.6} parent=43 // loop_body
                %v233 = vld [vmem:[%s231] sm:%s224]
                %234 = vst [vmem:[%s232] sm:%s224] %v233
                %v235 = vld [vmem:[%s231 + $0x8] sm:%s224]
                %236 = vst [vmem:[%s232 + $0x4] sm:%s224] %v235
                %v237 = vld [vmem:[%s231 + $0x10] sm:%s224]
                %238 = vst [vmem:[%s232 + $0x8] sm:%s224] %v237
                %v239 = vld [vmem:[%s231 + $0x18] sm:%s224]
                %240 = vst [vmem:[%s232 + $0xc] sm:%s224] %v239
              $region49: #{gat2_forward.6} parent=43 // loop_footer
                %s230 = sadd.s32 1, %s226
              $region50: #{gat2_forward.6} parent=43 // loop_footer_branch
                %225 = sbr.rel target = $region46
              $region51: #{gat2_forward.6} parent=43 // loop_exit
                _
            $region44: #{gat2_forward.6} parent=35 // pred_fallthru
              _
          $region36: #{gat2_forward.6} parent=31 // pred_fallthru
            _
          %269 = vnop
        $region32: #{gat2_forward.6} parent=27 // pred_fallthru
          _
      $region28: #{gat2_forward.6} parent=5 // pred_fallthru
        _
      %p270 = scmp.le.s32.totalorder 1, %s13
      %p271 = scmp.lt.s32.totalorder %s13, 3
      %p272 = pnand %p270, %p271
      %p273 = pneg %p272
      // Predicated region
      $region70: #{gat2_forward.6} parent=5 // pred_check
        _
      $region71: #{gat2_forward.6} parent=5 // pred_check_branch
        %275 = sbr.rel (%p272) target = $region73
      $region72: #{gat2_forward.6} parent=5 // pred_region
        %s276 = ssub.s32 %s13, 1
        %s277 = sand.u32 %s26, 1
        %s278 = sand.u32 %s26, 1
        %s279 = smul.addr %s278, 16
        %s280 = scalar_lea.vmem [#allocation2], %s279
        // Predicated region
        $region74: #{gat2_forward.6} parent=72 // pred_check
          %p281 = pneg %p39
        $region75: #{gat2_forward.6} parent=72 // pred_check_branch
          %283 = sbr.rel (%p281) target = $region77
        $region76: #{gat2_forward.6} parent=72 // pred_region
          _
        $region77: #{gat2_forward.6} parent=72 // pred_fallthru
          _
        %s284 = sand.u32 %s26, 1
        %s285 = sand.u32 %s26, 1
        %s286 = smul.addr %s285, 16
        %s287 = scalar_lea.vmem [#allocation2], %s286
        %p288 = pneg %p39
        %p289 = pneg %p36
        %p290 = pneg %p60
        %p291 = pneg %p57
        %p292 = pneg %p81
        %p293 = pneg %p78
        %p294 = pneg %p102
        %p295 = pneg %p99
        %p296 = pneg %p128
        %p297 = pneg %p125
        %s298 = sand.u32 %s115, 1
        %s299 = sand.u32 %s115, 1
        %s300 = smul.addr %s299, 8
        %s301 = scalar_lea.vmem [#allocation3], %s300
        %p302 = pneg %p154
        %p303 = pneg %p151
        %s304 = smul.u32 16, %s18
        %p305 = scmp.lt.s32.totalorder %s304, 31
        %s306 = scalar_select %p305, %s304, 31
        %s307 = smul.addr %s306, 8
        %s308 = scalar_lea.vmem %s5, %s307
        %p309 = pneg %p180
        %p310 = pneg %p177
        %p311 = scmp.lt.s32.totalorder %s18, 1
        %s312 = scalar_select %p311, %s18, 1
        %s313 = scalar_lea.vmem %s6, %s312
        %s314 = smul.u32 16, %s18
        %p315 = scmp.lt.s32.totalorder %s314, 31
        %s316 = scalar_select %p315, %s314, 31
        %s317 = smul.addr %s316, 8
        %s318 = scalar_lea.vmem %s5, %s317
        %s319 = smul.u32 16, %s18
        %p320 = scmp.lt.s32.totalorder %s18, 1
        %s321 = scalar_select %p320, %s18, 1
        %s322 = scalar_lea.vmem %s6, %s321
        %v325 = vld [vmem:[%s280] sm:$0xf]
        %v326 = vld [vmem:[%s280 + $0x4] sm:$0xf]
        %v327 = vld [vmem:[%s280 + $0x8] sm:$0xf]
        %v328 = vld [vmem:[%s280 + $0xc] sm:$0xf]
        %v329 = vld [vmem:[%s1] sm:$0xf]
        %v330 = vld [vmem:[%s1 + $0x4] sm:$0xf]
        %v331 = vld [vmem:[%s1 + $0x8] sm:$0xf]
        %v332 = vld [vmem:[%s1 + $0xc] sm:$0xf]
        %v337 = vunpack.c.l.b16 %v329
        %v338 = vunpack.c.l.b16 %v330
        %v339 = vunpack.c.l.b16 %v331
        %v340 = vunpack.c.l.b16 %v332
        %v341 = vpack.c.b16 %v338, %v337
        %v342 = vpack.c.b16 %v340, %v339
        %v347 = vunpack.c.l.b16 %v325
        %v348 = vunpack.c.l.b16 %v326
        %v349 = vunpack.c.l.b16 %v327
        %v350 = vunpack.c.l.b16 %v328
        %v351 = vpack.c.b16 %v348, %v347
        %v352 = vpack.c.b16 %v350, %v349
        %vm355 = vcmask 261120
        %v357 = vsel %vm355, %v341, 0
        %v360 = vsel %vm355, %v342, 0
        %362 = vmatpush.bf16.msra.mxu0 0
        %363 = vmatpush.bf16.msra.mxu0 0
        %364 = vmatpush.bf16.msra.mxu0 0
        %365 = vmatpush.bf16.msra.mxu0 0
        %366 = vmatpush.bf16.msra.mxu0 0
        %367 = vmatpush.bf16.msra.mxu0 0
        %368 = vmatpush.bf16.msra.mxu0 %v352
        %369 = vmatpush.bf16.msra.mxu0 %v351
        %370 = vmatmul.bf16.gmra.mxu0 %v357
        %v371 = vpop.f32.mrf.mxu0
        %v372 = vadd.f32 0.0, %v371
        %v373 = vpop.f32.mrf.mxu0
        %v374 = vadd.f32 0.0, %v373
        %375 = vmatmul.bf16.gmra.mxu0 %v360
        %v376 = vpop.f32.mrf.mxu0
        %v377 = vadd.f32 0.0, %v376
        %v378 = vpop.f32.mrf.mxu0
        %v379 = vadd.f32 0.0, %v378
        %380 = vdwg.mxu0
        %v381 = vmul.f32 %v372, 0.2
        %v382 = vmul.f32 %v374, 0.2
        %v383 = vmul.f32 %v377, 0.2
        %v384 = vmul.f32 %v379, 0.2
        %v385 = vmax.f32 %v372, %v381
        %v386 = vmax.f32 %v374, %v382
        %v387 = vmax.f32 %v377, %v383
        %v388 = vmax.f32 %v379, %v384
        %v389 = vld [vmem:[%s2] sm:$0xf]
        %v390 = vpack.c.bf16 %v386, %v385
        %v391 = vpack.c.bf16 %v388, %v387
        %v393 = vsel %vm355, %v389, 0
        %395 = vmatpush.bf16.msra.mxu0 0
        %396 = vmatpush.bf16.msra.mxu0 0
        %397 = vmatpush.bf16.msra.mxu0 0
        %398 = vmatpush.bf16.msra.mxu0 0
        %399 = vmatpush.bf16.msra.mxu0 0
        %400 = vmatpush.bf16.msra.mxu0 0
        %401 = vmatpush.bf16.msra.mxu0 %v391
        %402 = vmatpush.bf16.msra.mxu0 %v390
        %403 = vmatmul.bf16.gmra.mxu0 %v393
        %v404 = vpop.f32.mrf.mxu0
        %v405 = vadd.f32 0.0, %v404
        %v406 = vpop.f32.mrf.mxu0
        %407 = vdwg.mxu0
        %v408 = vld [vmem:[%s3] sm:$0x1]
        %v409 = vpack.c.bf16 %v405, %v405
        %vm410 = vcmask 64512
        %v412 = vsel %vm410, %v408, 0
        %vm414 = vcmask 1043456
        %v416 = vsel %vm414, %v409, 0
        %418 = vmatpush.bf16.msra.mxu0 0
        %419 = vmatpush.bf16.msra.mxu0 0
        %420 = vmatpush.bf16.msra.mxu0 0
        %421 = vmatpush.bf16.msra.mxu0 0
        %422 = vmatpush.bf16.msra.mxu0 0
        %423 = vmatpush.bf16.msra.mxu0 0
        %424 = vmatpush.bf16.msra.mxu0 0
        %425 = vmatpush.bf16.msra.mxu0 %v416
        %426 = vmatmul.bf16.gmra.mxu0 %v412
        %v427 = vpop.f32.mrf.mxu0
        %v428 = vadd.f32 0.0, %v427
        %v429 = vpop.f32.mrf.mxu0
        %430 = vdwg.mxu0
        %431 = vst [vmem:[%s301] sm:$0xf] %v409
        %vm432 = vcmask 1040384
        %vm433 = vsmask.f32 256
        %vm434 = vmand %vm432, %vm433
        %v435 = vld [vmem:[%s301 + $0x4] sm:$0x1]
        %v436 = vsel %vm434, 1065369472, %v435
        %437 = vst [vmem:[%s301 + $0x4] sm:$0x1] %v436
        %438 = vxpose.xlu0.b32.start [1/16] %v428, 128
        %439 = vxpose.xlu0.b32.cont [2/16] 0.0, 128
        %440 = vxpose.xlu0.b32.cont [3/16] 0.0, 128
        %441 = vxpose.xlu0.b32.cont [4/16] 0.0, 128
        %442 = vxpose.xlu0.b32.cont [5/16] 0.0, 128
        %443 = vxpose.xlu0.b32.cont [6/16] 0.0, 128
        %444 = vxpose.xlu0.b32.cont [7/16] 0.0, 128
        %445 = vxpose.xlu0.b32.cont [8/16] 0.0, 128
        %446 = vxpose.xlu0.b32.cont [9/16] 0.0, 128
        %447 = vxpose.xlu0.b32.cont [10/16] 0.0, 128
        %448 = vxpose.xlu0.b32.cont [11/16] 0.0, 128
        %449 = vxpose.xlu0.b32.cont [12/16] 0.0, 128
        %450 = vxpose.xlu0.b32.cont [13/16] 0.0, 128
        %451 = vxpose.xlu0.b32.cont [14/16] 0.0, 128
        %452 = vxpose.xlu0.b32.cont [15/16] 0.0, 128
        %453 = vxpose.xlu0.b32.end [16/16] 0.0, 128
        %v454 = vpop.trf.xlu0
        %v455 = vpop.trf.xlu0
        %v456 = vpop.trf.xlu0
        %v457 = vpop.trf.xlu0
        %v458 = vpop.trf.xlu0
        %v459 = vpop.trf.xlu0
        %v460 = vpop.trf.xlu0
        %v461 = vpop.trf.xlu0
        %v462 = vpop.trf.xlu0
        %v463 = vpop.trf.xlu0
        %v464 = vpop.trf.xlu0
        %v465 = vpop.trf.xlu0
        %v466 = vpop.trf.xlu0
        %v467 = vpop.trf.xlu0
        %v468 = vpop.trf.xlu0
        %v469 = vpop.trf.xlu0
        %vm470 = vcmask 7168
        %471 = vst.msk [vmem:[%s318] sm:$0xff] %vm470, %v454
        %472 = vst.msk [vmem:[%s318 + $0x8] sm:$0xff] %vm470, %v455
        %473 = vst.msk [vmem:[%s318 + $0x10] sm:$0xff] %vm470, %v456
        %474 = vst.msk [vmem:[%s318 + $0x18] sm:$0xff] %vm470, %v457
        %475 = vst.msk [vmem:[%s318 + $0x20] sm:$0xff] %vm470, %v458
        %476 = vst.msk [vmem:[%s318 + $0x28] sm:$0xff] %vm470, %v459
        %477 = vst.msk [vmem:[%s318 + $0x30] sm:$0xff] %vm470, %v460
        %478 = vst.msk [vmem:[%s318 + $0x38] sm:$0xff] %vm470, %v461
        %479 = vst.msk [vmem:[%s318 + $0x40] sm:$0xff] %vm470, %v462
        %480 = vst.msk [vmem:[%s318 + $0x48] sm:$0xff] %vm470, %v463
        %481 = vst.msk [vmem:[%s318 + $0x50] sm:$0xff] %vm470, %v464
        %482 = vst.msk [vmem:[%s318 + $0x58] sm:$0xff] %vm470, %v465
        %483 = vst.msk [vmem:[%s318 + $0x60] sm:$0xff] %vm470, %v466
        %484 = vst.msk [vmem:[%s318 + $0x68] sm:$0xff] %vm470, %v467
        %485 = vst.msk [vmem:[%s318 + $0x70] sm:$0xff] %vm470, %v468
        %486 = vst.msk [vmem:[%s318 + $0x78] sm:$0xff] %vm470, %v469
        %487 = vst [vmem:[%s322 - $0x1] sm:$0x2] %v428
        %s488 = sand.u32 %s115, 1
        %s489 = sand.u32 %s115, 1
        %s490 = smul.addr %s489, 8
        %s491 = scalar_lea.vmem [#allocation3], %s490
        %s492 = smul.u32 16, %s18
        %p493 = scmp.lt.s32.totalorder %s492, 31
        %s494 = scalar_select %p493, %s492, 31
        %s495 = smul.addr %s494, 8
        %s496 = scalar_lea.vmem %s5, %s495
        %p497 = scmp.lt.s32.totalorder %s18, 1
        %s498 = scalar_select %p497, %s18, 1
        %s499 = scalar_lea.vmem %s6, %s498
        // Predicated region
        $region78: #{gat2_forward.6} parent=72 // pred_check
          %p500 = pneg %p125
        $region79: #{gat2_forward.6} parent=72 // pred_check_branch
          %502 = sbr.rel (%p500) target = $region81
        $region80: #{gat2_forward.6} parent=72 // pred_region
          %s503 = smul.addr %s18, 4
          %s504 = scalar_lea.vmem %s4, %s503
          // Predicated region
          $region82: #{gat2_forward.6} parent=80 // pred_check
            _
          $region83: #{gat2_forward.6} parent=80 // pred_check_branch
            %506 = sbr.rel (0) target = $region85
          $region84: #{gat2_forward.6} parent=80 // pred_region
            // Predicated region
            $region86: #{gat2_forward.6} parent=84 // pred_check
              _
            $region87: #{gat2_forward.6} parent=84 // pred_check_branch
              %508 = sbr.rel target = $region89
            $region88: #{gat2_forward.6} parent=84 // pred_region
              // Predicated region
              $region101: #{gat2_forward.6} parent=88 // pred_check
                _
              $region102: #{gat2_forward.6} parent=88 // pred_check_branch
                %526 = sbr.rel (0) target = $region104
              $region103: #{gat2_forward.6} parent=88 // pred_region
                loop: start=0, step=1, limit=1
                $region105: #{gat2_forward.6} parent=103 // loop_pre_header
                  _
                $region106: #{gat2_forward.6} parent=103 // loop_header
                  %s528 = sphi 0, %s532
                  %p529 = scmp.ge.s32.totalorder %s528, 1
                  %s533 = sphi %s491, %s491
                  %s534 = sphi %s504, %s504
                $region107: #{gat2_forward.6} parent=103 // loop_header_branch
                  %531 = sbr.rel (%p529) target = $region111
                $region108: #{gat2_forward.6} parent=103 // loop_body
                  _
                $region109: #{gat2_forward.6} parent=103 // loop_footer
                  %s532 = sadd.s32 1, %s528
                $region110: #{gat2_forward.6} parent=103 // loop_footer_branch
                  %527 = sbr.rel target = $region106
                $region111: #{gat2_forward.6} parent=103 // loop_exit
                  _
                %s536 = ssub.s32 16, 1
                loop: start=0, step=1, limit=1
                $region112: #{gat2_forward.6} parent=103 // loop_pre_header
                  _
                $region113: #{gat2_forward.6} parent=103 // loop_header
                  %s538 = sphi 0, %s542
                  %p539 = scmp.ge.s32.totalorder %s538, 1
                  %s543 = sphi %s491, %s491
                  %s544 = sphi %s504, %s504
                $region114: #{gat2_forward.6} parent=103 // loop_header_branch
                  %541 = sbr.rel (%p539) target = $region118
                $region115: #{gat2_forward.6} parent=103 // loop_body
                  %v545 = vld [vmem:[%s543] sm:%s536]
                  %546 = vst [vmem:[%s544] sm:%s536] %v545
                  %v547 = vld [vmem:[%s543 + $0x4] sm:%s536]
                  %548 = vst [vmem:[%s544 + $0x8] sm:%s536] %v547
                $region116: #{gat2_forward.6} parent=103 // loop_footer
                  %s542 = sadd.s32 1, %s538
                $region117: #{gat2_forward.6} parent=103 // loop_footer_branch
                  %537 = sbr.rel target = $region113
                $region118: #{gat2_forward.6} parent=103 // loop_exit
                  _
              $region104: #{gat2_forward.6} parent=88 // pred_fallthru
                _
            $region89: #{gat2_forward.6} parent=84 // pred_fallthru
              _
            // Predicated region
            $region90: #{gat2_forward.6} parent=84 // pred_check
              _
            $region91: #{gat2_forward.6} parent=84 // pred_check_branch
              %510 = sbr.rel (0) target = $region93
            $region92: #{gat2_forward.6} parent=84 // pred_region
              %s512 = ssub.s32 16, 1
              loop: start=0, step=1, limit=1
              $region94: #{gat2_forward.6} parent=92 // loop_pre_header
                _
              $region95: #{gat2_forward.6} parent=92 // loop_header
                %s514 = sphi 0, %s518
                %p515 = scmp.ge.s32.totalorder %s514, 1
                %s519 = sphi %s491, %s491
                %s520 = sphi %s504, %s504
              $region96: #{gat2_forward.6} parent=92 // loop_header_branch
                %517 = sbr.rel (%p515) target = $region100
              $region97: #{gat2_forward.6} parent=92 // loop_body
                %v521 = vld [vmem:[%s519] sm:%s512]
                %522 = vst [vmem:[%s520] sm:%s512] %v521
                %v523 = vld [vmem:[%s519 + $0x4] sm:%s512]
                %524 = vst [vmem:[%s520 + $0x8] sm:%s512] %v523
              $region98: #{gat2_forward.6} parent=92 // loop_footer
                %s518 = sadd.s32 1, %s514
              $region99: #{gat2_forward.6} parent=92 // loop_footer_branch
                %513 = sbr.rel target = $region95
              $region100: #{gat2_forward.6} parent=92 // loop_exit
                _
            $region93: #{gat2_forward.6} parent=84 // pred_fallthru
              _
          $region85: #{gat2_forward.6} parent=80 // pred_fallthru
            _
          %549 = vnop
        $region81: #{gat2_forward.6} parent=72 // pred_fallthru
          _
        // Predicated region
        $region119: #{gat2_forward.6} parent=72 // pred_check
          %p550 = pneg %p151
        $region120: #{gat2_forward.6} parent=72 // pred_check_branch
          %552 = sbr.rel (%p550) target = $region122
        $region121: #{gat2_forward.6} parent=72 // pred_region
          %s553 = smul.u32 16, %s18
        $region122: #{gat2_forward.6} parent=72 // pred_fallthru
          _
        // Predicated region
        $region123: #{gat2_forward.6} parent=72 // pred_check
          %p554 = pneg %p177
        $region124: #{gat2_forward.6} parent=72 // pred_check_branch
          %556 = sbr.rel (%p554) target = $region126
        $region125: #{gat2_forward.6} parent=72 // pred_region
          _
        $region126: #{gat2_forward.6} parent=72 // pred_fallthru
          _
      $region73: #{gat2_forward.6} parent=5 // pred_fallthru
        _
      %p557 = scmp.le.s32.totalorder 2, %s13
      // Predicated region
      $region127: #{gat2_forward.6} parent=5 // pred_check
        %p558 = pneg %p557
      $region128: #{gat2_forward.6} parent=5 // pred_check_branch
        %560 = sbr.rel (%p558) target = $region130
      $region129: #{gat2_forward.6} parent=5 // pred_region
        %s561 = ssub.s32 %s13, 2
        // Predicated region
        $region131: #{gat2_forward.6} parent=129 // pred_check
          %p562 = pneg %p131
        $region132: #{gat2_forward.6} parent=129 // pred_check_branch
          %564 = sbr.rel (%p562) target = $region134
        $region133: #{gat2_forward.6} parent=129 // pred_region
          %s565 = sand.u32 %s116, 1
          %s566 = sand.u32 %s116, 1
          %s567 = smul.addr %s566, 8
          %s568 = scalar_lea.vmem [#allocation3], %s567
        $region134: #{gat2_forward.6} parent=129 // pred_fallthru
          _
        // Predicated region
        $region135: #{gat2_forward.6} parent=129 // pred_check
          %p569 = pneg %p157
        $region136: #{gat2_forward.6} parent=129 // pred_check_branch
          %571 = sbr.rel (%p569) target = $region138
        $region137: #{gat2_forward.6} parent=129 // pred_region
          %s572 = smul.u32 16, %s19
          %p573 = scmp.lt.s32.totalorder %s572, 31
          %s574 = scalar_select %p573, %s572, 31
          %s575 = smul.addr %s574, 8
          %s576 = scalar_lea.vmem %s5, %s575
        $region138: #{gat2_forward.6} parent=129 // pred_fallthru
          _
        // Predicated region
        $region139: #{gat2_forward.6} parent=129 // pred_check
          %p577 = pneg %p183
        $region140: #{gat2_forward.6} parent=129 // pred_check_branch
          %579 = sbr.rel (%p577) target = $region142
        $region141: #{gat2_forward.6} parent=129 // pred_region
          %p580 = scmp.lt.s32.totalorder %s19, 1
          %s581 = scalar_select %p580, %s19, 1
          %s582 = scalar_lea.vmem %s6, %s581
        $region142: #{gat2_forward.6} parent=129 // pred_fallthru
          _
      $region130: #{gat2_forward.6} parent=5 // pred_fallthru
        _
    $region6: #{gat2_forward.6} parent=1 // loop_footer
      %s17 = sadd.s32 1, %s13
    $region7: #{gat2_forward.6} parent=1 // loop_footer_branch
      %12 = sbr.rel target = $region3
    $region8: #{gat2_forward.6} parent=1 // loop_exit
      _

// kernel: gat2_forward.7
$region0: #{gat2_forward.7}
  #allocation0 [shape = 'u32[]', space=smem, size = 0x4, offset = 0x4, fixed_abs, tag = 'smem constant byte address 0x4 - core index']
  #allocation1 [shape = 'u32[72,128]{1,0:T(1,128)}', space=vmem, size = 0x9000, scoped, tag = 'internal scratch']
  %s0 = inlined_call_operand.vmem [shape: bf16[1,9,256], index: 0, kind: input, shape index: {}]
  %s1 = inlined_call_operand.vmem [shape: f32[256,1], index: 1, kind: input, shape index: {}]
  %s2 = inlined_call_operand.vmem [shape: f32[1,256], index: 2, kind: input, shape index: {}]
  %s3 = inlined_call_operand.hbm [shape: s8[256,256], index: 3, kind: input, shape index: {}]
  %s4 = inlined_call_operand.hbm [shape: f32[8,256], index: 4, kind: output, shape index: {}]
  %s5 = sld [smem:[#allocation0]]
  $region53: #{gat2_forward.7} parent=0
    _
  %s7 = ssub.s32 1, %s5
  %s8 = scalar_select 0, %s7, %s5
  $region1: #{gat2_forward.7} parent=0
    #allocation2 [shape = 'u8[65536]{0}', space=vmem, size = 0x10000, scoped, tag = 'input window, operand 3']
    #allocation3 [shape = 's32[2]{0}', space=sflag, size = 0x8, scoped, tag = 'scoped memory for gat2_forward.7']
    #allocation4 [shape = 's32[2]{0}', space=sflag, size = 0x8, scoped, tag = 'scoped memory for gat2_forward.7']
    #allocation5 [shape = 'u8[8192]{0}', space=vmem, size = 0x2000, scoped, tag = 'output window, operand 0']
    %9 = vsyncpa [#allocation3], 0
    %s10 = scalar_lea.sflag [#allocation3], 1
    %11 = vsyncpa %s10, 0
    %12 = vsyncpa [#allocation4], 0
    %s13 = scalar_lea.sflag [#allocation4], 1
    %14 = vsyncpa %s13, 0
    loop: start=0, step=1, limit=4
    $region2: #{gat2_forward.7} parent=1 // loop_pre_header
      _
    $region3: #{gat2_forward.7} parent=1 // loop_header
      %s16 = sphi 0, %s20
      %p17 = scmp.ge.s32.totalorder %s16, 4
      %s24 = sphi 0, %s24
      %s26 = sphi 0, %s24
      %s27 = sphi 0, %s26
      %s41 = sphi 0, %s27
      %s45 = sphi 0, %s45
      %s47 = sphi 0, %s45
      %s48 = sphi 0, %s47
      %s62 = sphi 0, %s48
      %s68 = sphi 0, %s70
      %s71 = sphi 0, %s68
      %s72 = sphi 0, %s71
      %s88 = sphi 0, %s72
      %s94 = sphi 0, %s96
      %s97 = sphi 0, %s94
      %s98 = sphi 0, %s97
      %s114 = sphi 0, %s98
      %s120 = sphi 0, %s122
      %s123 = sphi 0, %s120
      %s124 = sphi 0, %s123
      %s140 = sphi 0, %s124
    $region4: #{gat2_forward.7} parent=1 // loop_header_branch
      %19 = sbr.rel (%p17) target = $region8
    $region5: #{gat2_forward.7} parent=1 // loop_body
      %s21 = ssub.s32 %s16, 1
      %s22 = ssub.s32 %s16, 2
      %s23 = sadd.s32 %s16, 1
      %s25 = sadd.s32 %s24, 1
      %p28 = scmp.eq.s32.totalorder %s16, 1
      %p29 = scmp.ne.s32.totalorder %s24, %s26
      %p30 = scmp.eq.s32.totalorder %s16, 0
      %p31 = por %p29, %p30
      %p32 = scmp.ne.s32.totalorder %s24, %s26
      %p33 = scmp.eq.s32.totalorder %s21, 1
      %p34 = por %p32, %p33
      %p35 = scmp.ne.s32.totalorder %s26, %s27
      %p36 = scmp.eq.s32.totalorder %s21, 0
      %p37 = por %p35, %p36
      %p38 = scmp.ne.s32.totalorder %s26, %s27
      %p39 = scmp.eq.s32.totalorder %s22, 1
      %p40 = por %p38, %p39
      %p42 = scmp.ne.s32.totalorder %s27, %s41
      %p43 = scmp.eq.s32.totalorder %s22, 0
      %p44 = por %p42, %p43
      %s46 = sadd.s32 %s45, 1
      %p49 = scmp.eq.s32.totalorder %s16, 1
      %p50 = scmp.ne.s32.totalorder %s45, %s47
      %p51 = scmp.eq.s32.totalorder %s16, 0
      %p52 = por %p50, %p51
      %p53 = scmp.ne.s32.totalorder %s45, %s47
      %p54 = scmp.eq.s32.totalorder %s21, 1
      %p55 = por %p53, %p54
      %p56 = scmp.ne.s32.totalorder %s47, %s48
      %p57 = scmp.eq.s32.totalorder %s21, 0
      %p58 = por %p56, %p57
      %p59 = scmp.ne.s32.totalorder %s47, %s48
      %p60 = scmp.eq.s32.totalorder %s22, 1
      %p61 = por %p59, %p60
      %p63 = scmp.ne.s32.totalorder %s48, %s62
      %p64 = scmp.eq.s32.totalorder %s22, 0
      %p65 = por %p63, %p64
      %s66 = ssub.s32 %s16, %s23
      %p67 = scmp.eq.s32.totalorder %s66, 0
      %s69 = sadd.s32 %s68, 1
      %s70 = scalar_select %p67, %s68, %s69
      %p73 = pneg %p67
      %p74 = scmp.eq.s32.totalorder %s16, 1
      %p75 = por %p73, %p74
      %p76 = scmp.ne.s32.totalorder %s68, %s71
      %p77 = scmp.eq.s32.totalorder %s16, 0
      %p78 = por %p76, %p77
      %p79 = scmp.ne.s32.totalorder %s68, %s71
      %p80 = scmp.eq.s32.totalorder %s21, 1
      %p81 = por %p79, %p80
      %p82 = scmp.ne.s32.totalorder %s71, %s72
      %p83 = scmp.eq.s32.totalorder %s21, 0
      %p84 = por %p82, %p83
      %p85 = scmp.ne.s32.totalorder %s71, %s72
      %p86 = scmp.eq.s32.totalorder %s22, 1
      %p87 = por %p85, %p86
      %p89 = scmp.ne.s32.totalorder %s72, %s88
      %p90 = scmp.eq.s32.totalorder %s22, 0
      %p91 = por %p89, %p90
      %s92 = ssub.s32 %s16, %s23
      %p93 = scmp.eq.s32.totalorder %s92, 0
      %s95 = sadd.s32 %s94, 1
      %s96 = scalar_select %p93, %s94, %s95
      %p99 = pneg %p93
      %p100 = scmp.eq.s32.totalorder %s16, 1
      %p101 = por %p99, %p100
      %p102 = scmp.ne.s32.totalorder %s94, %s97
      %p103 = scmp.eq.s32.totalorder %s16, 0
      %p104 = por %p102, %p103
      %p105 = scmp.ne.s32.totalorder %s94, %s97
      %p106 = scmp.eq.s32.totalorder %s21, 1
      %p107 = por %p105, %p106
      %p108 = scmp.ne.s32.totalorder %s97, %s98
      %p109 = scmp.eq.s32.totalorder %s21, 0
      %p110 = por %p108, %p109
      %p111 = scmp.ne.s32.totalorder %s97, %s98
      %p112 = scmp.eq.s32.totalorder %s22, 1
      %p113 = por %p111, %p112
      %p115 = scmp.ne.s32.totalorder %s98, %s114
      %p116 = scmp.eq.s32.totalorder %s22, 0
      %p117 = por %p115, %p116
      %s118 = ssub.s32 %s16, %s23
      %p119 = scmp.eq.s32.totalorder %s118, 0
      %s121 = sadd.s32 %s120, 1
      %s122 = scalar_select %p119, %s120, %s121
      %p125 = pneg %p119
      %p126 = scmp.eq.s32.totalorder %s16, 1
      %p127 = por %p125, %p126
      %p128 = scmp.ne.s32.totalorder %s120, %s123
      %p129 = scmp.eq.s32.totalorder %s16, 0
      %p130 = por %p128, %p129
      %p131 = scmp.ne.s32.totalorder %s120, %s123
      %p132 = scmp.eq.s32.totalorder %s21, 1
      %p133 = por %p131, %p132
      %p134 = scmp.ne.s32.totalorder %s123, %s124
      %p135 = scmp.eq.s32.totalorder %s21, 0
      %p136 = por %p134, %p135
      %p137 = scmp.ne.s32.totalorder %s123, %s124
      %p138 = scmp.eq.s32.totalorder %s22, 1
      %p139 = por %p137, %p138
      %p141 = scmp.ne.s32.totalorder %s124, %s140
      %p142 = scmp.eq.s32.totalorder %s22, 0
      %p143 = por %p141, %p142
      %p144 = scmp.le.s32.totalorder 1, %s16
      %p145 = scmp.lt.s32.totalorder %s16, 3
      %p146 = pnand %p144, %p145
      %p147 = pneg %p146
      // Predicated region
      $region9: #{gat2_forward.7} parent=5 // pred_check
        _
      $region10: #{gat2_forward.7} parent=5 // pred_check_branch
        %149 = sbr.rel (%p146) target = $region12
      $region11: #{gat2_forward.7} parent=5 // pred_region
        %s150 = ssub.s32 %s16, 1
        // Predicated region
        $region13: #{gat2_forward.7} parent=11 // pred_check
          %p151 = pneg %p37
        $region14: #{gat2_forward.7} parent=11 // pred_check_branch
          %153 = sbr.rel (%p151) target = $region16
        $region15: #{gat2_forward.7} parent=11 // pred_region
          _
        $region16: #{gat2_forward.7} parent=11 // pred_fallthru
          _
        // Predicated region
        $region17: #{gat2_forward.7} parent=11 // pred_check
          %p154 = pneg %p58
        $region18: #{gat2_forward.7} parent=11 // pred_check_branch
          %156 = sbr.rel (%p154) target = $region20
        $region19: #{gat2_forward.7} parent=11 // pred_region
          _
        $region20: #{gat2_forward.7} parent=11 // pred_fallthru
          _
      $region12: #{gat2_forward.7} parent=5 // pred_fallthru
        _
      %p157 = scmp.lt.s32.totalorder %s16, 2
      // Predicated region
      $region21: #{gat2_forward.7} parent=5 // pred_check
        %p158 = pneg %p157
      $region22: #{gat2_forward.7} parent=5 // pred_check_branch
        %160 = sbr.rel (%p158) target = $region24
      $region23: #{gat2_forward.7} parent=5 // pred_region
        // Predicated region
        $region25: #{gat2_forward.7} parent=23 // pred_check
          %p161 = pneg %p78
        $region26: #{gat2_forward.7} parent=23 // pred_check_branch
          %163 = sbr.rel (%p161) target = $region28
        $region27: #{gat2_forward.7} parent=23 // pred_region
          %p164 = scmp.lt.s32.totalorder %s16, 1
          %s165 = scalar_select %p164, %s16, 1
          %s166 = scalar_lea.vmem %s2, %s165
        $region28: #{gat2_forward.7} parent=23 // pred_fallthru
          _
        // Predicated region
        $region29: #{gat2_forward.7} parent=23 // pred_check
          %p167 = pneg %p104
        $region30: #{gat2_forward.7} parent=23 // pred_check_branch
          %169 = sbr.rel (%p167) target = $region32
        $region31: #{gat2_forward.7} parent=23 // pred_region
          %s170 = sand.u32 %s94, 1
          %s171 = scalar_lea.sflag [#allocation3], %s170
          %s172 = sand.u32 %s94, 1
          %s173 = smul.addr %s172, 64
          %s174 = scalar_lea.vmem [#allocation2], %s173
          %176 = vsyncadd %s171, 0
          %s177 = smul.addr %s16, 8
          %s178 = scalar_lea.hbm %s3, %s177
          %s179 = sshll.u32 %s178, 4
          %s180 = int_to_ptr.hbm [resolvable:$true] %s179
          %s181 = sshll.u32 %s174, 4
          %s182 = int_to_ptr.vmem [resolvable:$true] %s181
          %187 = dma.hbm_to_vmem [thread:$0]  %s180, 1024, %s182, %s171, 256, 128, 8
        $region32: #{gat2_forward.7} parent=23 // pred_fallthru
          _
      $region24: #{gat2_forward.7} parent=5 // pred_fallthru
        _
      %p188 = scmp.le.s32.totalorder 1, %s16
      %p189 = scmp.lt.s32.totalorder %s16, 3
      %p190 = pnand %p188, %p189
      %p191 = pneg %p190
      // Predicated region
      $region33: #{gat2_forward.7} parent=5 // pred_check
        _
      $region34: #{gat2_forward.7} parent=5 // pred_check_branch
        %193 = sbr.rel (%p190) target = $region36
      $region35: #{gat2_forward.7} parent=5 // pred_region
        %s194 = ssub.s32 %s16, 1
        %s195 = sand.u32 %s97, 1
        %s196 = scalar_lea.sflag [#allocation3], %s195
        %s197 = sand.u32 %s97, 1
        %s198 = smul.addr %s197, 64
        %s199 = scalar_lea.vmem [#allocation2], %s198
        // Predicated region
        $region37: #{gat2_forward.7} parent=35 // pred_check
          %p200 = pneg %p110
        $region38: #{gat2_forward.7} parent=35 // pred_check_branch
          %202 = sbr.rel (%p200) target = $region40
        $region39: #{gat2_forward.7} parent=35 // pred_region
          %204 = dma.done %s196, 1024
        $region40: #{gat2_forward.7} parent=35 // pred_fallthru
          _
        %p205 = pneg %p37
        %p206 = pneg %p34
        %p207 = pneg %p58
        %p208 = pneg %p55
        %p209 = scmp.lt.s32.totalorder %s21, 1
        %s210 = scalar_select %p209, %s21, 1
        %s211 = scalar_lea.vmem %s2, %s210
        %p212 = pneg %p84
        %p213 = pneg %p81
        %s214 = sand.u32 %s97, 1
        %s215 = scalar_lea.sflag [#allocation3], %s214
        %s216 = sand.u32 %s97, 1
        %s217 = smul.addr %s216, 64
        %s218 = scalar_lea.vmem [#allocation2], %s217
        %p219 = pneg %p110
        %p220 = pneg %p107
        %p221 = pneg %p136
        %p222 = pneg %p133
        %s223 = sand.u32 %s123, 1
        %s224 = scalar_lea.sflag [#allocation4], %s223
        %s225 = sand.u32 %s123, 1
        %s226 = smul.addr %s225, 8
        %s227 = scalar_lea.vmem [#allocation5], %s226
        %p228 = scmp.lt.s32.totalorder %s21, 1
        %s229 = scalar_select %p228, %s21, 1
        %s230 = scalar_lea.vmem %s2, %s229
        %v233 = vld [vmem:[%s199] sm:$0xff]
        %v234 = vld [vmem:[%s199 + $0x8] sm:$0xff]
        %v235 = vld [vmem:[%s199 + $0x10] sm:$0xff]
        %v236 = vld [vmem:[%s199 + $0x18] sm:$0xff]
        %v237 = vld [vmem:[%s199 + $0x20] sm:$0xff]
        %v238 = vld [vmem:[%s199 + $0x28] sm:$0xff]
        %v239 = vld [vmem:[%s199 + $0x30] sm:$0xff]
        %v240 = vld [vmem:[%s199 + $0x38] sm:$0xff]
        %vm241 = vnez %v233
        %vm242 = vnez %v234
        %vm243 = vnez %v235
        %vm244 = vnez %v236
        %vm245 = vnez %v237
        %vm246 = vnez %v238
        %vm247 = vnez %v239
        %vm248 = vnez %v240
        %v249 = vld [vmem:[%s1] sm:$0xff]
        %v250 = vld [vmem:[%s1 + $0x8] sm:$0xff]
        %v251 = vld [vmem:[%s1 + $0x10] sm:$0xff]
        %v252 = vld [vmem:[%s1 + $0x18] sm:$0xff]
        %v253 = vld [vmem:[%s1 + $0x20] sm:$0xff]
        %v254 = vld [vmem:[%s1 + $0x28] sm:$0xff]
        %v255 = vld [vmem:[%s1 + $0x30] sm:$0xff]
        %v256 = vld [vmem:[%s1 + $0x38] sm:$0xff]
        %v257 = vld [vmem:[%s1 + $0x40] sm:$0xff]
        %v258 = vld [vmem:[%s1 + $0x48] sm:$0xff]
        %v259 = vld [vmem:[%s1 + $0x50] sm:$0xff]
        %v260 = vld [vmem:[%s1 + $0x58] sm:$0xff]
        %v261 = vld [vmem:[%s1 + $0x60] sm:$0xff]
        %v262 = vld [vmem:[%s1 + $0x68] sm:$0xff]
        %v263 = vld [vmem:[%s1 + $0x70] sm:$0xff]
        %v264 = vld [vmem:[%s1 + $0x78] sm:$0xff]
        %v265 = vld [vmem:[%s1 + $0x80] sm:$0xff]
        %v266 = vld [vmem:[%s1 + $0x88] sm:$0xff]
        %v267 = vld [vmem:[%s1 + $0x90] sm:$0xff]
        %v268 = vld [vmem:[%s1 + $0x98] sm:$0xff]
        %v269 = vld [vmem:[%s1 + $0xa0] sm:$0xff]
        %v270 = vld [vmem:[%s1 + $0xa8] sm:$0xff]
        %v271 = vld [vmem:[%s1 + $0xb0] sm:$0xff]
        %v272 = vld [vmem:[%s1 + $0xb8] sm:$0xff]
        %v273 = vld [vmem:[%s1 + $0xc0] sm:$0xff]
        %v274 = vld [vmem:[%s1 + $0xc8] sm:$0xff]
        %v275 = vld [vmem:[%s1 + $0xd0] sm:$0xff]
        %v276 = vld [vmem:[%s1 + $0xd8] sm:$0xff]
        %v277 = vld [vmem:[%s1 + $0xe0] sm:$0xff]
        %v278 = vld [vmem:[%s1 + $0xe8] sm:$0xff]
        %v279 = vld [vmem:[%s1 + $0xf0] sm:$0xff]
        %v280 = vld [vmem:[%s1 + $0xf8] sm:$0xff]
        %v281 = vld [vmem:[%s230] sm:$0x1]
        %v282 = vld [vmem:[%s0] sm:$0xff]
        %v283 = vld [vmem:[%s0 + $0x8] sm:$0x11]
        %v285 = vperm.slane %v281, 0
        %288 = vset.pattern.permute.xlu0 0
        %289 = vperm.xlu0 %288, %v249
        %v290 = vpop.permute.xlu0 %289
        %293 = vset.pattern.permute.xlu0 0
        %294 = vperm.xlu0 %293, %v250
        %v295 = vpop.permute.xlu0 %294
        %298 = vset.pattern.permute.xlu0 0
        %299 = vperm.xlu0 %298, %v251
        %v300 = vpop.permute.xlu0 %299
        %303 = vset.pattern.permute.xlu0 0
        %304 = vperm.xlu0 %303, %v252
        %v305 = vpop.permute.xlu0 %304
        %308 = vset.pattern.permute.xlu0 0
        %309 = vperm.xlu0 %308, %v253
        %v310 = vpop.permute.xlu0 %309
        %313 = vset.pattern.permute.xlu0 0
        %314 = vperm.xlu0 %313, %v254
        %v315 = vpop.permute.xlu0 %314
        %318 = vset.pattern.permute.xlu0 0
        %319 = vperm.xlu0 %318, %v255
        %v320 = vpop.permute.xlu0 %319
        %323 = vset.pattern.permute.xlu0 0
        %324 = vperm.xlu0 %323, %v256
        %v325 = vpop.permute.xlu0 %324
        %328 = vset.pattern.permute.xlu0 0
        %329 = vperm.xlu0 %328, %v257
        %v330 = vpop.permute.xlu0 %329
        %333 = vset.pattern.permute.xlu0 0
        %334 = vperm.xlu0 %333, %v258
        %v335 = vpop.permute.xlu0 %334
        %338 = vset.pattern.permute.xlu0 0
        %339 = vperm.xlu0 %338, %v259
        %v340 = vpop.permute.xlu0 %339
        %343 = vset.pattern.permute.xlu0 0
        %344 = vperm.xlu0 %343, %v260
        %v345 = vpop.permute.xlu0 %344
        %348 = vset.pattern.permute.xlu0 0
        %349 = vperm.xlu0 %348, %v261
        %v350 = vpop.permute.xlu0 %349
        %353 = vset.pattern.permute.xlu0 0
        %354 = vperm.xlu0 %353, %v262
        %v355 = vpop.permute.xlu0 %354
        %358 = vset.pattern.permute.xlu0 0
        %359 = vperm.xlu0 %358, %v263
        %v360 = vpop.permute.xlu0 %359
        %363 = vset.pattern.permute.xlu0 0
        %364 = vperm.xlu0 %363, %v264
        %v365 = vpop.permute.xlu0 %364
        %368 = vset.pattern.permute.xlu0 0
        %369 = vperm.xlu0 %368, %v265
        %v370 = vpop.permute.xlu0 %369
        %373 = vset.pattern.permute.xlu0 0
        %374 = vperm.xlu0 %373, %v266
        %v375 = vpop.permute.xlu0 %374
        %378 = vset.pattern.permute.xlu0 0
        %379 = vperm.xlu0 %378, %v267
        %v380 = vpop.permute.xlu0 %379
        %383 = vset.pattern.permute.xlu0 0
        %384 = vperm.xlu0 %383, %v268
        %v385 = vpop.permute.xlu0 %384
        %388 = vset.pattern.permute.xlu0 0
        %389 = vperm.xlu0 %388, %v269
        %v390 = vpop.permute.xlu0 %389
        %393 = vset.pattern.permute.xlu0 0
        %394 = vperm.xlu0 %393, %v270
        %v395 = vpop.permute.xlu0 %394
        %398 = vset.pattern.permute.xlu0 0
        %399 = vperm.xlu0 %398, %v271
        %v400 = vpop.permute.xlu0 %399
        %403 = vset.pattern.permute.xlu0 0
        %404 = vperm.xlu0 %403, %v272
        %v405 = vpop.permute.xlu0 %404
        %408 = vset.pattern.permute.xlu0 0
        %409 = vperm.xlu0 %408, %v273
        %v410 = vpop.permute.xlu0 %409
        %413 = vset.pattern.permute.xlu0 0
        %414 = vperm.xlu0 %413, %v274
        %v415 = vpop.permute.xlu0 %414
        %418 = vset.pattern.permute.xlu0 0
        %419 = vperm.xlu0 %418, %v275
        %v420 = vpop.permute.xlu0 %419
        %423 = vset.pattern.permute.xlu0 0
        %424 = vperm.xlu0 %423, %v276
        %v425 = vpop.permute.xlu0 %424
        %428 = vset.pattern.permute.xlu0 0
        %429 = vperm.xlu0 %428, %v277
        %v430 = vpop.permute.xlu0 %429
        %433 = vset.pattern.permute.xlu0 0
        %434 = vperm.xlu0 %433, %v278
        %v435 = vpop.permute.xlu0 %434
        %438 = vset.pattern.permute.xlu0 0
        %439 = vperm.xlu0 %438, %v279
        %v440 = vpop.permute.xlu0 %439
        %443 = vset.pattern.permute.xlu0 0
        %444 = vperm.xlu0 %443, %v280
        %v445 = vpop.permute.xlu0 %444
        %v447 = vadd.f32 %v285, %v290
        %v448 = vadd.f32 %v285, %v295
        %v449 = vadd.f32 %v285, %v300
        %v450 = vadd.f32 %v285, %v305
        %v451 = vadd.f32 %v285, %v310
        %v452 = vadd.f32 %v285, %v315
        %v453 = vadd.f32 %v285, %v320
        %v454 = vadd.f32 %v285, %v325
        %v455 = vadd.f32 %v285, %v330
        %v456 = vadd.f32 %v285, %v335
        %v457 = vadd.f32 %v285, %v340
        %v458 = vadd.f32 %v285, %v345
        %v459 = vadd.f32 %v285, %v350
        %v460 = vadd.f32 %v285, %v355
        %v461 = vadd.f32 %v285, %v360
        %v462 = vadd.f32 %v285, %v365
        %v463 = vadd.f32 %v285, %v370
        %v464 = vadd.f32 %v285, %v375
        %v465 = vadd.f32 %v285, %v380
        %v466 = vadd.f32 %v285, %v385
        %v467 = vadd.f32 %v285, %v390
        %v468 = vadd.f32 %v285, %v395
        %v469 = vadd.f32 %v285, %v400
        %v470 = vadd.f32 %v285, %v405
        %v471 = vadd.f32 %v285, %v410
        %v472 = vadd.f32 %v285, %v415
        %v473 = vadd.f32 %v285, %v420
        %v474 = vadd.f32 %v285, %v425
        %v475 = vadd.f32 %v285, %v430
        %v476 = vadd.f32 %v285, %v435
        %v477 = vadd.f32 %v285, %v440
        %v478 = vadd.f32 %v285, %v445
        %v479 = vmul.f32 %v447, 0.2
        %v480 = vmul.f32 %v448, 0.2
        %v481 = vmul.f32 %v449, 0.2
        %v482 = vmul.f32 %v450, 0.2
        %v483 = vmul.f32 %v451, 0.2
        %v484 = vmul.f32 %v452, 0.2
        %v485 = vmul.f32 %v453, 0.2
        %v486 = vmul.f32 %v454, 0.2
        %v487 = vmul.f32 %v455, 0.2
        %v488 = vmul.f32 %v456, 0.2
        %v489 = vmul.f32 %v457, 0.2
        %v490 = vmul.f32 %v458, 0.2
        %v491 = vmul.f32 %v459, 0.2
        %v492 = vmul.f32 %v460, 0.2
        %v493 = vmul.f32 %v461, 0.2
        %v494 = vmul.f32 %v462, 0.2
        %v495 = vmul.f32 %v463, 0.2
        %v496 = vmul.f32 %v464, 0.2
        %v497 = vmul.f32 %v465, 0.2
        %v498 = vmul.f32 %v466, 0.2
        %v499 = vmul.f32 %v467, 0.2
        %v500 = vmul.f32 %v468, 0.2
        %v501 = vmul.f32 %v469, 0.2
        %v502 = vmul.f32 %v470, 0.2
        %v503 = vmul.f32 %v471, 0.2
        %v504 = vmul.f32 %v472, 0.2
        %v505 = vmul.f32 %v473, 0.2
        %v506 = vmul.f32 %v474, 0.2
        %v507 = vmul.f32 %v475, 0.2
        %v508 = vmul.f32 %v476, 0.2
        %v509 = vmul.f32 %v477, 0.2
        %v510 = vmul.f32 %v478, 0.2
        %v511 = vmax.f32 %v447, %v479
        %v512 = vmax.f32 %v448, %v480
        %v513 = vmax.f32 %v449, %v481
        %v514 = vmax.f32 %v450, %v482
        %v515 = vmax.f32 %v451, %v483
        %v516 = vmax.f32 %v452, %v484
        %v517 = vmax.f32 %v453, %v485
        %v518 = vmax.f32 %v454, %v486
        %v519 = vmax.f32 %v455, %v487
        %v520 = vmax.f32 %v456, %v488
        %v521 = vmax.f32 %v457, %v489
        %v522 = vmax.f32 %v458, %v490
        %v523 = vmax.f32 %v459, %v491
        %v524 = vmax.f32 %v460, %v492
        %v525 = vmax.f32 %v461, %v493
        %v526 = vmax.f32 %v462, %v494
        %v527 = vmax.f32 %v463, %v495
        %v528 = vmax.f32 %v464, %v496
        %v529 = vmax.f32 %v465, %v497
        %v530 = vmax.f32 %v466, %v498
        %v531 = vmax.f32 %v467, %v499
        %v532 = vmax.f32 %v468, %v500
        %v533 = vmax.f32 %v469, %v501
        %v534 = vmax.f32 %v470, %v502
        %v535 = vmax.f32 %v471, %v503
        %v536 = vmax.f32 %v472, %v504
        %v537 = vmax.f32 %v473, %v505
        %v538 = vmax.f32 %v474, %v506
        %v539 = vmax.f32 %v475, %v507
        %v540 = vmax.f32 %v476, %v508
        %v541 = vmax.f32 %v477, %v509
        %v542 = vmax.f32 %v478, %v510
        %v543 = vsel %vm241, 16843009, 0
        %v544 = vsel %vm242, 16843009, 0
        %v545 = vsel %vm243, 16843009, 0
        %v546 = vsel %vm244, 16843009, 0
        %v547 = vsel %vm245, 16843009, 0
        %v548 = vsel %vm246, 16843009, 0
        %v549 = vsel %vm247, 16843009, 0
        %v550 = vsel %vm248, 16843009, 0
        %v551 = vunpack.c.0.s8 %v543
        %v552 = vunpack.c.1.s8 %v543
        %v553 = vunpack.c.2.s8 %v543
        %v554 = vunpack.c.3.s8 %v543
        %v555 = vunpack.c.0.s8 %v544
        %v556 = vunpack.c.1.s8 %v544
        %v557 = vunpack.c.2.s8 %v544
        %v558 = vunpack.c.3.s8 %v544
        %v559 = vunpack.c.0.s8 %v545
        %v560 = vunpack.c.1.s8 %v545
        %v561 = vunpack.c.2.s8 %v545
        %v562 = vunpack.c.3.s8 %v545
        %v563 = vunpack.c.0.s8 %v546
        %v564 = vunpack.c.1.s8 %v546
        %v565 = vunpack.c.2.s8 %v546
        %v566 = vunpack.c.3.s8 %v546
        %v567 = vunpack.c.0.s8 %v547
        %v568 = vunpack.c.1.s8 %v547
        %v569 = vunpack.c.2.s8 %v547
        %v570 = vunpack.c.3.s8 %v547
        %v571 = vunpack.c.0.s8 %v548
        %v572 = vunpack.c.1.s8 %v548
        %v573 = vunpack.c.2.s8 %v548
        %v574 = vunpack.c.3.s8 %v548
        %v575 = vunpack.c.0.s8 %v549
        %v576 = vunpack.c.1.s8 %v549
        %v577 = vunpack.c.2.s8 %v549
        %v578 = vunpack.c.3.s8 %v549
        %v579 = vunpack.c.0.s8 %v550
        %v580 = vunpack.c.1.s8 %v550
        %v581 = vunpack.c.2.s8 %v550
        %v582 = vunpack.c.3.s8 %v550
        %v583 = vpack.c.b16 %v551, %v551
        %v584 = vpack.c.b8 %v583, %v583
        %v585 = vpack.c.b16 %v552, %v552
        %v586 = vpack.c.b8 %v585, %v585
        %v587 = vpack.c.b16 %v553, %v553
        %v588 = vpack.c.b8 %v587, %v587
        %v589 = vpack.c.b16 %v554, %v554
        %v590 = vpack.c.b8 %v589, %v589
        %v591 = vpack.c.b16 %v555, %v555
        %v592 = vpack.c.b8 %v591, %v591
        %v593 = vpack.c.b16 %v556, %v556
        %v594 = vpack.c.b8 %v593, %v593
        %v595 = vpack.c.b16 %v557, %v557
        %v596 = vpack.c.b8 %v595, %v595
        %v597 = vpack.c.b16 %v558, %v558
        %v598 = vpack.c.b8 %v597, %v597
        %v599 = vpack.c.b16 %v559, %v559
        %v600 = vpack.c.b8 %v599, %v599
        %v601 = vpack.c.b16 %v560, %v560
        %v602 = vpack.c.b8 %v601, %v601
        %v603 = vpack.c.b16 %v561, %v561
        %v604 = vpack.c.b8 %v603, %v603
        %v605 = vpack.c.b16 %v562, %v562
        %v606 = vpack.c.b8 %v605, %v605
        %v607 = vpack.c.b16 %v563, %v563
        %v608 = vpack.c.b8 %v607, %v607
        %v609 = vpack.c.b16 %v564, %v564
        %v610 = vpack.c.b8 %v609, %v609
        %v611 = vpack.c.b16 %v565, %v565
        %v612 = vpack.c.b8 %v611, %v611
        %v613 = vpack.c.b16 %v566, %v566
        %v614 = vpack.c.b8 %v613, %v613
        %v615 = vpack.c.b16 %v567, %v567
        %v616 = vpack.c.b8 %v615, %v615
        %v617 = vpack.c.b16 %v568, %v568
        %v618 = vpack.c.b8 %v617, %v617
        %v619 = vpack.c.b16 %v569, %v569
        %v620 = vpack.c.b8 %v619, %v619
        %v621 = vpack.c.b16 %v570, %v570
        %v622 = vpack.c.b8 %v621, %v621
        %v623 = vpack.c.b16 %v571, %v571
        %v624 = vpack.c.b8 %v623, %v623
        %v625 = vpack.c.b16 %v572, %v572
        %v626 = vpack.c.b8 %v625, %v625
        %v627 = vpack.c.b16 %v573, %v573
        %v628 = vpack.c.b8 %v627, %v627
        %v629 = vpack.c.b16 %v574, %v574
        %v630 = vpack.c.b8 %v629, %v629
        %v631 = vpack.c.b16 %v575, %v575
        %v632 = vpack.c.b8 %v631, %v631
        %v633 = vpack.c.b16 %v576, %v576
        %v634 = vpack.c.b8 %v633, %v633
        %v635 = vpack.c.b16 %v577, %v577
        %v636 = vpack.c.b8 %v635, %v635
        %v637 = vpack.c.b16 %v578, %v578
        %v638 = vpack.c.b8 %v637, %v637
        %v639 = vpack.c.b16 %v579, %v579
        %v640 = vpack.c.b8 %v639, %v639
        %v641 = vpack.c.b16 %v580, %v580
        %v642 = vpack.c.b8 %v641, %v641
        %v643 = vpack.c.b16 %v581, %v581
        %v644 = vpack.c.b8 %v643, %v643
        %v645 = vpack.c.b16 %v582, %v582
        %v646 = vpack.c.b8 %v645, %v645
        %vm647 = vnez %v584
        %vm648 = vnez %v586
        %vm649 = vnez %v588
        %vm650 = vnez %v590
        %vm651 = vnez %v592
        %vm652 = vnez %v594
        %vm653 = vnez %v596
        %vm654 = vnez %v598
        %vm655 = vnez %v600
        %vm656 = vnez %v602
        %vm657 = vnez %v604
        %vm658 = vnez %v606
        %vm659 = vnez %v608
        %vm660 = vnez %v610
        %vm661 = vnez %v612
        %vm662 = vnez %v614
        %vm663 = vnez %v616
        %vm664 = vnez %v618
        %vm665 = vnez %v620
        %vm666 = vnez %v622
        %vm667 = vnez %v624
        %vm668 = vnez %v626
        %vm669 = vnez %v628
        %vm670 = vnez %v630
        %vm671 = vnez %v632
        %vm672 = vnez %v634
        %vm673 = vnez %v636
        %vm674 = vnez %v638
        %vm675 = vnez %v640
        %vm676 = vnez %v642
        %vm677 = vnez %v644
        %vm678 = vnez %v646
        %v679 = vsel %vm647, 16843009, 0
        %v680 = vsel %vm648, 16843009, 0
        %v681 = vsel %vm649, 16843009, 0
        %v682 = vsel %vm650, 16843009, 0
        %v683 = vsel %vm651, 16843009, 0
        %v684 = vsel %vm652, 16843009, 0
        %v685 = vsel %vm653, 16843009, 0
        %v686 = vsel %vm654, 16843009, 0
        %v687 = vsel %vm655, 16843009, 0
        %v688 = vsel %vm656, 16843009, 0
        %v689 = vsel %vm657, 16843009, 0
        %v690 = vsel %vm658, 16843009, 0
        %v691 = vsel %vm659, 16843009, 0
        %v692 = vsel %vm660, 16843009, 0
        %v693 = vsel %vm661, 16843009, 0
        %v694 = vsel %vm662, 16843009, 0
        %v695 = vsel %vm663, 16843009, 0
        %v696 = vsel %vm664, 16843009, 0
        %v697 = vsel %vm665, 16843009, 0
        %v698 = vsel %vm666, 16843009, 0
        %v699 = vsel %vm667, 16843009, 0
        %v700 = vsel %vm668, 16843009, 0
        %v701 = vsel %vm669, 16843009, 0
        %v702 = vsel %vm670, 16843009, 0
        %v703 = vsel %vm671, 16843009, 0
        %v704 = vsel %vm672, 16843009, 0
        %v705 = vsel %vm673, 16843009, 0
        %v706 = vsel %vm674, 16843009, 0
        %v707 = vsel %vm675, 16843009, 0
        %v708 = vsel %vm676, 16843009, 0
        %v709 = vsel %vm677, 16843009, 0
        %v710 = vsel %vm678, 16843009, 0
        %v711 = vunpack.c.0.s8 %v679
        %v712 = vunpack.c.0.s8 %v680
        %v713 = vunpack.c.0.s8 %v681
        %v714 = vunpack.c.0.s8 %v682
        %v715 = vunpack.c.0.s8 %v683
        %v716 = vunpack.c.0.s8 %v684
        %v717 = vunpack.c.0.s8 %v685
        %v718 = vunpack.c.0.s8 %v686
        %v719 = vunpack.c.0.s8 %v687
        %v720 = vunpack.c.0.s8 %v688
        %v721 = vunpack.c.0.s8 %v689
        %v722 = vunpack.c.0.s8 %v690
        %v723 = vunpack.c.0.s8 %v691
        %v724 = vunpack.c.0.s8 %v692
        %v725 = vunpack.c.0.s8 %v693
        %v726 = vunpack.c.0.s8 %v694
        %v727 = vunpack.c.0.s8 %v695
        %v728 = vunpack.c.0.s8 %v696
        %v729 = vunpack.c.0.s8 %v697
        %v730 = vunpack.c.0.s8 %v698
        %v731 = vunpack.c.0.s8 %v699
        %v732 = vunpack.c.0.s8 %v700
        %v733 = vunpack.c.0.s8 %v701
        %v734 = vunpack.c.0.s8 %v702
        %v735 = vunpack.c.0.s8 %v703
        %v736 = vunpack.c.0.s8 %v704
        %v737 = vunpack.c.0.s8 %v705
        %v738 = vunpack.c.0.s8 %v706
        %v739 = vunpack.c.0.s8 %v707
        %v740 = vunpack.c.0.s8 %v708
        %v741 = vunpack.c.0.s8 %v709
        %v742 = vunpack.c.0.s8 %v710
        %vm743 = vcmp.ne.s32.totalorder %v711, 0
        %vm744 = vcmp.ne.s32.totalorder %v712, 0
        %vm745 = vcmp.ne.s32.totalorder %v713, 0
        %vm746 = vcmp.ne.s32.totalorder %v714, 0
        %vm747 = vcmp.ne.s32.totalorder %v715, 0
        %vm748 = vcmp.ne.s32.totalorder %v716, 0
        %vm749 = vcmp.ne.s32.totalorder %v717, 0
        %vm750 = vcmp.ne.s32.totalorder %v718, 0
        %vm751 = vcmp.ne.s32.totalorder %v719, 0
        %vm752 = vcmp.ne.s32.totalorder %v720, 0
        %vm753 = vcmp.ne.s32.totalorder %v721, 0
        %vm754 = vcmp.ne.s32.totalorder %v722, 0
        %vm755 = vcmp.ne.s32.totalorder %v723, 0
        %vm756 = vcmp.ne.s32.totalorder %v724, 0
        %vm757 = vcmp.ne.s32.totalorder %v725, 0
        %vm758 = vcmp.ne.s32.totalorder %v726, 0
        %vm759 = vcmp.ne.s32.totalorder %v727, 0
        %vm760 = vcmp.ne.s32.totalorder %v728, 0
        %vm761 = vcmp.ne.s32.totalorder %v729, 0
        %vm762 = vcmp.ne.s32.totalorder %v730, 0
        %vm763 = vcmp.ne.s32.totalorder %v731, 0
        %vm764 = vcmp.ne.s32.totalorder %v732, 0
        %vm765 = vcmp.ne.s32.totalorder %v733, 0
        %vm766 = vcmp.ne.s32.totalorder %v734, 0
        %vm767 = vcmp.ne.s32.totalorder %v735, 0
        %vm768 = vcmp.ne.s32.totalorder %v736, 0
        %vm769 = vcmp.ne.s32.totalorder %v737, 0
        %vm770 = vcmp.ne.s32.totalorder %v738, 0
        %vm771 = vcmp.ne.s32.totalorder %v739, 0
        %vm772 = vcmp.ne.s32.totalorder %v740, 0
        %vm773 = vcmp.ne.s32.totalorder %v741, 0
        %vm774 = vcmp.ne.s32.totalorder %v742, 0
        %v775 = vsel %vm743, %v511, -1e+30
        %v776 = vsel %vm744, %v512, -1e+30
        %v777 = vsel %vm745, %v513, -1e+30
        %v778 = vsel %vm746, %v514, -1e+30
        %v779 = vsel %vm747, %v515, -1e+30
        %v780 = vsel %vm748, %v516, -1e+30
        %v781 = vsel %vm749, %v517, -1e+30
        %v782 = vsel %vm750, %v518, -1e+30
        %v783 = vsel %vm751, %v519, -1e+30
        %v784 = vsel %vm752, %v520, -1e+30
        %v785 = vsel %vm753, %v521, -1e+30
        %v786 = vsel %vm754, %v522, -1e+30
        %v787 = vsel %vm755, %v523, -1e+30
        %v788 = vsel %vm756, %v524, -1e+30
        %v789 = vsel %vm757, %v525, -1e+30
        %v790 = vsel %vm758, %v526, -1e+30
        %v791 = vsel %vm759, %v527, -1e+30
        %v792 = vsel %vm760, %v528, -1e+30
        %v793 = vsel %vm761, %v529, -1e+30
        %v794 = vsel %vm762, %v530, -1e+30
        %v795 = vsel %vm763, %v531, -1e+30
        %v796 = vsel %vm764, %v532, -1e+30
        %v797 = vsel %vm765, %v533, -1e+30
        %v798 = vsel %vm766, %v534, -1e+30
        %v799 = vsel %vm767, %v535, -1e+30
        %v800 = vsel %vm768, %v536, -1e+30
        %v801 = vsel %vm769, %v537, -1e+30
        %v802 = vsel %vm770, %v538, -1e+30
        %v803 = vsel %vm771, %v539, -1e+30
        %v804 = vsel %vm772, %v540, -1e+30
        %v805 = vsel %vm773, %v541, -1e+30
        %v806 = vsel %vm774, %v542, -1e+30
        %v807 = vmax.f32 %v775, %v779
        %v808 = vmax.f32 %v776, %v780
        %v809 = vmax.f32 %v777, %v781
        %v810 = vmax.f32 %v778, %v782
        %v811 = vmax.f32 %v807, %v783
        %v812 = vmax.f32 %v808, %v784
        %v813 = vmax.f32 %v809, %v785
        %v814 = vmax.f32 %v810, %v786
        %v815 = vmax.f32 %v811, %v787
        %v816 = vmax.f32 %v812, %v788
        %v817 = vmax.f32 %v813, %v789
        %v818 = vmax.f32 %v814, %v790
        %v819 = vmax.f32 %v815, %v791
        %v820 = vmax.f32 %v816, %v792
        %v821 = vmax.f32 %v817, %v793
        %v822 = vmax.f32 %v818, %v794
        %v823 = vmax.f32 %v819, %v795
        %v824 = vmax.f32 %v820, %v796
        %v825 = vmax.f32 %v821, %v797
        %v826 = vmax.f32 %v822, %v798
        %v827 = vmax.f32 %v823, %v799
        %v828 = vmax.f32 %v824, %v800
        %v829 = vmax.f32 %v825, %v801
        %v830 = vmax.f32 %v826, %v802
        %v831 = vmax.f32 %v827, %v803
        %v832 = vmax.f32 %v828, %v804
        %v833 = vmax.f32 %v829, %v805
        %v834 = vmax.f32 %v830, %v806
        %v835 = vmax.f32 %v831, %v832
        %v836 = vmax.f32 %v833, %v834
        %v837 = vmax.f32 %v835, %v836
        %v838 = vrot.slane %v837, 4
        %v839 = vmax.f32 %v837, %v838
        %v840 = vrot.slane %v839, 2
        %v841 = vmax.f32 %v839, %v840
        %v842 = vrot.slane %v841, 1
        %v843 = vmax.f32 %v841, %v842
        %v844 = vsub.f32 %v775, %v843
        %v845 = vsub.f32 %v776, %v843
        %v846 = vsub.f32 %v777, %v843
        %v847 = vsub.f32 %v778, %v843
        %v848 = vsub.f32 %v779, %v843
        %v849 = vsub.f32 %v780, %v843
        %v850 = vsub.f32 %v781, %v843
        %v851 = vsub.f32 %v782, %v843
        %v852 = vsub.f32 %v783, %v843
        %v853 = vsub.f32 %v784, %v843
        %v854 = vsub.f32 %v785, %v843
        %v855 = vsub.f32 %v786, %v843
        %v856 = vsub.f32 %v787, %v843
        %v857 = vsub.f32 %v788, %v843
        %v858 = vsub.f32 %v789, %v843
        %v859 = vsub.f32 %v790, %v843
        %v860 = vsub.f32 %v791, %v843
        %v861 = vsub.f32 %v792, %v843
        %v862 = vsub.f32 %v793, %v843
        %v863 = vsub.f32 %v794, %v843
        %v864 = vsub.f32 %v795, %v843
        %v865 = vsub.f32 %v796, %v843
        %v866 = vsub.f32 %v797, %v843
        %v867 = vsub.f32 %v798, %v843
        %v868 = vsub.f32 %v799, %v843
        %v869 = vsub.f32 %v800, %v843
        %v870 = vsub.f32 %v801, %v843
        %v871 = vsub.f32 %v802, %v843
        %v872 = vsub.f32 %v803, %v843
        %v873 = vsub.f32 %v804, %v843
        %v874 = vsub.f32 %v805, %v843
        %v875 = vsub.f32 %v806, %v843
        %v876 = vmul.f32 %v844, 1.442695
        %v877 = vpow.pop %v876
        %v878 = vmul.f32 %v845, 1.442695
        %v879 = vpow.pop %v878
        %v880 = vmul.f32 %v846, 1.442695
        %v881 = vpow.pop %v880
        %v882 = vmul.f32 %v847, 1.442695
        %v883 = vpow.pop %v882
        %v884 = vmul.f32 %v848, 1.442695
        %v885 = vpow.pop %v884
        %v886 = vmul.f32 %v849, 1.442695
        %v887 = vpow.pop %v886
        %v888 = vmul.f32 %v850, 1.442695
        %v889 = vpow.pop %v888
        %v890 = vmul.f32 %v851, 1.442695
        %v891 = vpow.pop %v890
        %v892 = vmul.f32 %v852, 1.442695
        %v893 = vpow.pop %v892
        %v894 = vmul.f32 %v853, 1.442695
        %v895 = vpow.pop %v894
        %v896 = vmul.f32 %v854, 1.442695
        %v897 = vpow.pop %v896
        %v898 = vmul.f32 %v855, 1.442695
        %v899 = vpow.pop %v898
        %v900 = vmul.f32 %v856, 1.442695
        %v901 = vpow.pop %v900
        %v902 = vmul.f32 %v857, 1.442695
        %v903 = vpow.pop %v902
        %v904 = vmul.f32 %v858, 1.442695
        %v905 = vpow.pop %v904
        %v906 = vmul.f32 %v859, 1.442695
        %v907 = vpow.pop %v906
        %v908 = vmul.f32 %v860, 1.442695
        %v909 = vpow.pop %v908
        %v910 = vmul.f32 %v861, 1.442695
        %v911 = vpow.pop %v910
        %v912 = vmul.f32 %v862, 1.442695
        %v913 = vpow.pop %v912
        %v914 = vmul.f32 %v863, 1.442695
        %v915 = vpow.pop %v914
        %v916 = vmul.f32 %v864, 1.442695
        %v917 = vpow.pop %v916
        %v918 = vmul.f32 %v865, 1.442695
        %v919 = vpow.pop %v918
        %v920 = vmul.f32 %v866, 1.442695
        %v921 = vpow.pop %v920
        %v922 = vmul.f32 %v867, 1.442695
        %v923 = vpow.pop %v922
        %v924 = vmul.f32 %v868, 1.442695
        %v925 = vpow.pop %v924
        %v926 = vmul.f32 %v869, 1.442695
        %v927 = vpow.pop %v926
        %v928 = vmul.f32 %v870, 1.442695
        %v929 = vpow.pop %v928
        %v930 = vmul.f32 %v871, 1.442695
        %v931 = vpow.pop %v930
        %v932 = vmul.f32 %v872, 1.442695
        %v933 = vpow.pop %v932
        %v934 = vmul.f32 %v873, 1.442695
        %v935 = vpow.pop %v934
        %v936 = vmul.f32 %v874, 1.442695
        %v937 = vpow.pop %v936
        %v938 = vmul.f32 %v875, 1.442695
        %v939 = vpow.pop %v938
        %v940 = vpack.c.bf16 %v879, %v877
        %v941 = vpack.c.bf16 %v883, %v881
        %v942 = vpack.c.bf16 %v887, %v885
        %v943 = vpack.c.bf16 %v891, %v889
        %v944 = vpack.c.bf16 %v895, %v893
        %v945 = vpack.c.bf16 %v899, %v897
        %v946 = vpack.c.bf16 %v903, %v901
        %v947 = vpack.c.bf16 %v907, %v905
        %v948 = vpack.c.bf16 %v911, %v909
        %v949 = vpack.c.bf16 %v915, %v913
        %v950 = vpack.c.bf16 %v919, %v917
        %v951 = vpack.c.bf16 %v923, %v921
        %v952 = vpack.c.bf16 %v927, %v925
        %v953 = vpack.c.bf16 %v931, %v929
        %v954 = vpack.c.bf16 %v935, %v933
        %v955 = vpack.c.bf16 %v939, %v937
        %v958 = vunpack.c.l.b16 %v282
        %v959 = vunpack.c.h.b16 %v282
        %v960 = vunpack.c.l.b16 %v283
        %v961 = vunpack.c.h.b16 %v283
        %v962 = vpack.c.b16 %v960, %v958
        %v963 = vpack.c.b16 %v961, %v959
        %966 = vmatpush.bf16.msra.mxu0 %v947
        %967 = vmatpush.bf16.msra.mxu0 %v946
        %968 = vmatpush.bf16.msra.mxu0 %v945
        %969 = vmatpush.bf16.msra.mxu0 %v944
        %970 = vmatpush.bf16.msra.mxu0 %v943
        %971 = vmatpush.bf16.msra.mxu0 %v942
        %972 = vmatpush.bf16.msra.mxu0 %v941
        %973 = vmatpush.bf16.msra.mxu0 %v940
        %974 = vmatmul.bf16.gmra.mxu0 %v962
        %v975 = vpop.f32.mrf.mxu0
        %v976 = vadd.f32 0.0, %v975
        %v977 = vpop.f32.mrf.mxu0
        %v978 = vadd.f32 0.0, %v977
        %979 = vdwg.mxu0
        %980 = vmatpush.bf16.msra.mxu0 %v955
        %981 = vmatpush.bf16.msra.mxu0 %v954
        %982 = vmatpush.bf16.msra.mxu0 %v953
        %983 = vmatpush.bf16.msra.mxu0 %v952
        %984 = vmatpush.bf16.msra.mxu0 %v951
        %985 = vmatpush.bf16.msra.mxu0 %v950
        %986 = vmatpush.bf16.msra.mxu0 %v949
        %987 = vmatpush.bf16.msra.mxu0 %v948
        %988 = vmatmul.bf16.gmra.mxu0 %v963
        %v989 = vpop.f32.mrf.mxu0
        %v990 = vadd.f32 %v976, %v989
        %v991 = vpop.f32.mrf.mxu0
        %v992 = vadd.f32 %v978, %v991
        %993 = vdwg.mxu0
        %v994 = vrcp.pop %v992
        %v995 = vperm.slane %v994, 0
        %v996 = vmul.f32 %v990, %v995
        %997 = vst [vmem:[%s227] sm:$0xff] %v996
        %s998 = sand.u32 %s123, 1
        %s999 = scalar_lea.sflag [#allocation4], %s998
        %s1000 = sand.u32 %s123, 1
        %s1001 = smul.addr %s1000, 8
        %s1002 = scalar_lea.vmem [#allocation5], %s1001
        // Predicated region
        $region41: #{gat2_forward.7} parent=35 // pred_check
          %p1003 = pneg %p133
        $region42: #{gat2_forward.7} parent=35 // pred_check_branch
          %1005 = sbr.rel (%p1003) target = $region44
        $region43: #{gat2_forward.7} parent=35 // pred_region
          %1007 = vsyncadd %s999, 0
          %s1008 = smul.addr %s21, 8
          %s1009 = scalar_lea.hbm %s4, %s1008
          %s1011 = sshll.u32 %s1002, 4
          %s1012 = int_to_ptr.vmem [resolvable:$true] %s1011
          %s1013 = sshll.u32 %s1009, 4
          %s1014 = int_to_ptr.hbm [resolvable:$true] %s1013
          %1016 = dma.vmem_to_hbm [thread:$0]  %s1012, 128, %s1014, %s999
        $region44: #{gat2_forward.7} parent=35 // pred_fallthru
          _
      $region36: #{gat2_forward.7} parent=5 // pred_fallthru
        _
      %p1017 = scmp.le.s32.totalorder 2, %s16
      // Predicated region
      $region45: #{gat2_forward.7} parent=5 // pred_check
        %p1018 = pneg %p1017
      $region46: #{gat2_forward.7} parent=5 // pred_check_branch
        %1020 = sbr.rel (%p1018) target = $region48
      $region47: #{gat2_forward.7} parent=5 // pred_region
        %s1021 = ssub.s32 %s16, 2
        // Predicated region
        $region49: #{gat2_forward.7} parent=47 // pred_check
          %p1022 = pneg %p139
        $region50: #{gat2_forward.7} parent=47 // pred_check_branch
          %1024 = sbr.rel (%p1022) target = $region52
        $region51: #{gat2_forward.7} parent=47 // pred_region
          %s1025 = sand.u32 %s124, 1
          %s1026 = scalar_lea.sflag [#allocation4], %s1025
          %s1027 = sand.u32 %s124, 1
          %s1028 = smul.addr %s1027, 8
          %s1029 = scalar_lea.vmem [#allocation5], %s1028
          %1031 = dma.done %s1026, 128
        $region52: #{gat2_forward.7} parent=47 // pred_fallthru
          _
      $region48: #{gat2_forward.7} parent=5 // pred_fallthru
        _
    $region6: #{gat2_forward.7} parent=1 // loop_footer
      %s20 = sadd.s32 1, %s16
    $region7: #{gat2_forward.7} parent=1 // loop_footer_branch
      %15 = sbr.rel target = $region3
    $region8: #{gat2_forward.7} parent=1 // loop_exit
      _
    %1032 = vsyncpa [#allocation3], 1
    %s1033 = scalar_lea.sflag [#allocation3], 1
    %1034 = vsyncpa %s1033, 1
    %1035 = vsyncpa [#allocation4], 1
    %s1036 = scalar_lea.sflag [#allocation4], 1
    %1037 = vsyncpa %s1036, 1

// kernel: gat2_forward.5
$region0: #{gat2_forward.5}
  #allocation0 [shape = 'u32[]', space=smem, size = 0x4, offset = 0x4, fixed_abs, tag = 'smem constant byte address 0x4 - core index']
  #allocation1 [shape = 'u32[72,128]{1,0:T(1,128)}', space=vmem, size = 0x9000, scoped, tag = 'internal scratch']
  %s0 = inlined_call_operand.vmem [shape: bf16[4,9,256], index: 0, kind: input, shape index: {}]
  %s1 = inlined_call_operand.vmem [shape: f32[256,4], index: 1, kind: input, shape index: {}]
  %s2 = inlined_call_operand.vmem [shape: f32[4,256], index: 2, kind: input, shape index: {}]
  %s3 = inlined_call_operand.hbm [shape: s8[256,256], index: 3, kind: input, shape index: {}]
  %s4 = inlined_call_operand.vmem [shape: bf16[32,256], index: 4, kind: output, shape index: {}]
  %s5 = sld [smem:[#allocation0]]
  $region90: #{gat2_forward.5} parent=0
    _
  %s7 = ssub.s32 1, %s5
  %s8 = scalar_select 0, %s7, %s5
  $region1: #{gat2_forward.5} parent=0
    #allocation2 [shape = 'u8[65536]{0}', space=vmem, size = 0x10000, scoped, tag = 'input window, operand 3']
    #allocation3 [shape = 's32[2]{0}', space=sflag, size = 0x8, scoped, tag = 'scoped memory for gat2_forward.5']
    #allocation4 [shape = 'u8[16384]{0}', space=vmem, size = 0x4000, scoped, tag = 'output window, operand 0']
    %9 = vsyncpa [#allocation3], 0
    %s10 = scalar_lea.sflag [#allocation3], 1
    %11 = vsyncpa %s10, 0
    loop: start=0, step=1, limit=4
    $region2: #{gat2_forward.5} parent=1 // loop_pre_header
      _
    $region3: #{gat2_forward.5} parent=1 // loop_header
      %s13 = sphi 0, %s17
      %p14 = scmp.ge.s32.totalorder %s13, 4
      %s21 = sphi 0, %s21
      %s23 = sphi 0, %s21
      %s24 = sphi 0, %s23
      %s38 = sphi 0, %s24
      %s42 = sphi 0, %s42
      %s44 = sphi 0, %s42
      %s45 = sphi 0, %s44
      %s59 = sphi 0, %s45
      %s65 = sphi 0, %s67
      %s68 = sphi 0, %s65
      %s69 = sphi 0, %s68
      %s85 = sphi 0, %s69
      %s91 = sphi 0, %s93
      %s94 = sphi 0, %s91
      %s95 = sphi 0, %s94
      %s111 = sphi 0, %s95
      %s117 = sphi 0, %s119
      %s120 = sphi 0, %s117
      %s121 = sphi 0, %s120
      %s137 = sphi 0, %s121
    $region4: #{gat2_forward.5} parent=1 // loop_header_branch
      %16 = sbr.rel (%p14) target = $region8
    $region5: #{gat2_forward.5} parent=1 // loop_body
      %s18 = ssub.s32 %s13, 1
      %s19 = ssub.s32 %s13, 2
      %s20 = sadd.s32 %s13, 1
      %s22 = sadd.s32 %s21, 1
      %p25 = scmp.eq.s32.totalorder %s13, 1
      %p26 = scmp.ne.s32.totalorder %s21, %s23
      %p27 = scmp.eq.s32.totalorder %s13, 0
      %p28 = por %p26, %p27
      %p29 = scmp.ne.s32.totalorder %s21, %s23
      %p30 = scmp.eq.s32.totalorder %s18, 1
      %p31 = por %p29, %p30
      %p32 = scmp.ne.s32.totalorder %s23, %s24
      %p33 = scmp.eq.s32.totalorder %s18, 0
      %p34 = por %p32, %p33
      %p35 = scmp.ne.s32.totalorder %s23, %s24
      %p36 = scmp.eq.s32.totalorder %s19, 1
      %p37 = por %p35, %p36
      %p39 = scmp.ne.s32.totalorder %s24, %s38
      %p40 = scmp.eq.s32.totalorder %s19, 0
      %p41 = por %p39, %p40
      %s43 = sadd.s32 %s42, 1
      %p46 = scmp.eq.s32.totalorder %s13, 1
      %p47 = scmp.ne.s32.totalorder %s42, %s44
      %p48 = scmp.eq.s32.totalorder %s13, 0
      %p49 = por %p47, %p48
      %p50 = scmp.ne.s32.totalorder %s42, %s44
      %p51 = scmp.eq.s32.totalorder %s18, 1
      %p52 = por %p50, %p51
      %p53 = scmp.ne.s32.totalorder %s44, %s45
      %p54 = scmp.eq.s32.totalorder %s18, 0
      %p55 = por %p53, %p54
      %p56 = scmp.ne.s32.totalorder %s44, %s45
      %p57 = scmp.eq.s32.totalorder %s19, 1
      %p58 = por %p56, %p57
      %p60 = scmp.ne.s32.totalorder %s45, %s59
      %p61 = scmp.eq.s32.totalorder %s19, 0
      %p62 = por %p60, %p61
      %s63 = ssub.s32 %s13, %s20
      %p64 = scmp.eq.s32.totalorder %s63, 0
      %s66 = sadd.s32 %s65, 1
      %s67 = scalar_select %p64, %s65, %s66
      %p70 = pneg %p64
      %p71 = scmp.eq.s32.totalorder %s13, 1
      %p72 = por %p70, %p71
      %p73 = scmp.ne.s32.totalorder %s65, %s68
      %p74 = scmp.eq.s32.totalorder %s13, 0
      %p75 = por %p73, %p74
      %p76 = scmp.ne.s32.totalorder %s65, %s68
      %p77 = scmp.eq.s32.totalorder %s18, 1
      %p78 = por %p76, %p77
      %p79 = scmp.ne.s32.totalorder %s68, %s69
      %p80 = scmp.eq.s32.totalorder %s18, 0
      %p81 = por %p79, %p80
      %p82 = scmp.ne.s32.totalorder %s68, %s69
      %p83 = scmp.eq.s32.totalorder %s19, 1
      %p84 = por %p82, %p83
      %p86 = scmp.ne.s32.totalorder %s69, %s85
      %p87 = scmp.eq.s32.totalorder %s19, 0
      %p88 = por %p86, %p87
      %s89 = ssub.s32 %s13, %s20
      %p90 = scmp.eq.s32.totalorder %s89, 0
      %s92 = sadd.s32 %s91, 1
      %s93 = scalar_select %p90, %s91, %s92
      %p96 = pneg %p90
      %p97 = scmp.eq.s32.totalorder %s13, 1
      %p98 = por %p96, %p97
      %p99 = scmp.ne.s32.totalorder %s91, %s94
      %p100 = scmp.eq.s32.totalorder %s13, 0
      %p101 = por %p99, %p100
      %p102 = scmp.ne.s32.totalorder %s91, %s94
      %p103 = scmp.eq.s32.totalorder %s18, 1
      %p104 = por %p102, %p103
      %p105 = scmp.ne.s32.totalorder %s94, %s95
      %p106 = scmp.eq.s32.totalorder %s18, 0
      %p107 = por %p105, %p106
      %p108 = scmp.ne.s32.totalorder %s94, %s95
      %p109 = scmp.eq.s32.totalorder %s19, 1
      %p110 = por %p108, %p109
      %p112 = scmp.ne.s32.totalorder %s95, %s111
      %p113 = scmp.eq.s32.totalorder %s19, 0
      %p114 = por %p112, %p113
      %s115 = ssub.s32 %s13, %s20
      %p116 = scmp.eq.s32.totalorder %s115, 0
      %s118 = sadd.s32 %s117, 1
      %s119 = scalar_select %p116, %s117, %s118
      %p122 = pneg %p116
      %p123 = scmp.eq.s32.totalorder %s13, 1
      %p124 = por %p122, %p123
      %p125 = scmp.ne.s32.totalorder %s117, %s120
      %p126 = scmp.eq.s32.totalorder %s13, 0
      %p127 = por %p125, %p126
      %p128 = scmp.ne.s32.totalorder %s117, %s120
      %p129 = scmp.eq.s32.totalorder %s18, 1
      %p130 = por %p128, %p129
      %p131 = scmp.ne.s32.totalorder %s120, %s121
      %p132 = scmp.eq.s32.totalorder %s18, 0
      %p133 = por %p131, %p132
      %p134 = scmp.ne.s32.totalorder %s120, %s121
      %p135 = scmp.eq.s32.totalorder %s19, 1
      %p136 = por %p134, %p135
      %p138 = scmp.ne.s32.totalorder %s121, %s137
      %p139 = scmp.eq.s32.totalorder %s19, 0
      %p140 = por %p138, %p139
      %p141 = scmp.le.s32.totalorder 1, %s13
      %p142 = scmp.lt.s32.totalorder %s13, 3
      %p143 = pnand %p141, %p142
      %p144 = pneg %p143
      // Predicated region
      $region9: #{gat2_forward.5} parent=5 // pred_check
        _
      $region10: #{gat2_forward.5} parent=5 // pred_check_branch
        %146 = sbr.rel (%p143) target = $region12
      $region11: #{gat2_forward.5} parent=5 // pred_region
        %s147 = ssub.s32 %s13, 1
        // Predicated region
        $region13: #{gat2_forward.5} parent=11 // pred_check
          %p148 = pneg %p34
        $region14: #{gat2_forward.5} parent=11 // pred_check_branch
          %150 = sbr.rel (%p148) target = $region16
        $region15: #{gat2_forward.5} parent=11 // pred_region
          _
        $region16: #{gat2_forward.5} parent=11 // pred_fallthru
          _
        // Predicated region
        $region17: #{gat2_forward.5} parent=11 // pred_check
          %p151 = pneg %p55
        $region18: #{gat2_forward.5} parent=11 // pred_check_branch
          %153 = sbr.rel (%p151) target = $region20
        $region19: #{gat2_forward.5} parent=11 // pred_region
          _
        $region20: #{gat2_forward.5} parent=11 // pred_fallthru
          _
      $region12: #{gat2_forward.5} parent=5 // pred_fallthru
        _
      %p154 = scmp.lt.s32.totalorder %s13, 2
      // Predicated region
      $region21: #{gat2_forward.5} parent=5 // pred_check
        %p155 = pneg %p154
      $region22: #{gat2_forward.5} parent=5 // pred_check_branch
        %157 = sbr.rel (%p155) target = $region24
      $region23: #{gat2_forward.5} parent=5 // pred_region
        // Predicated region
        $region25: #{gat2_forward.5} parent=23 // pred_check
          %p158 = pneg %p75
        $region26: #{gat2_forward.5} parent=23 // pred_check_branch
          %160 = sbr.rel (%p158) target = $region28
        $region27: #{gat2_forward.5} parent=23 // pred_region
          %p161 = scmp.lt.s32.totalorder %s13, 1
          %s162 = scalar_select %p161, %s13, 1
          %s163 = smul.addr %s162, 4
          %s164 = scalar_lea.vmem %s2, %s163
        $region28: #{gat2_forward.5} parent=23 // pred_fallthru
          _
        // Predicated region
        $region29: #{gat2_forward.5} parent=23 // pred_check
          %p165 = pneg %p101
        $region30: #{gat2_forward.5} parent=23 // pred_check_branch
          %167 = sbr.rel (%p165) target = $region32
        $region31: #{gat2_forward.5} parent=23 // pred_region
          %s168 = sand.u32 %s91, 1
          %s169 = scalar_lea.sflag [#allocation3], %s168
          %s170 = sand.u32 %s91, 1
          %s171 = smul.addr %s170, 64
          %s172 = scalar_lea.vmem [#allocation2], %s171
          %174 = vsyncadd %s169, 0
          %s175 = smul.addr %s13, 8
          %s176 = scalar_lea.hbm %s3, %s175
          %s177 = sshll.u32 %s176, 4
          %s178 = int_to_ptr.hbm [resolvable:$true] %s177
          %s179 = sshll.u32 %s172, 4
          %s180 = int_to_ptr.vmem [resolvable:$true] %s179
          %185 = dma.hbm_to_vmem [thread:$0]  %s178, 1024, %s180, %s169, 256, 128, 8
        $region32: #{gat2_forward.5} parent=23 // pred_fallthru
          _
      $region24: #{gat2_forward.5} parent=5 // pred_fallthru
        _
      %p186 = scmp.le.s32.totalorder 1, %s13
      %p187 = scmp.lt.s32.totalorder %s13, 3
      %p188 = pnand %p186, %p187
      %p189 = pneg %p188
      // Predicated region
      $region33: #{gat2_forward.5} parent=5 // pred_check
        _
      $region34: #{gat2_forward.5} parent=5 // pred_check_branch
        %191 = sbr.rel (%p188) target = $region36
      $region35: #{gat2_forward.5} parent=5 // pred_region
        %s192 = ssub.s32 %s13, 1
        %s193 = sand.u32 %s94, 1
        %s194 = scalar_lea.sflag [#allocation3], %s193
        %s195 = sand.u32 %s94, 1
        %s196 = smul.addr %s195, 64
        %s197 = scalar_lea.vmem [#allocation2], %s196
        // Predicated region
        $region37: #{gat2_forward.5} parent=35 // pred_check
          %p198 = pneg %p107
        $region38: #{gat2_forward.5} parent=35 // pred_check_branch
          %200 = sbr.rel (%p198) target = $region40
        $region39: #{gat2_forward.5} parent=35 // pred_region
          %202 = dma.done %s194, 1024
        $region40: #{gat2_forward.5} parent=35 // pred_fallthru
          _
        %p203 = pneg %p34
        %p204 = pneg %p31
        %p205 = pneg %p55
        %p206 = pneg %p52
        %p207 = scmp.lt.s32.totalorder %s18, 1
        %s208 = scalar_select %p207, %s18, 1
        %s209 = smul.addr %s208, 4
        %s210 = scalar_lea.vmem %s2, %s209
        %p211 = pneg %p81
        %p212 = pneg %p78
        %s213 = sand.u32 %s94, 1
        %s214 = scalar_lea.sflag [#allocation3], %s213
        %s215 = sand.u32 %s94, 1
        %s216 = smul.addr %s215, 64
        %s217 = scalar_lea.vmem [#allocation2], %s216
        %p218 = pneg %p107
        %p219 = pneg %p104
        %p220 = pneg %p133
        %p221 = pneg %p130
        %s222 = sand.u32 %s120, 1
        %s223 = sand.u32 %s120, 1
        %s224 = smul.addr %s223, 16
        %s225 = scalar_lea.vmem [#allocation4], %s224
        %p226 = scmp.lt.s32.totalorder %s18, 1
        %s227 = scalar_select %p226, %s18, 1
        %s228 = smul.addr %s227, 4
        %s229 = scalar_lea.vmem %s2, %s228
        %v232 = vld [vmem:[%s197] sm:$0xff]
        %v233 = vld [vmem:[%s197 + $0x8] sm:$0xff]
        %v234 = vld [vmem:[%s197 + $0x10] sm:$0xff]
        %v235 = vld [vmem:[%s197 + $0x18] sm:$0xff]
        %v236 = vld [vmem:[%s197 + $0x20] sm:$0xff]
        %v237 = vld [vmem:[%s197 + $0x28] sm:$0xff]
        %v238 = vld [vmem:[%s197 + $0x30] sm:$0xff]
        %v239 = vld [vmem:[%s197 + $0x38] sm:$0xff]
        %vm240 = vnez %v232
        %vm241 = vnez %v233
        %vm242 = vnez %v234
        %vm243 = vnez %v235
        %vm244 = vnez %v236
        %vm245 = vnez %v237
        %vm246 = vnez %v238
        %vm247 = vnez %v239
        %v248 = vld [vmem:[%s1] sm:$0xff]
        %v249 = vld [vmem:[%s1 + $0x8] sm:$0xff]
        %v250 = vld [vmem:[%s1 + $0x10] sm:$0xff]
        %v251 = vld [vmem:[%s1 + $0x18] sm:$0xff]
        %v252 = vld [vmem:[%s1 + $0x20] sm:$0xff]
        %v253 = vld [vmem:[%s1 + $0x28] sm:$0xff]
        %v254 = vld [vmem:[%s1 + $0x30] sm:$0xff]
        %v255 = vld [vmem:[%s1 + $0x38] sm:$0xff]
        %v256 = vld [vmem:[%s1 + $0x40] sm:$0xff]
        %v257 = vld [vmem:[%s1 + $0x48] sm:$0xff]
        %v258 = vld [vmem:[%s1 + $0x50] sm:$0xff]
        %v259 = vld [vmem:[%s1 + $0x58] sm:$0xff]
        %v260 = vld [vmem:[%s1 + $0x60] sm:$0xff]
        %v261 = vld [vmem:[%s1 + $0x68] sm:$0xff]
        %v262 = vld [vmem:[%s1 + $0x70] sm:$0xff]
        %v263 = vld [vmem:[%s1 + $0x78] sm:$0xff]
        %v264 = vld [vmem:[%s1 + $0x80] sm:$0xff]
        %v265 = vld [vmem:[%s1 + $0x88] sm:$0xff]
        %v266 = vld [vmem:[%s1 + $0x90] sm:$0xff]
        %v267 = vld [vmem:[%s1 + $0x98] sm:$0xff]
        %v268 = vld [vmem:[%s1 + $0xa0] sm:$0xff]
        %v269 = vld [vmem:[%s1 + $0xa8] sm:$0xff]
        %v270 = vld [vmem:[%s1 + $0xb0] sm:$0xff]
        %v271 = vld [vmem:[%s1 + $0xb8] sm:$0xff]
        %v272 = vld [vmem:[%s1 + $0xc0] sm:$0xff]
        %v273 = vld [vmem:[%s1 + $0xc8] sm:$0xff]
        %v274 = vld [vmem:[%s1 + $0xd0] sm:$0xff]
        %v275 = vld [vmem:[%s1 + $0xd8] sm:$0xff]
        %v276 = vld [vmem:[%s1 + $0xe0] sm:$0xff]
        %v277 = vld [vmem:[%s1 + $0xe8] sm:$0xff]
        %v278 = vld [vmem:[%s1 + $0xf0] sm:$0xff]
        %v279 = vld [vmem:[%s1 + $0xf8] sm:$0xff]
        %v280 = vld [vmem:[%s229] sm:$0xf]
        %v281 = vld [vmem:[%s0] sm:$0xff]
        %v282 = vld [vmem:[%s0 + $0x8] sm:$0x11]
        %v283 = vperm.slane %v280, 0
        %285 = vset.pattern.permute.xlu0 0
        %286 = vperm.xlu0 %285, %v248
        %v287 = vpop.permute.xlu0 %286
        %290 = vset.pattern.permute.xlu0 0
        %291 = vperm.xlu0 %290, %v249
        %v292 = vpop.permute.xlu0 %291
        %295 = vset.pattern.permute.xlu0 0
        %296 = vperm.xlu0 %295, %v250
        %v297 = vpop.permute.xlu0 %296
        %300 = vset.pattern.permute.xlu0 0
        %301 = vperm.xlu0 %300, %v251
        %v302 = vpop.permute.xlu0 %301
        %305 = vset.pattern.permute.xlu0 0
        %306 = vperm.xlu0 %305, %v252
        %v307 = vpop.permute.xlu0 %306
        %310 = vset.pattern.permute.xlu0 0
        %311 = vperm.xlu0 %310, %v253
        %v312 = vpop.permute.xlu0 %311
        %315 = vset.pattern.permute.xlu0 0
        %316 = vperm.xlu0 %315, %v254
        %v317 = vpop.permute.xlu0 %316
        %320 = vset.pattern.permute.xlu0 0
        %321 = vperm.xlu0 %320, %v255
        %v322 = vpop.permute.xlu0 %321
        %325 = vset.pattern.permute.xlu0 0
        %326 = vperm.xlu0 %325, %v256
        %v327 = vpop.permute.xlu0 %326
        %330 = vset.pattern.permute.xlu0 0
        %331 = vperm.xlu0 %330, %v257
        %v332 = vpop.permute.xlu0 %331
        %335 = vset.pattern.permute.xlu0 0
        %336 = vperm.xlu0 %335, %v258
        %v337 = vpop.permute.xlu0 %336
        %340 = vset.pattern.permute.xlu0 0
        %341 = vperm.xlu0 %340, %v259
        %v342 = vpop.permute.xlu0 %341
        %345 = vset.pattern.permute.xlu0 0
        %346 = vperm.xlu0 %345, %v260
        %v347 = vpop.permute.xlu0 %346
        %350 = vset.pattern.permute.xlu0 0
        %351 = vperm.xlu0 %350, %v261
        %v352 = vpop.permute.xlu0 %351
        %355 = vset.pattern.permute.xlu0 0
        %356 = vperm.xlu0 %355, %v262
        %v357 = vpop.permute.xlu0 %356
        %360 = vset.pattern.permute.xlu0 0
        %361 = vperm.xlu0 %360, %v263
        %v362 = vpop.permute.xlu0 %361
        %365 = vset.pattern.permute.xlu0 0
        %366 = vperm.xlu0 %365, %v264
        %v367 = vpop.permute.xlu0 %366
        %370 = vset.pattern.permute.xlu0 0
        %371 = vperm.xlu0 %370, %v265
        %v372 = vpop.permute.xlu0 %371
        %375 = vset.pattern.permute.xlu0 0
        %376 = vperm.xlu0 %375, %v266
        %v377 = vpop.permute.xlu0 %376
        %380 = vset.pattern.permute.xlu0 0
        %381 = vperm.xlu0 %380, %v267
        %v382 = vpop.permute.xlu0 %381
        %385 = vset.pattern.permute.xlu0 0
        %386 = vperm.xlu0 %385, %v268
        %v387 = vpop.permute.xlu0 %386
        %390 = vset.pattern.permute.xlu0 0
        %391 = vperm.xlu0 %390, %v269
        %v392 = vpop.permute.xlu0 %391
        %395 = vset.pattern.permute.xlu0 0
        %396 = vperm.xlu0 %395, %v270
        %v397 = vpop.permute.xlu0 %396
        %400 = vset.pattern.permute.xlu0 0
        %401 = vperm.xlu0 %400, %v271
        %v402 = vpop.permute.xlu0 %401
        %405 = vset.pattern.permute.xlu0 0
        %406 = vperm.xlu0 %405, %v272
        %v407 = vpop.permute.xlu0 %406
        %410 = vset.pattern.permute.xlu0 0
        %411 = vperm.xlu0 %410, %v273
        %v412 = vpop.permute.xlu0 %411
        %415 = vset.pattern.permute.xlu0 0
        %416 = vperm.xlu0 %415, %v274
        %v417 = vpop.permute.xlu0 %416
        %420 = vset.pattern.permute.xlu0 0
        %421 = vperm.xlu0 %420, %v275
        %v422 = vpop.permute.xlu0 %421
        %425 = vset.pattern.permute.xlu0 0
        %426 = vperm.xlu0 %425, %v276
        %v427 = vpop.permute.xlu0 %426
        %430 = vset.pattern.permute.xlu0 0
        %431 = vperm.xlu0 %430, %v277
        %v432 = vpop.permute.xlu0 %431
        %435 = vset.pattern.permute.xlu0 0
        %436 = vperm.xlu0 %435, %v278
        %v437 = vpop.permute.xlu0 %436
        %440 = vset.pattern.permute.xlu0 0
        %441 = vperm.xlu0 %440, %v279
        %v442 = vpop.permute.xlu0 %441
        %v444 = vadd.f32 %v283, %v287
        %v445 = vadd.f32 %v283, %v292
        %v446 = vadd.f32 %v283, %v297
        %v447 = vadd.f32 %v283, %v302
        %v448 = vadd.f32 %v283, %v307
        %v449 = vadd.f32 %v283, %v312
        %v450 = vadd.f32 %v283, %v317
        %v451 = vadd.f32 %v283, %v322
        %v452 = vadd.f32 %v283, %v327
        %v453 = vadd.f32 %v283, %v332
        %v454 = vadd.f32 %v283, %v337
        %v455 = vadd.f32 %v283, %v342
        %v456 = vadd.f32 %v283, %v347
        %v457 = vadd.f32 %v283, %v352
        %v458 = vadd.f32 %v283, %v357
        %v459 = vadd.f32 %v283, %v362
        %v460 = vadd.f32 %v283, %v367
        %v461 = vadd.f32 %v283, %v372
        %v462 = vadd.f32 %v283, %v377
        %v463 = vadd.f32 %v283, %v382
        %v464 = vadd.f32 %v283, %v387
        %v465 = vadd.f32 %v283, %v392
        %v466 = vadd.f32 %v283, %v397
        %v467 = vadd.f32 %v283, %v402
        %v468 = vadd.f32 %v283, %v407
        %v469 = vadd.f32 %v283, %v412
        %v470 = vadd.f32 %v283, %v417
        %v471 = vadd.f32 %v283, %v422
        %v472 = vadd.f32 %v283, %v427
        %v473 = vadd.f32 %v283, %v432
        %v474 = vadd.f32 %v283, %v437
        %v475 = vadd.f32 %v283, %v442
        %v476 = vmul.f32 %v444, 0.2
        %v477 = vmul.f32 %v445, 0.2
        %v478 = vmul.f32 %v446, 0.2
        %v479 = vmul.f32 %v447, 0.2
        %v480 = vmul.f32 %v448, 0.2
        %v481 = vmul.f32 %v449, 0.2
        %v482 = vmul.f32 %v450, 0.2
        %v483 = vmul.f32 %v451, 0.2
        %v484 = vmul.f32 %v452, 0.2
        %v485 = vmul.f32 %v453, 0.2
        %v486 = vmul.f32 %v454, 0.2
        %v487 = vmul.f32 %v455, 0.2
        %v488 = vmul.f32 %v456, 0.2
        %v489 = vmul.f32 %v457, 0.2
        %v490 = vmul.f32 %v458, 0.2
        %v491 = vmul.f32 %v459, 0.2
        %v492 = vmul.f32 %v460, 0.2
        %v493 = vmul.f32 %v461, 0.2
        %v494 = vmul.f32 %v462, 0.2
        %v495 = vmul.f32 %v463, 0.2
        %v496 = vmul.f32 %v464, 0.2
        %v497 = vmul.f32 %v465, 0.2
        %v498 = vmul.f32 %v466, 0.2
        %v499 = vmul.f32 %v467, 0.2
        %v500 = vmul.f32 %v468, 0.2
        %v501 = vmul.f32 %v469, 0.2
        %v502 = vmul.f32 %v470, 0.2
        %v503 = vmul.f32 %v471, 0.2
        %v504 = vmul.f32 %v472, 0.2
        %v505 = vmul.f32 %v473, 0.2
        %v506 = vmul.f32 %v474, 0.2
        %v507 = vmul.f32 %v475, 0.2
        %v508 = vmax.f32 %v444, %v476
        %v509 = vmax.f32 %v445, %v477
        %v510 = vmax.f32 %v446, %v478
        %v511 = vmax.f32 %v447, %v479
        %v512 = vmax.f32 %v448, %v480
        %v513 = vmax.f32 %v449, %v481
        %v514 = vmax.f32 %v450, %v482
        %v515 = vmax.f32 %v451, %v483
        %v516 = vmax.f32 %v452, %v484
        %v517 = vmax.f32 %v453, %v485
        %v518 = vmax.f32 %v454, %v486
        %v519 = vmax.f32 %v455, %v487
        %v520 = vmax.f32 %v456, %v488
        %v521 = vmax.f32 %v457, %v489
        %v522 = vmax.f32 %v458, %v490
        %v523 = vmax.f32 %v459, %v491
        %v524 = vmax.f32 %v460, %v492
        %v525 = vmax.f32 %v461, %v493
        %v526 = vmax.f32 %v462, %v494
        %v527 = vmax.f32 %v463, %v495
        %v528 = vmax.f32 %v464, %v496
        %v529 = vmax.f32 %v465, %v497
        %v530 = vmax.f32 %v466, %v498
        %v531 = vmax.f32 %v467, %v499
        %v532 = vmax.f32 %v468, %v500
        %v533 = vmax.f32 %v469, %v501
        %v534 = vmax.f32 %v470, %v502
        %v535 = vmax.f32 %v471, %v503
        %v536 = vmax.f32 %v472, %v504
        %v537 = vmax.f32 %v473, %v505
        %v538 = vmax.f32 %v474, %v506
        %v539 = vmax.f32 %v475, %v507
        %v540 = vsel %vm240, 16843009, 0
        %v541 = vsel %vm241, 16843009, 0
        %v542 = vsel %vm242, 16843009, 0
        %v543 = vsel %vm243, 16843009, 0
        %v544 = vsel %vm244, 16843009, 0
        %v545 = vsel %vm245, 16843009, 0
        %v546 = vsel %vm246, 16843009, 0
        %v547 = vsel %vm247, 16843009, 0
        %v548 = vunpack.c.0.s8 %v540
        %v549 = vunpack.c.1.s8 %v540
        %v550 = vunpack.c.2.s8 %v540
        %v551 = vunpack.c.3.s8 %v540
        %v552 = vunpack.c.0.s8 %v541
        %v553 = vunpack.c.1.s8 %v541
        %v554 = vunpack.c.2.s8 %v541
        %v555 = vunpack.c.3.s8 %v541
        %v556 = vunpack.c.0.s8 %v542
        %v557 = vunpack.c.1.s8 %v542
        %v558 = vunpack.c.2.s8 %v542
        %v559 = vunpack.c.3.s8 %v542
        %v560 = vunpack.c.0.s8 %v543
        %v561 = vunpack.c.1.s8 %v543
        %v562 = vunpack.c.2.s8 %v543
        %v563 = vunpack.c.3.s8 %v543
        %v564 = vunpack.c.0.s8 %v544
        %v565 = vunpack.c.1.s8 %v544
        %v566 = vunpack.c.2.s8 %v544
        %v567 = vunpack.c.3.s8 %v544
        %v568 = vunpack.c.0.s8 %v545
        %v569 = vunpack.c.1.s8 %v545
        %v570 = vunpack.c.2.s8 %v545
        %v571 = vunpack.c.3.s8 %v545
        %v572 = vunpack.c.0.s8 %v546
        %v573 = vunpack.c.1.s8 %v546
        %v574 = vunpack.c.2.s8 %v546
        %v575 = vunpack.c.3.s8 %v546
        %v576 = vunpack.c.0.s8 %v547
        %v577 = vunpack.c.1.s8 %v547
        %v578 = vunpack.c.2.s8 %v547
        %v579 = vunpack.c.3.s8 %v547
        %v580 = vpack.c.b16 %v548, %v548
        %v581 = vpack.c.b8 %v580, %v580
        %v582 = vpack.c.b16 %v549, %v549
        %v583 = vpack.c.b8 %v582, %v582
        %v584 = vpack.c.b16 %v550, %v550
        %v585 = vpack.c.b8 %v584, %v584
        %v586 = vpack.c.b16 %v551, %v551
        %v587 = vpack.c.b8 %v586, %v586
        %v588 = vpack.c.b16 %v552, %v552
        %v589 = vpack.c.b8 %v588, %v588
        %v590 = vpack.c.b16 %v553, %v553
        %v591 = vpack.c.b8 %v590, %v590
        %v592 = vpack.c.b16 %v554, %v554
        %v593 = vpack.c.b8 %v592, %v592
        %v594 = vpack.c.b16 %v555, %v555
        %v595 = vpack.c.b8 %v594, %v594
        %v596 = vpack.c.b16 %v556, %v556
        %v597 = vpack.c.b8 %v596, %v596
        %v598 = vpack.c.b16 %v557, %v557
        %v599 = vpack.c.b8 %v598, %v598
        %v600 = vpack.c.b16 %v558, %v558
        %v601 = vpack.c.b8 %v600, %v600
        %v602 = vpack.c.b16 %v559, %v559
        %v603 = vpack.c.b8 %v602, %v602
        %v604 = vpack.c.b16 %v560, %v560
        %v605 = vpack.c.b8 %v604, %v604
        %v606 = vpack.c.b16 %v561, %v561
        %v607 = vpack.c.b8 %v606, %v606
        %v608 = vpack.c.b16 %v562, %v562
        %v609 = vpack.c.b8 %v608, %v608
        %v610 = vpack.c.b16 %v563, %v563
        %v611 = vpack.c.b8 %v610, %v610
        %v612 = vpack.c.b16 %v564, %v564
        %v613 = vpack.c.b8 %v612, %v612
        %v614 = vpack.c.b16 %v565, %v565
        %v615 = vpack.c.b8 %v614, %v614
        %v616 = vpack.c.b16 %v566, %v566
        %v617 = vpack.c.b8 %v616, %v616
        %v618 = vpack.c.b16 %v567, %v567
        %v619 = vpack.c.b8 %v618, %v618
        %v620 = vpack.c.b16 %v568, %v568
        %v621 = vpack.c.b8 %v620, %v620
        %v622 = vpack.c.b16 %v569, %v569
        %v623 = vpack.c.b8 %v622, %v622
        %v624 = vpack.c.b16 %v570, %v570
        %v625 = vpack.c.b8 %v624, %v624
        %v626 = vpack.c.b16 %v571, %v571
        %v627 = vpack.c.b8 %v626, %v626
        %v628 = vpack.c.b16 %v572, %v572
        %v629 = vpack.c.b8 %v628, %v628
        %v630 = vpack.c.b16 %v573, %v573
        %v631 = vpack.c.b8 %v630, %v630
        %v632 = vpack.c.b16 %v574, %v574
        %v633 = vpack.c.b8 %v632, %v632
        %v634 = vpack.c.b16 %v575, %v575
        %v635 = vpack.c.b8 %v634, %v634
        %v636 = vpack.c.b16 %v576, %v576
        %v637 = vpack.c.b8 %v636, %v636
        %v638 = vpack.c.b16 %v577, %v577
        %v639 = vpack.c.b8 %v638, %v638
        %v640 = vpack.c.b16 %v578, %v578
        %v641 = vpack.c.b8 %v640, %v640
        %v642 = vpack.c.b16 %v579, %v579
        %v643 = vpack.c.b8 %v642, %v642
        %vm644 = vnez %v581
        %vm645 = vnez %v583
        %vm646 = vnez %v585
        %vm647 = vnez %v587
        %vm648 = vnez %v589
        %vm649 = vnez %v591
        %vm650 = vnez %v593
        %vm651 = vnez %v595
        %vm652 = vnez %v597
        %vm653 = vnez %v599
        %vm654 = vnez %v601
        %vm655 = vnez %v603
        %vm656 = vnez %v605
        %vm657 = vnez %v607
        %vm658 = vnez %v609
        %vm659 = vnez %v611
        %vm660 = vnez %v613
        %vm661 = vnez %v615
        %vm662 = vnez %v617
        %vm663 = vnez %v619
        %vm664 = vnez %v621
        %vm665 = vnez %v623
        %vm666 = vnez %v625
        %vm667 = vnez %v627
        %vm668 = vnez %v629
        %vm669 = vnez %v631
        %vm670 = vnez %v633
        %vm671 = vnez %v635
        %vm672 = vnez %v637
        %vm673 = vnez %v639
        %vm674 = vnez %v641
        %vm675 = vnez %v643
        %v676 = vsel %vm644, 16843009, 0
        %v677 = vsel %vm645, 16843009, 0
        %v678 = vsel %vm646, 16843009, 0
        %v679 = vsel %vm647, 16843009, 0
        %v680 = vsel %vm648, 16843009, 0
        %v681 = vsel %vm649, 16843009, 0
        %v682 = vsel %vm650, 16843009, 0
        %v683 = vsel %vm651, 16843009, 0
        %v684 = vsel %vm652, 16843009, 0
        %v685 = vsel %vm653, 16843009, 0
        %v686 = vsel %vm654, 16843009, 0
        %v687 = vsel %vm655, 16843009, 0
        %v688 = vsel %vm656, 16843009, 0
        %v689 = vsel %vm657, 16843009, 0
        %v690 = vsel %vm658, 16843009, 0
        %v691 = vsel %vm659, 16843009, 0
        %v692 = vsel %vm660, 16843009, 0
        %v693 = vsel %vm661, 16843009, 0
        %v694 = vsel %vm662, 16843009, 0
        %v695 = vsel %vm663, 16843009, 0
        %v696 = vsel %vm664, 16843009, 0
        %v697 = vsel %vm665, 16843009, 0
        %v698 = vsel %vm666, 16843009, 0
        %v699 = vsel %vm667, 16843009, 0
        %v700 = vsel %vm668, 16843009, 0
        %v701 = vsel %vm669, 16843009, 0
        %v702 = vsel %vm670, 16843009, 0
        %v703 = vsel %vm671, 16843009, 0
        %v704 = vsel %vm672, 16843009, 0
        %v705 = vsel %vm673, 16843009, 0
        %v706 = vsel %vm674, 16843009, 0
        %v707 = vsel %vm675, 16843009, 0
        %v708 = vunpack.c.0.s8 %v676
        %v709 = vunpack.c.0.s8 %v677
        %v710 = vunpack.c.0.s8 %v678
        %v711 = vunpack.c.0.s8 %v679
        %v712 = vunpack.c.0.s8 %v680
        %v713 = vunpack.c.0.s8 %v681
        %v714 = vunpack.c.0.s8 %v682
        %v715 = vunpack.c.0.s8 %v683
        %v716 = vunpack.c.0.s8 %v684
        %v717 = vunpack.c.0.s8 %v685
        %v718 = vunpack.c.0.s8 %v686
        %v719 = vunpack.c.0.s8 %v687
        %v720 = vunpack.c.0.s8 %v688
        %v721 = vunpack.c.0.s8 %v689
        %v722 = vunpack.c.0.s8 %v690
        %v723 = vunpack.c.0.s8 %v691
        %v724 = vunpack.c.0.s8 %v692
        %v725 = vunpack.c.0.s8 %v693
        %v726 = vunpack.c.0.s8 %v694
        %v727 = vunpack.c.0.s8 %v695
        %v728 = vunpack.c.0.s8 %v696
        %v729 = vunpack.c.0.s8 %v697
        %v730 = vunpack.c.0.s8 %v698
        %v731 = vunpack.c.0.s8 %v699
        %v732 = vunpack.c.0.s8 %v700
        %v733 = vunpack.c.0.s8 %v701
        %v734 = vunpack.c.0.s8 %v702
        %v735 = vunpack.c.0.s8 %v703
        %v736 = vunpack.c.0.s8 %v704
        %v737 = vunpack.c.0.s8 %v705
        %v738 = vunpack.c.0.s8 %v706
        %v739 = vunpack.c.0.s8 %v707
        %vm740 = vcmp.ne.s32.totalorder %v708, 0
        %vm741 = vcmp.ne.s32.totalorder %v709, 0
        %vm742 = vcmp.ne.s32.totalorder %v710, 0
        %vm743 = vcmp.ne.s32.totalorder %v711, 0
        %vm744 = vcmp.ne.s32.totalorder %v712, 0
        %vm745 = vcmp.ne.s32.totalorder %v713, 0
        %vm746 = vcmp.ne.s32.totalorder %v714, 0
        %vm747 = vcmp.ne.s32.totalorder %v715, 0
        %vm748 = vcmp.ne.s32.totalorder %v716, 0
        %vm749 = vcmp.ne.s32.totalorder %v717, 0
        %vm750 = vcmp.ne.s32.totalorder %v718, 0
        %vm751 = vcmp.ne.s32.totalorder %v719, 0
        %vm752 = vcmp.ne.s32.totalorder %v720, 0
        %vm753 = vcmp.ne.s32.totalorder %v721, 0
        %vm754 = vcmp.ne.s32.totalorder %v722, 0
        %vm755 = vcmp.ne.s32.totalorder %v723, 0
        %vm756 = vcmp.ne.s32.totalorder %v724, 0
        %vm757 = vcmp.ne.s32.totalorder %v725, 0
        %vm758 = vcmp.ne.s32.totalorder %v726, 0
        %vm759 = vcmp.ne.s32.totalorder %v727, 0
        %vm760 = vcmp.ne.s32.totalorder %v728, 0
        %vm761 = vcmp.ne.s32.totalorder %v729, 0
        %vm762 = vcmp.ne.s32.totalorder %v730, 0
        %vm763 = vcmp.ne.s32.totalorder %v731, 0
        %vm764 = vcmp.ne.s32.totalorder %v732, 0
        %vm765 = vcmp.ne.s32.totalorder %v733, 0
        %vm766 = vcmp.ne.s32.totalorder %v734, 0
        %vm767 = vcmp.ne.s32.totalorder %v735, 0
        %vm768 = vcmp.ne.s32.totalorder %v736, 0
        %vm769 = vcmp.ne.s32.totalorder %v737, 0
        %vm770 = vcmp.ne.s32.totalorder %v738, 0
        %vm771 = vcmp.ne.s32.totalorder %v739, 0
        %v772 = vsel %vm740, %v508, -1e+30
        %v773 = vsel %vm741, %v509, -1e+30
        %v774 = vsel %vm742, %v510, -1e+30
        %v775 = vsel %vm743, %v511, -1e+30
        %v776 = vsel %vm744, %v512, -1e+30
        %v777 = vsel %vm745, %v513, -1e+30
        %v778 = vsel %vm746, %v514, -1e+30
        %v779 = vsel %vm747, %v515, -1e+30
        %v780 = vsel %vm748, %v516, -1e+30
        %v781 = vsel %vm749, %v517, -1e+30
        %v782 = vsel %vm750, %v518, -1e+30
        %v783 = vsel %vm751, %v519, -1e+30
        %v784 = vsel %vm752, %v520, -1e+30
        %v785 = vsel %vm753, %v521, -1e+30
        %v786 = vsel %vm754, %v522, -1e+30
        %v787 = vsel %vm755, %v523, -1e+30
        %v788 = vsel %vm756, %v524, -1e+30
        %v789 = vsel %vm757, %v525, -1e+30
        %v790 = vsel %vm758, %v526, -1e+30
        %v791 = vsel %vm759, %v527, -1e+30
        %v792 = vsel %vm760, %v528, -1e+30
        %v793 = vsel %vm761, %v529, -1e+30
        %v794 = vsel %vm762, %v530, -1e+30
        %v795 = vsel %vm763, %v531, -1e+30
        %v796 = vsel %vm764, %v532, -1e+30
        %v797 = vsel %vm765, %v533, -1e+30
        %v798 = vsel %vm766, %v534, -1e+30
        %v799 = vsel %vm767, %v535, -1e+30
        %v800 = vsel %vm768, %v536, -1e+30
        %v801 = vsel %vm769, %v537, -1e+30
        %v802 = vsel %vm770, %v538, -1e+30
        %v803 = vsel %vm771, %v539, -1e+30
        %v804 = vmax.f32 %v772, %v776
        %v805 = vmax.f32 %v773, %v777
        %v806 = vmax.f32 %v774, %v778
        %v807 = vmax.f32 %v775, %v779
        %v808 = vmax.f32 %v804, %v780
        %v809 = vmax.f32 %v805, %v781
        %v810 = vmax.f32 %v806, %v782
        %v811 = vmax.f32 %v807, %v783
        %v812 = vmax.f32 %v808, %v784
        %v813 = vmax.f32 %v809, %v785
        %v814 = vmax.f32 %v810, %v786
        %v815 = vmax.f32 %v811, %v787
        %v816 = vmax.f32 %v812, %v788
        %v817 = vmax.f32 %v813, %v789
        %v818 = vmax.f32 %v814, %v790
        %v819 = vmax.f32 %v815, %v791
        %v820 = vmax.f32 %v816, %v792
        %v821 = vmax.f32 %v817, %v793
        %v822 = vmax.f32 %v818, %v794
        %v823 = vmax.f32 %v819, %v795
        %v824 = vmax.f32 %v820, %v796
        %v825 = vmax.f32 %v821, %v797
        %v826 = vmax.f32 %v822, %v798
        %v827 = vmax.f32 %v823, %v799
        %v828 = vmax.f32 %v824, %v800
        %v829 = vmax.f32 %v825, %v801
        %v830 = vmax.f32 %v826, %v802
        %v831 = vmax.f32 %v827, %v803
        %v832 = vmax.f32 %v828, %v829
        %v833 = vmax.f32 %v830, %v831
        %v834 = vmax.f32 %v832, %v833
        %v835 = vrot.slane %v834, 4
        %v836 = vmax.f32 %v834, %v835
        %v837 = vrot.slane %v836, 2
        %v838 = vmax.f32 %v836, %v837
        %v839 = vrot.slane %v838, 1
        %v840 = vmax.f32 %v838, %v839
        %v841 = vsub.f32 %v772, %v840
        %v842 = vsub.f32 %v773, %v840
        %v843 = vsub.f32 %v774, %v840
        %v844 = vsub.f32 %v775, %v840
        %v845 = vsub.f32 %v776, %v840
        %v846 = vsub.f32 %v777, %v840
        %v847 = vsub.f32 %v778, %v840
        %v848 = vsub.f32 %v779, %v840
        %v849 = vsub.f32 %v780, %v840
        %v850 = vsub.f32 %v781, %v840
        %v851 = vsub.f32 %v782, %v840
        %v852 = vsub.f32 %v783, %v840
        %v853 = vsub.f32 %v784, %v840
        %v854 = vsub.f32 %v785, %v840
        %v855 = vsub.f32 %v786, %v840
        %v856 = vsub.f32 %v787, %v840
        %v857 = vsub.f32 %v788, %v840
        %v858 = vsub.f32 %v789, %v840
        %v859 = vsub.f32 %v790, %v840
        %v860 = vsub.f32 %v791, %v840
        %v861 = vsub.f32 %v792, %v840
        %v862 = vsub.f32 %v793, %v840
        %v863 = vsub.f32 %v794, %v840
        %v864 = vsub.f32 %v795, %v840
        %v865 = vsub.f32 %v796, %v840
        %v866 = vsub.f32 %v797, %v840
        %v867 = vsub.f32 %v798, %v840
        %v868 = vsub.f32 %v799, %v840
        %v869 = vsub.f32 %v800, %v840
        %v870 = vsub.f32 %v801, %v840
        %v871 = vsub.f32 %v802, %v840
        %v872 = vsub.f32 %v803, %v840
        %v873 = vmul.f32 %v841, 1.442695
        %v874 = vpow.pop %v873
        %v875 = vmul.f32 %v842, 1.442695
        %v876 = vpow.pop %v875
        %v877 = vmul.f32 %v843, 1.442695
        %v878 = vpow.pop %v877
        %v879 = vmul.f32 %v844, 1.442695
        %v880 = vpow.pop %v879
        %v881 = vmul.f32 %v845, 1.442695
        %v882 = vpow.pop %v881
        %v883 = vmul.f32 %v846, 1.442695
        %v884 = vpow.pop %v883
        %v885 = vmul.f32 %v847, 1.442695
        %v886 = vpow.pop %v885
        %v887 = vmul.f32 %v848, 1.442695
        %v888 = vpow.pop %v887
        %v889 = vmul.f32 %v849, 1.442695
        %v890 = vpow.pop %v889
        %v891 = vmul.f32 %v850, 1.442695
        %v892 = vpow.pop %v891
        %v893 = vmul.f32 %v851, 1.442695
        %v894 = vpow.pop %v893
        %v895 = vmul.f32 %v852, 1.442695
        %v896 = vpow.pop %v895
        %v897 = vmul.f32 %v853, 1.442695
        %v898 = vpow.pop %v897
        %v899 = vmul.f32 %v854, 1.442695
        %v900 = vpow.pop %v899
        %v901 = vmul.f32 %v855, 1.442695
        %v902 = vpow.pop %v901
        %v903 = vmul.f32 %v856, 1.442695
        %v904 = vpow.pop %v903
        %v905 = vmul.f32 %v857, 1.442695
        %v906 = vpow.pop %v905
        %v907 = vmul.f32 %v858, 1.442695
        %v908 = vpow.pop %v907
        %v909 = vmul.f32 %v859, 1.442695
        %v910 = vpow.pop %v909
        %v911 = vmul.f32 %v860, 1.442695
        %v912 = vpow.pop %v911
        %v913 = vmul.f32 %v861, 1.442695
        %v914 = vpow.pop %v913
        %v915 = vmul.f32 %v862, 1.442695
        %v916 = vpow.pop %v915
        %v917 = vmul.f32 %v863, 1.442695
        %v918 = vpow.pop %v917
        %v919 = vmul.f32 %v864, 1.442695
        %v920 = vpow.pop %v919
        %v921 = vmul.f32 %v865, 1.442695
        %v922 = vpow.pop %v921
        %v923 = vmul.f32 %v866, 1.442695
        %v924 = vpow.pop %v923
        %v925 = vmul.f32 %v867, 1.442695
        %v926 = vpow.pop %v925
        %v927 = vmul.f32 %v868, 1.442695
        %v928 = vpow.pop %v927
        %v929 = vmul.f32 %v869, 1.442695
        %v930 = vpow.pop %v929
        %v931 = vmul.f32 %v870, 1.442695
        %v932 = vpow.pop %v931
        %v933 = vmul.f32 %v871, 1.442695
        %v934 = vpow.pop %v933
        %v935 = vmul.f32 %v872, 1.442695
        %v936 = vpow.pop %v935
        %v937 = vpack.c.bf16 %v876, %v874
        %v938 = vpack.c.bf16 %v880, %v878
        %v939 = vpack.c.bf16 %v884, %v882
        %v940 = vpack.c.bf16 %v888, %v886
        %v941 = vpack.c.bf16 %v892, %v890
        %v942 = vpack.c.bf16 %v896, %v894
        %v943 = vpack.c.bf16 %v900, %v898
        %v944 = vpack.c.bf16 %v904, %v902
        %v945 = vpack.c.bf16 %v908, %v906
        %v946 = vpack.c.bf16 %v912, %v910
        %v947 = vpack.c.bf16 %v916, %v914
        %v948 = vpack.c.bf16 %v920, %v918
        %v949 = vpack.c.bf16 %v924, %v922
        %v950 = vpack.c.bf16 %v928, %v926
        %v951 = vpack.c.bf16 %v932, %v930
        %v952 = vpack.c.bf16 %v936, %v934
        %v955 = vunpack.c.l.b16 %v281
        %v956 = vunpack.c.h.b16 %v281
        %v957 = vunpack.c.l.b16 %v282
        %v958 = vunpack.c.h.b16 %v282
        %v959 = vpack.c.b16 %v957, %v955
        %v960 = vpack.c.b16 %v958, %v956
        %963 = vmatpush.bf16.msra.mxu0 %v944
        %964 = vmatpush.bf16.msra.mxu0 %v943
        %965 = vmatpush.bf16.msra.mxu0 %v942
        %966 = vmatpush.bf16.msra.mxu0 %v941
        %967 = vmatpush.bf16.msra.mxu0 %v940
        %968 = vmatpush.bf16.msra.mxu0 %v939
        %969 = vmatpush.bf16.msra.mxu0 %v938
        %970 = vmatpush.bf16.msra.mxu0 %v937
        %971 = vmatmul.bf16.gmra.mxu0 %v959
        %v972 = vpop.f32.mrf.mxu0
        %v973 = vadd.f32 0.0, %v972
        %v974 = vpop.f32.mrf.mxu0
        %v975 = vadd.f32 0.0, %v974
        %976 = vdwg.mxu0
        %977 = vmatpush.bf16.msra.mxu0 %v952
        %978 = vmatpush.bf16.msra.mxu0 %v951
        %979 = vmatpush.bf16.msra.mxu0 %v950
        %980 = vmatpush.bf16.msra.mxu0 %v949
        %981 = vmatpush.bf16.msra.mxu0 %v948
        %982 = vmatpush.bf16.msra.mxu0 %v947
        %983 = vmatpush.bf16.msra.mxu0 %v946
        %984 = vmatpush.bf16.msra.mxu0 %v945
        %985 = vmatmul.bf16.gmra.mxu0 %v960
        %v986 = vpop.f32.mrf.mxu0
        %v987 = vadd.f32 %v973, %v986
        %v988 = vpop.f32.mrf.mxu0
        %v989 = vadd.f32 %v975, %v988
        %990 = vdwg.mxu0
        %v991 = vrcp.pop %v989
        %v992 = vperm.slane %v991, 0
        %v993 = vmul.f32 %v987, %v992
        %s994 = scalar_lea.vmem %s0, 16
        %v995 = vld [vmem:[%s994] sm:$0xff]
        %v996 = vld [vmem:[%s994 + $0x8] sm:$0x11]
        %v997 = vperm.slane %v280, 1
        %998 = vset.pattern.permute.xlu0 1
        %999 = vperm.xlu0 %998, %v248
        %v1000 = vpop.permute.xlu0 %999
        %1002 = vset.pattern.permute.xlu0 1
        %1003 = vperm.xlu0 %1002, %v249
        %v1004 = vpop.permute.xlu0 %1003
        %1006 = vset.pattern.permute.xlu0 1
        %1007 = vperm.xlu0 %1006, %v250
        %v1008 = vpop.permute.xlu0 %1007
        %1010 = vset.pattern.permute.xlu0 1
        %1011 = vperm.xlu0 %1010, %v251
        %v1012 = vpop.permute.xlu0 %1011
        %1014 = vset.pattern.permute.xlu0 1
        %1015 = vperm.xlu0 %1014, %v252
        %v1016 = vpop.permute.xlu0 %1015
        %1018 = vset.pattern.permute.xlu0 1
        %1019 = vperm.xlu0 %1018, %v253
        %v1020 = vpop.permute.xlu0 %1019
        %1022 = vset.pattern.permute.xlu0 1
        %1023 = vperm.xlu0 %1022, %v254
        %v1024 = vpop.permute.xlu0 %1023
        %1026 = vset.pattern.permute.xlu0 1
        %1027 = vperm.xlu0 %1026, %v255
        %v1028 = vpop.permute.xlu0 %1027
        %1030 = vset.pattern.permute.xlu0 1
        %1031 = vperm.xlu0 %1030, %v256
        %v1032 = vpop.permute.xlu0 %1031
        %1034 = vset.pattern.permute.xlu0 1
        %1035 = vperm.xlu0 %1034, %v257
        %v1036 = vpop.permute.xlu0 %1035
        %1038 = vset.pattern.permute.xlu0 1
        %1039 = vperm.xlu0 %1038, %v258
        %v1040 = vpop.permute.xlu0 %1039
        %1042 = vset.pattern.permute.xlu0 1
        %1043 = vperm.xlu0 %1042, %v259
        %v1044 = vpop.permute.xlu0 %1043
        %1046 = vset.pattern.permute.xlu0 1
        %1047 = vperm.xlu0 %1046, %v260
        %v1048 = vpop.permute.xlu0 %1047
        %1050 = vset.pattern.permute.xlu0 1
        %1051 = vperm.xlu0 %1050, %v261
        %v1052 = vpop.permute.xlu0 %1051
        %1054 = vset.pattern.permute.xlu0 1
        %1055 = vperm.xlu0 %1054, %v262
        %v1056 = vpop.permute.xlu0 %1055
        %1058 = vset.pattern.permute.xlu0 1
        %1059 = vperm.xlu0 %1058, %v263
        %v1060 = vpop.permute.xlu0 %1059
        %1062 = vset.pattern.permute.xlu0 1
        %1063 = vperm.xlu0 %1062, %v264
        %v1064 = vpop.permute.xlu0 %1063
        %1066 = vset.pattern.permute.xlu0 1
        %1067 = vperm.xlu0 %1066, %v265
        %v1068 = vpop.permute.xlu0 %1067
        %1070 = vset.pattern.permute.xlu0 1
        %1071 = vperm.xlu0 %1070, %v266
        %v1072 = vpop.permute.xlu0 %1071
        %1074 = vset.pattern.permute.xlu0 1
        %1075 = vperm.xlu0 %1074, %v267
        %v1076 = vpop.permute.xlu0 %1075
        %1078 = vset.pattern.permute.xlu0 1
        %1079 = vperm.xlu0 %1078, %v268
        %v1080 = vpop.permute.xlu0 %1079
        %1082 = vset.pattern.permute.xlu0 1
        %1083 = vperm.xlu0 %1082, %v269
        %v1084 = vpop.permute.xlu0 %1083
        %1086 = vset.pattern.permute.xlu0 1
        %1087 = vperm.xlu0 %1086, %v270
        %v1088 = vpop.permute.xlu0 %1087
        %1090 = vset.pattern.permute.xlu0 1
        %1091 = vperm.xlu0 %1090, %v271
        %v1092 = vpop.permute.xlu0 %1091
        %1094 = vset.pattern.permute.xlu0 1
        %1095 = vperm.xlu0 %1094, %v272
        %v1096 = vpop.permute.xlu0 %1095
        %1098 = vset.pattern.permute.xlu0 1
        %1099 = vperm.xlu0 %1098, %v273
        %v1100 = vpop.permute.xlu0 %1099
        %1102 = vset.pattern.permute.xlu0 1
        %1103 = vperm.xlu0 %1102, %v274
        %v1104 = vpop.permute.xlu0 %1103
        %1106 = vset.pattern.permute.xlu0 1
        %1107 = vperm.xlu0 %1106, %v275
        %v1108 = vpop.permute.xlu0 %1107
        %1110 = vset.pattern.permute.xlu0 1
        %1111 = vperm.xlu0 %1110, %v276
        %v1112 = vpop.permute.xlu0 %1111
        %1114 = vset.pattern.permute.xlu0 1
        %1115 = vperm.xlu0 %1114, %v277
        %v1116 = vpop.permute.xlu0 %1115
        %1118 = vset.pattern.permute.xlu0 1
        %1119 = vperm.xlu0 %1118, %v278
        %v1120 = vpop.permute.xlu0 %1119
        %1122 = vset.pattern.permute.xlu0 1
        %1123 = vperm.xlu0 %1122, %v279
        %v1124 = vpop.permute.xlu0 %1123
        %v1126 = vadd.f32 %v997, %v1000
        %v1127 = vadd.f32 %v997, %v1004
        %v1128 = vadd.f32 %v997, %v1008
        %v1129 = vadd.f32 %v997, %v1012
        %v1130 = vadd.f32 %v997, %v1016
        %v1131 = vadd.f32 %v997, %v1020
        %v1132 = vadd.f32 %v997, %v1024
        %v1133 = vadd.f32 %v997, %v1028
        %v1134 = vadd.f32 %v997, %v1032
        %v1135 = vadd.f32 %v997, %v1036
        %v1136 = vadd.f32 %v997, %v1040
        %v1137 = vadd.f32 %v997, %v1044
        %v1138 = vadd.f32 %v997, %v1048
        %v1139 = vadd.f32 %v997, %v1052
        %v1140 = vadd.f32 %v997, %v1056
        %v1141 = vadd.f32 %v997, %v1060
        %v1142 = vadd.f32 %v997, %v1064
        %v1143 = vadd.f32 %v997, %v1068
        %v1144 = vadd.f32 %v997, %v1072
        %v1145 = vadd.f32 %v997, %v1076
        %v1146 = vadd.f32 %v997, %v1080
        %v1147 = vadd.f32 %v997, %v1084
        %v1148 = vadd.f32 %v997, %v1088
        %v1149 = vadd.f32 %v997, %v1092
        %v1150 = vadd.f32 %v997, %v1096
        %v1151 = vadd.f32 %v997, %v1100
        %v1152 = vadd.f32 %v997, %v1104
        %v1153 = vadd.f32 %v997, %v1108
        %v1154 = vadd.f32 %v997, %v1112
        %v1155 = vadd.f32 %v997, %v1116
        %v1156 = vadd.f32 %v997, %v1120
        %v1157 = vadd.f32 %v997, %v1124
        %v1158 = vmul.f32 %v1126, 0.2
        %v1159 = vmul.f32 %v1127, 0.2
        %v1160 = vmul.f32 %v1128, 0.2
        %v1161 = vmul.f32 %v1129, 0.2
        %v1162 = vmul.f32 %v1130, 0.2
        %v1163 = vmul.f32 %v1131, 0.2
        %v1164 = vmul.f32 %v1132, 0.2
        %v1165 = vmul.f32 %v1133, 0.2
        %v1166 = vmul.f32 %v1134, 0.2
        %v1167 = vmul.f32 %v1135, 0.2
        %v1168 = vmul.f32 %v1136, 0.2
        %v1169 = vmul.f32 %v1137, 0.2
        %v1170 = vmul.f32 %v1138, 0.2
        %v1171 = vmul.f32 %v1139, 0.2
        %v1172 = vmul.f32 %v1140, 0.2
        %v1173 = vmul.f32 %v1141, 0.2
        %v1174 = vmul.f32 %v1142, 0.2
        %v1175 = vmul.f32 %v1143, 0.2
        %v1176 = vmul.f32 %v1144, 0.2
        %v1177 = vmul.f32 %v1145, 0.2
        %v1178 = vmul.f32 %v1146, 0.2
        %v1179 = vmul.f32 %v1147, 0.2
        %v1180 = vmul.f32 %v1148, 0.2
        %v1181 = vmul.f32 %v1149, 0.2
        %v1182 = vmul.f32 %v1150, 0.2
        %v1183 = vmul.f32 %v1151, 0.2
        %v1184 = vmul.f32 %v1152, 0.2
        %v1185 = vmul.f32 %v1153, 0.2
        %v1186 = vmul.f32 %v1154, 0.2
        %v1187 = vmul.f32 %v1155, 0.2
        %v1188 = vmul.f32 %v1156, 0.2
        %v1189 = vmul.f32 %v1157, 0.2
        %v1190 = vmax.f32 %v1126, %v1158
        %v1191 = vmax.f32 %v1127, %v1159
        %v1192 = vmax.f32 %v1128, %v1160
        %v1193 = vmax.f32 %v1129, %v1161
        %v1194 = vmax.f32 %v1130, %v1162
        %v1195 = vmax.f32 %v1131, %v1163
        %v1196 = vmax.f32 %v1132, %v1164
        %v1197 = vmax.f32 %v1133, %v1165
        %v1198 = vmax.f32 %v1134, %v1166
        %v1199 = vmax.f32 %v1135, %v1167
        %v1200 = vmax.f32 %v1136, %v1168
        %v1201 = vmax.f32 %v1137, %v1169
        %v1202 = vmax.f32 %v1138, %v1170
        %v1203 = vmax.f32 %v1139, %v1171
        %v1204 = vmax.f32 %v1140, %v1172
        %v1205 = vmax.f32 %v1141, %v1173
        %v1206 = vmax.f32 %v1142, %v1174
        %v1207 = vmax.f32 %v1143, %v1175
        %v1208 = vmax.f32 %v1144, %v1176
        %v1209 = vmax.f32 %v1145, %v1177
        %v1210 = vmax.f32 %v1146, %v1178
        %v1211 = vmax.f32 %v1147, %v1179
        %v1212 = vmax.f32 %v1148, %v1180
        %v1213 = vmax.f32 %v1149, %v1181
        %v1214 = vmax.f32 %v1150, %v1182
        %v1215 = vmax.f32 %v1151, %v1183
        %v1216 = vmax.f32 %v1152, %v1184
        %v1217 = vmax.f32 %v1153, %v1185
        %v1218 = vmax.f32 %v1154, %v1186
        %v1219 = vmax.f32 %v1155, %v1187
        %v1220 = vmax.f32 %v1156, %v1188
        %v1221 = vmax.f32 %v1157, %v1189
        %v1222 = vsel %vm740, %v1190, -1e+30
        %v1223 = vsel %vm741, %v1191, -1e+30
        %v1224 = vsel %vm742, %v1192, -1e+30
        %v1225 = vsel %vm743, %v1193, -1e+30
        %v1226 = vsel %vm744, %v1194, -1e+30
        %v1227 = vsel %vm745, %v1195, -1e+30
        %v1228 = vsel %vm746, %v1196, -1e+30
        %v1229 = vsel %vm747, %v1197, -1e+30
        %v1230 = vsel %vm748, %v1198, -1e+30
        %v1231 = vsel %vm749, %v1199, -1e+30
        %v1232 = vsel %vm750, %v1200, -1e+30
        %v1233 = vsel %vm751, %v1201, -1e+30
        %v1234 = vsel %vm752, %v1202, -1e+30
        %v1235 = vsel %vm753, %v1203, -1e+30
        %v1236 = vsel %vm754, %v1204, -1e+30
        %v1237 = vsel %vm755, %v1205, -1e+30
        %v1238 = vsel %vm756, %v1206, -1e+30
        %v1239 = vsel %vm757, %v1207, -1e+30
        %v1240 = vsel %vm758, %v1208, -1e+30
        %v1241 = vsel %vm759, %v1209, -1e+30
        %v1242 = vsel %vm760, %v1210, -1e+30
        %v1243 = vsel %vm761, %v1211, -1e+30
        %v1244 = vsel %vm762, %v1212, -1e+30
        %v1245 = vsel %vm763, %v1213, -1e+30
        %v1246 = vsel %vm764, %v1214, -1e+30
        %v1247 = vsel %vm765, %v1215, -1e+30
        %v1248 = vsel %vm766, %v1216, -1e+30
        %v1249 = vsel %vm767, %v1217, -1e+30
        %v1250 = vsel %vm768, %v1218, -1e+30
        %v1251 = vsel %vm769, %v1219, -1e+30
        %v1252 = vsel %vm770, %v1220, -1e+30
        %v1253 = vsel %vm771, %v1221, -1e+30
        %v1254 = vmax.f32 %v1222, %v1226
        %v1255 = vmax.f32 %v1223, %v1227
        %v1256 = vmax.f32 %v1224, %v1228
        %v1257 = vmax.f32 %v1225, %v1229
        %v1258 = vmax.f32 %v1254, %v1230
        %v1259 = vmax.f32 %v1255, %v1231
        %v1260 = vmax.f32 %v1256, %v1232
        %v1261 = vmax.f32 %v1257, %v1233
        %v1262 = vmax.f32 %v1258, %v1234
        %v1263 = vmax.f32 %v1259, %v1235
        %v1264 = vmax.f32 %v1260, %v1236
        %v1265 = vmax.f32 %v1261, %v1237
        %v1266 = vmax.f32 %v1262, %v1238
        %v1267 = vmax.f32 %v1263, %v1239
        %v1268 = vmax.f32 %v1264, %v1240
        %v1269 = vmax.f32 %v1265, %v1241
        %v1270 = vmax.f32 %v1266, %v1242
        %v1271 = vmax.f32 %v1267, %v1243
        %v1272 = vmax.f32 %v1268, %v1244
        %v1273 = vmax.f32 %v1269, %v1245
        %v1274 = vmax.f32 %v1270, %v1246
        %v1275 = vmax.f32 %v1271, %v1247
        %v1276 = vmax.f32 %v1272, %v1248
        %v1277 = vmax.f32 %v1273, %v1249
        %v1278 = vmax.f32 %v1274, %v1250
        %v1279 = vmax.f32 %v1275, %v1251
        %v1280 = vmax.f32 %v1276, %v1252
        %v1281 = vmax.f32 %v1277, %v1253
        %v1282 = vmax.f32 %v1278, %v1279
        %v1283 = vmax.f32 %v1280, %v1281
        %v1284 = vmax.f32 %v1282, %v1283
        %v1285 = vrot.slane %v1284, 4
        %v1286 = vmax.f32 %v1284, %v1285
        %v1287 = vrot.slane %v1286, 2
        %v1288 = vmax.f32 %v1286, %v1287
        %v1289 = vrot.slane %v1288, 1
        %v1290 = vmax.f32 %v1288, %v1289
        %v1291 = vsub.f32 %v1222, %v1290
        %v1292 = vsub.f32 %v1223, %v1290
        %v1293 = vsub.f32 %v1224, %v1290
        %v1294 = vsub.f32 %v1225, %v1290
        %v1295 = vsub.f32 %v1226, %v1290
        %v1296 = vsub.f32 %v1227, %v1290
        %v1297 = vsub.f32 %v1228, %v1290
        %v1298 = vsub.f32 %v1229, %v1290
        %v1299 = vsub.f32 %v1230, %v1290
        %v1300 = vsub.f32 %v1231, %v1290
        %v1301 = vsub.f32 %v1232, %v1290
        %v1302 = vsub.f32 %v1233, %v1290
        %v1303 = vsub.f32 %v1234, %v1290
        %v1304 = vsub.f32 %v1235, %v1290
        %v1305 = vsub.f32 %v1236, %v1290
        %v1306 = vsub.f32 %v1237, %v1290
        %v1307 = vsub.f32 %v1238, %v1290
        %v1308 = vsub.f32 %v1239, %v1290
        %v1309 = vsub.f32 %v1240, %v1290
        %v1310 = vsub.f32 %v1241, %v1290
        %v1311 = vsub.f32 %v1242, %v1290
        %v1312 = vsub.f32 %v1243, %v1290
        %v1313 = vsub.f32 %v1244, %v1290
        %v1314 = vsub.f32 %v1245, %v1290
        %v1315 = vsub.f32 %v1246, %v1290
        %v1316 = vsub.f32 %v1247, %v1290
        %v1317 = vsub.f32 %v1248, %v1290
        %v1318 = vsub.f32 %v1249, %v1290
        %v1319 = vsub.f32 %v1250, %v1290
        %v1320 = vsub.f32 %v1251, %v1290
        %v1321 = vsub.f32 %v1252, %v1290
        %v1322 = vsub.f32 %v1253, %v1290
        %v1323 = vmul.f32 %v1291, 1.442695
        %v1324 = vpow.pop %v1323
        %v1325 = vmul.f32 %v1292, 1.442695
        %v1326 = vpow.pop %v1325
        %v1327 = vmul.f32 %v1293, 1.442695
        %v1328 = vpow.pop %v1327
        %v1329 = vmul.f32 %v1294, 1.442695
        %v1330 = vpow.pop %v1329
        %v1331 = vmul.f32 %v1295, 1.442695
        %v1332 = vpow.pop %v1331
        %v1333 = vmul.f32 %v1296, 1.442695
        %v1334 = vpow.pop %v1333
        %v1335 = vmul.f32 %v1297, 1.442695
        %v1336 = vpow.pop %v1335
        %v1337 = vmul.f32 %v1298, 1.442695
        %v1338 = vpow.pop %v1337
        %v1339 = vmul.f32 %v1299, 1.442695
        %v1340 = vpow.pop %v1339
        %v1341 = vmul.f32 %v1300, 1.442695
        %v1342 = vpow.pop %v1341
        %v1343 = vmul.f32 %v1301, 1.442695
        %v1344 = vpow.pop %v1343
        %v1345 = vmul.f32 %v1302, 1.442695
        %v1346 = vpow.pop %v1345
        %v1347 = vmul.f32 %v1303, 1.442695
        %v1348 = vpow.pop %v1347
        %v1349 = vmul.f32 %v1304, 1.442695
        %v1350 = vpow.pop %v1349
        %v1351 = vmul.f32 %v1305, 1.442695
        %v1352 = vpow.pop %v1351
        %v1353 = vmul.f32 %v1306, 1.442695
        %v1354 = vpow.pop %v1353
        %v1355 = vmul.f32 %v1307, 1.442695
        %v1356 = vpow.pop %v1355
        %v1357 = vmul.f32 %v1308, 1.442695
        %v1358 = vpow.pop %v1357
        %v1359 = vmul.f32 %v1309, 1.442695
        %v1360 = vpow.pop %v1359
        %v1361 = vmul.f32 %v1310, 1.442695
        %v1362 = vpow.pop %v1361
        %v1363 = vmul.f32 %v1311, 1.442695
        %v1364 = vpow.pop %v1363
        %v1365 = vmul.f32 %v1312, 1.442695
        %v1366 = vpow.pop %v1365
        %v1367 = vmul.f32 %v1313, 1.442695
        %v1368 = vpow.pop %v1367
        %v1369 = vmul.f32 %v1314, 1.442695
        %v1370 = vpow.pop %v1369
        %v1371 = vmul.f32 %v1315, 1.442695
        %v1372 = vpow.pop %v1371
        %v1373 = vmul.f32 %v1316, 1.442695
        %v1374 = vpow.pop %v1373
        %v1375 = vmul.f32 %v1317, 1.442695
        %v1376 = vpow.pop %v1375
        %v1377 = vmul.f32 %v1318, 1.442695
        %v1378 = vpow.pop %v1377
        %v1379 = vmul.f32 %v1319, 1.442695
        %v1380 = vpow.pop %v1379
        %v1381 = vmul.f32 %v1320, 1.442695
        %v1382 = vpow.pop %v1381
        %v1383 = vmul.f32 %v1321, 1.442695
        %v1384 = vpow.pop %v1383
        %v1385 = vmul.f32 %v1322, 1.442695
        %v1386 = vpow.pop %v1385
        %v1387 = vpack.c.bf16 %v1326, %v1324
        %v1388 = vpack.c.bf16 %v1330, %v1328
        %v1389 = vpack.c.bf16 %v1334, %v1332
        %v1390 = vpack.c.bf16 %v1338, %v1336
        %v1391 = vpack.c.bf16 %v1342, %v1340
        %v1392 = vpack.c.bf16 %v1346, %v1344
        %v1393 = vpack.c.bf16 %v1350, %v1348
        %v1394 = vpack.c.bf16 %v1354, %v1352
        %v1395 = vpack.c.bf16 %v1358, %v1356
        %v1396 = vpack.c.bf16 %v1362, %v1360
        %v1397 = vpack.c.bf16 %v1366, %v1364
        %v1398 = vpack.c.bf16 %v1370, %v1368
        %v1399 = vpack.c.bf16 %v1374, %v1372
        %v1400 = vpack.c.bf16 %v1378, %v1376
        %v1401 = vpack.c.bf16 %v1382, %v1380
        %v1402 = vpack.c.bf16 %v1386, %v1384
        %v1405 = vunpack.c.l.b16 %v995
        %v1406 = vunpack.c.h.b16 %v995
        %v1407 = vunpack.c.l.b16 %v996
        %v1408 = vunpack.c.h.b16 %v996
        %v1409 = vpack.c.b16 %v1407, %v1405
        %v1410 = vpack.c.b16 %v1408, %v1406
        %1413 = vmatpush.bf16.msra.mxu0 %v1394
        %1414 = vmatpush.bf16.msra.mxu0 %v1393
        %1415 = vmatpush.bf16.msra.mxu0 %v1392
        %1416 = vmatpush.bf16.msra.mxu0 %v1391
        %1417 = vmatpush.bf16.msra.mxu0 %v1390
        %1418 = vmatpush.bf16.msra.mxu0 %v1389
        %1419 = vmatpush.bf16.msra.mxu0 %v1388
        %1420 = vmatpush.bf16.msra.mxu0 %v1387
        %1421 = vmatmul.bf16.gmra.mxu0 %v1409
        %v1422 = vpop.f32.mrf.mxu0
        %v1423 = vadd.f32 0.0, %v1422
        %v1424 = vpop.f32.mrf.mxu0
        %v1425 = vadd.f32 0.0, %v1424
        %1426 = vdwg.mxu0
        %1427 = vmatpush.bf16.msra.mxu0 %v1402
        %1428 = vmatpush.bf16.msra.mxu0 %v1401
        %1429 = vmatpush.bf16.msra.mxu0 %v1400
        %1430 = vmatpush.bf16.msra.mxu0 %v1399
        %1431 = vmatpush.bf16.msra.mxu0 %v1398
        %1432 = vmatpush.bf16.msra.mxu0 %v1397
        %1433 = vmatpush.bf16.msra.mxu0 %v1396
        %1434 = vmatpush.bf16.msra.mxu0 %v1395
        %1435 = vmatmul.bf16.gmra.mxu0 %v1410
        %v1436 = vpop.f32.mrf.mxu0
        %v1437 = vadd.f32 %v1423, %v1436
        %v1438 = vpop.f32.mrf.mxu0
        %v1439 = vadd.f32 %v1425, %v1438
        %1440 = vdwg.mxu0
        %v1441 = vrcp.pop %v1439
        %v1442 = vperm.slane %v1441, 0
        %v1443 = vmul.f32 %v1437, %v1442
        %s1444 = scalar_lea.vmem %s0, 32
        %v1445 = vld [vmem:[%s1444] sm:$0xff]
        %v1446 = vld [vmem:[%s1444 + $0x8] sm:$0x11]
        %v1447 = vperm.slane %v280, 2
        %1448 = vset.pattern.permute.xlu0 2
        %1449 = vperm.xlu0 %1448, %v248
        %v1450 = vpop.permute.xlu0 %1449
        %1452 = vset.pattern.permute.xlu0 2
        %1453 = vperm.xlu0 %1452, %v249
        %v1454 = vpop.permute.xlu0 %1453
        %1456 = vset.pattern.permute.xlu0 2
        %1457 = vperm.xlu0 %1456, %v250
        %v1458 = vpop.permute.xlu0 %1457
        %1460 = vset.pattern.permute.xlu0 2
        %1461 = vperm.xlu0 %1460, %v251
        %v1462 = vpop.permute.xlu0 %1461
        %1464 = vset.pattern.permute.xlu0 2
        %1465 = vperm.xlu0 %1464, %v252
        %v1466 = vpop.permute.xlu0 %1465
        %1468 = vset.pattern.permute.xlu0 2
        %1469 = vperm.xlu0 %1468, %v253
        %v1470 = vpop.permute.xlu0 %1469
        %1472 = vset.pattern.permute.xlu0 2
        %1473 = vperm.xlu0 %1472, %v254
        %v1474 = vpop.permute.xlu0 %1473
        %1476 = vset.pattern.permute.xlu0 2
        %1477 = vperm.xlu0 %1476, %v255
        %v1478 = vpop.permute.xlu0 %1477
        %1480 = vset.pattern.permute.xlu0 2
        %1481 = vperm.xlu0 %1480, %v256
        %v1482 = vpop.permute.xlu0 %1481
        %1484 = vset.pattern.permute.xlu0 2
        %1485 = vperm.xlu0 %1484, %v257
        %v1486 = vpop.permute.xlu0 %1485
        %1488 = vset.pattern.permute.xlu0 2
        %1489 = vperm.xlu0 %1488, %v258
        %v1490 = vpop.permute.xlu0 %1489
        %1492 = vset.pattern.permute.xlu0 2
        %1493 = vperm.xlu0 %1492, %v259
        %v1494 = vpop.permute.xlu0 %1493
        %1496 = vset.pattern.permute.xlu0 2
        %1497 = vperm.xlu0 %1496, %v260
        %v1498 = vpop.permute.xlu0 %1497
        %1500 = vset.pattern.permute.xlu0 2
        %1501 = vperm.xlu0 %1500, %v261
        %v1502 = vpop.permute.xlu0 %1501
        %1504 = vset.pattern.permute.xlu0 2
        %1505 = vperm.xlu0 %1504, %v262
        %v1506 = vpop.permute.xlu0 %1505
        %1508 = vset.pattern.permute.xlu0 2
        %1509 = vperm.xlu0 %1508, %v263
        %v1510 = vpop.permute.xlu0 %1509
        %1512 = vset.pattern.permute.xlu0 2
        %1513 = vperm.xlu0 %1512, %v264
        %v1514 = vpop.permute.xlu0 %1513
        %1516 = vset.pattern.permute.xlu0 2
        %1517 = vperm.xlu0 %1516, %v265
        %v1518 = vpop.permute.xlu0 %1517
        %1520 = vset.pattern.permute.xlu0 2
        %1521 = vperm.xlu0 %1520, %v266
        %v1522 = vpop.permute.xlu0 %1521
        %1524 = vset.pattern.permute.xlu0 2
        %1525 = vperm.xlu0 %1524, %v267
        %v1526 = vpop.permute.xlu0 %1525
        %1528 = vset.pattern.permute.xlu0 2
        %1529 = vperm.xlu0 %1528, %v268
        %v1530 = vpop.permute.xlu0 %1529
        %1532 = vset.pattern.permute.xlu0 2
        %1533 = vperm.xlu0 %1532, %v269
        %v1534 = vpop.permute.xlu0 %1533
        %1536 = vset.pattern.permute.xlu0 2
        %1537 = vperm.xlu0 %1536, %v270
        %v1538 = vpop.permute.xlu0 %1537
        %1540 = vset.pattern.permute.xlu0 2
        %1541 = vperm.xlu0 %1540, %v271
        %v1542 = vpop.permute.xlu0 %1541
        %1544 = vset.pattern.permute.xlu0 2
        %1545 = vperm.xlu0 %1544, %v272
        %v1546 = vpop.permute.xlu0 %1545
        %1548 = vset.pattern.permute.xlu0 2
        %1549 = vperm.xlu0 %1548, %v273
        %v1550 = vpop.permute.xlu0 %1549
        %1552 = vset.pattern.permute.xlu0 2
        %1553 = vperm.xlu0 %1552, %v274
        %v1554 = vpop.permute.xlu0 %1553
        %1556 = vset.pattern.permute.xlu0 2
        %1557 = vperm.xlu0 %1556, %v275
        %v1558 = vpop.permute.xlu0 %1557
        %1560 = vset.pattern.permute.xlu0 2
        %1561 = vperm.xlu0 %1560, %v276
        %v1562 = vpop.permute.xlu0 %1561
        %1564 = vset.pattern.permute.xlu0 2
        %1565 = vperm.xlu0 %1564, %v277
        %v1566 = vpop.permute.xlu0 %1565
        %1568 = vset.pattern.permute.xlu0 2
        %1569 = vperm.xlu0 %1568, %v278
        %v1570 = vpop.permute.xlu0 %1569
        %1572 = vset.pattern.permute.xlu0 2
        %1573 = vperm.xlu0 %1572, %v279
        %v1574 = vpop.permute.xlu0 %1573
        %v1576 = vadd.f32 %v1447, %v1450
        %v1577 = vadd.f32 %v1447, %v1454
        %v1578 = vadd.f32 %v1447, %v1458
        %v1579 = vadd.f32 %v1447, %v1462
        %v1580 = vadd.f32 %v1447, %v1466
        %v1581 = vadd.f32 %v1447, %v1470
        %v1582 = vadd.f32 %v1447, %v1474
        %v1583 = vadd.f32 %v1447, %v1478
        %v1584 = vadd.f32 %v1447, %v1482
        %v1585 = vadd.f32 %v1447, %v1486
        %v1586 = vadd.f32 %v1447, %v1490
        %v1587 = vadd.f32 %v1447, %v1494
        %v1588 = vadd.f32 %v1447, %v1498
        %v1589 = vadd.f32 %v1447, %v1502
        %v1590 = vadd.f32 %v1447, %v1506
        %v1591 = vadd.f32 %v1447, %v1510
        %v1592 = vadd.f32 %v1447, %v1514
        %v1593 = vadd.f32 %v1447, %v1518
        %v1594 = vadd.f32 %v1447, %v1522
        %v1595 = vadd.f32 %v1447, %v1526
        %v1596 = vadd.f32 %v1447, %v1530
        %v1597 = vadd.f32 %v1447, %v1534
        %v1598 = vadd.f32 %v1447, %v1538
        %v1599 = vadd.f32 %v1447, %v1542
        %v1600 = vadd.f32 %v1447, %v1546
        %v1601 = vadd.f32 %v1447, %v1550
        %v1602 = vadd.f32 %v1447, %v1554
        %v1603 = vadd.f32 %v1447, %v1558
        %v1604 = vadd.f32 %v1447, %v1562
        %v1605 = vadd.f32 %v1447, %v1566
        %v1606 = vadd.f32 %v1447, %v1570
        %v1607 = vadd.f32 %v1447, %v1574
        %v1608 = vmul.f32 %v1576, 0.2
        %v1609 = vmul.f32 %v1577, 0.2
        %v1610 = vmul.f32 %v1578, 0.2
        %v1611 = vmul.f32 %v1579, 0.2
        %v1612 = vmul.f32 %v1580, 0.2
        %v1613 = vmul.f32 %v1581, 0.2
        %v1614 = vmul.f32 %v1582, 0.2
        %v1615 = vmul.f32 %v1583, 0.2
        %v1616 = vmul.f32 %v1584, 0.2
        %v1617 = vmul.f32 %v1585, 0.2
        %v1618 = vmul.f32 %v1586, 0.2
        %v1619 = vmul.f32 %v1587, 0.2
        %v1620 = vmul.f32 %v1588, 0.2
        %v1621 = vmul.f32 %v1589, 0.2
        %v1622 = vmul.f32 %v1590, 0.2
        %v1623 = vmul.f32 %v1591, 0.2
        %v1624 = vmul.f32 %v1592, 0.2
        %v1625 = vmul.f32 %v1593, 0.2
        %v1626 = vmul.f32 %v1594, 0.2
        %v1627 = vmul.f32 %v1595, 0.2
        %v1628 = vmul.f32 %v1596, 0.2
        %v1629 = vmul.f32 %v1597, 0.2
        %v1630 = vmul.f32 %v1598, 0.2
        %v1631 = vmul.f32 %v1599, 0.2
        %v1632 = vmul.f32 %v1600, 0.2
        %v1633 = vmul.f32 %v1601, 0.2
        %v1634 = vmul.f32 %v1602, 0.2
        %v1635 = vmul.f32 %v1603, 0.2
        %v1636 = vmul.f32 %v1604, 0.2
        %v1637 = vmul.f32 %v1605, 0.2
        %v1638 = vmul.f32 %v1606, 0.2
        %v1639 = vmul.f32 %v1607, 0.2
        %v1640 = vmax.f32 %v1576, %v1608
        %v1641 = vmax.f32 %v1577, %v1609
        %v1642 = vmax.f32 %v1578, %v1610
        %v1643 = vmax.f32 %v1579, %v1611
        %v1644 = vmax.f32 %v1580, %v1612
        %v1645 = vmax.f32 %v1581, %v1613
        %v1646 = vmax.f32 %v1582, %v1614
        %v1647 = vmax.f32 %v1583, %v1615
        %v1648 = vmax.f32 %v1584, %v1616
        %v1649 = vmax.f32 %v1585, %v1617
        %v1650 = vmax.f32 %v1586, %v1618
        %v1651 = vmax.f32 %v1587, %v1619
        %v1652 = vmax.f32 %v1588, %v1620
        %v1653 = vmax.f32 %v1589, %v1621
        %v1654 = vmax.f32 %v1590, %v1622
        %v1655 = vmax.f32 %v1591, %v1623
        %v1656 = vmax.f32 %v1592, %v1624
        %v1657 = vmax.f32 %v1593, %v1625
        %v1658 = vmax.f32 %v1594, %v1626
        %v1659 = vmax.f32 %v1595, %v1627
        %v1660 = vmax.f32 %v1596, %v1628
        %v1661 = vmax.f32 %v1597, %v1629
        %v1662 = vmax.f32 %v1598, %v1630
        %v1663 = vmax.f32 %v1599, %v1631
        %v1664 = vmax.f32 %v1600, %v1632
        %v1665 = vmax.f32 %v1601, %v1633
        %v1666 = vmax.f32 %v1602, %v1634
        %v1667 = vmax.f32 %v1603, %v1635
        %v1668 = vmax.f32 %v1604, %v1636
        %v1669 = vmax.f32 %v1605, %v1637
        %v1670 = vmax.f32 %v1606, %v1638
        %v1671 = vmax.f32 %v1607, %v1639
        %v1672 = vsel %vm740, %v1640, -1e+30
        %v1673 = vsel %vm741, %v1641, -1e+30
        %v1674 = vsel %vm742, %v1642, -1e+30
        %v1675 = vsel %vm743, %v1643, -1e+30
        %v1676 = vsel %vm744, %v1644, -1e+30
        %v1677 = vsel %vm745, %v1645, -1e+30
        %v1678 = vsel %vm746, %v1646, -1e+30
        %v1679 = vsel %vm747, %v1647, -1e+30
        %v1680 = vsel %vm748, %v1648, -1e+30
        %v1681 = vsel %vm749, %v1649, -1e+30
        %v1682 = vsel %vm750, %v1650, -1e+30
        %v1683 = vsel %vm751, %v1651, -1e+30
        %v1684 = vsel %vm752, %v1652, -1e+30
        %v1685 = vsel %vm753, %v1653, -1e+30
        %v1686 = vsel %vm754, %v1654, -1e+30
        %v1687 = vsel %vm755, %v1655, -1e+30
        %v1688 = vsel %vm756, %v1656, -1e+30
        %v1689 = vsel %vm757, %v1657, -1e+30
        %v1690 = vsel %vm758, %v1658, -1e+30
        %v1691 = vsel %vm759, %v1659, -1e+30
        %v1692 = vsel %vm760, %v1660, -1e+30
        %v1693 = vsel %vm761, %v1661, -1e+30
        %v1694 = vsel %vm762, %v1662, -1e+30
        %v1695 = vsel %vm763, %v1663, -1e+30
        %v1696 = vsel %vm764, %v1664, -1e+30
        %v1697 = vsel %vm765, %v1665, -1e+30
        %v1698 = vsel %vm766, %v1666, -1e+30
        %v1699 = vsel %vm767, %v1667, -1e+30
        %v1700 = vsel %vm768, %v1668, -1e+30
        %v1701 = vsel %vm769, %v1669, -1e+30
        %v1702 = vsel %vm770, %v1670, -1e+30
        %v1703 = vsel %vm771, %v1671, -1e+30
        %v1704 = vmax.f32 %v1672, %v1676
        %v1705 = vmax.f32 %v1673, %v1677
        %v1706 = vmax.f32 %v1674, %v1678
        %v1707 = vmax.f32 %v1675, %v1679
        %v1708 = vmax.f32 %v1704, %v1680
        %v1709 = vmax.f32 %v1705, %v1681
        %v1710 = vmax.f32 %v1706, %v1682
        %v1711 = vmax.f32 %v1707, %v1683
        %v1712 = vmax.f32 %v1708, %v1684
        %v1713 = vmax.f32 %v1709, %v1685
        %v1714 = vmax.f32 %v1710, %v1686
        %v1715 = vmax.f32 %v1711, %v1687
        %v1716 = vmax.f32 %v1712, %v1688
        %v1717 = vmax.f32 %v1713, %v1689
        %v1718 = vmax.f32 %v1714, %v1690
        %v1719 = vmax.f32 %v1715, %v1691
        %v1720 = vmax.f32 %v1716, %v1692
        %v1721 = vmax.f32 %v1717, %v1693
        %v1722 = vmax.f32 %v1718, %v1694
        %v1723 = vmax.f32 %v1719, %v1695
        %v1724 = vmax.f32 %v1720, %v1696
        %v1725 = vmax.f32 %v1721, %v1697
        %v1726 = vmax.f32 %v1722, %v1698
        %v1727 = vmax.f32 %v1723, %v1699
        %v1728 = vmax.f32 %v1724, %v1700
        %v1729 = vmax.f32 %v1725, %v1701
        %v1730 = vmax.f32 %v1726, %v1702
        %v1731 = vmax.f32 %v1727, %v1703
        %v1732 = vmax.f32 %v1728, %v1729
        %v1733 = vmax.f32 %v1730, %v1731
        %v1734 = vmax.f32 %v1732, %v1733
        %v1735 = vrot.slane %v1734, 4
        %v1736 = vmax.f32 %v1734, %v1735
        %v1737 = vrot.slane %v1736, 2
        %v1738 = vmax.f32 %v1736, %v1737
        %v1739 = vrot.slane %v1738, 1
        %v1740 = vmax.f32 %v1738, %v1739
        %v1741 = vsub.f32 %v1672, %v1740
        %v1742 = vsub.f32 %v1673, %v1740
        %v1743 = vsub.f32 %v1674, %v1740
        %v1744 = vsub.f32 %v1675, %v1740
        %v1745 = vsub.f32 %v1676, %v1740
        %v1746 = vsub.f32 %v1677, %v1740
        %v1747 = vsub.f32 %v1678, %v1740
        %v1748 = vsub.f32 %v1679, %v1740
        %v1749 = vsub.f32 %v1680, %v1740
        %v1750 = vsub.f32 %v1681, %v1740
        %v1751 = vsub.f32 %v1682, %v1740
        %v1752 = vsub.f32 %v1683, %v1740
        %v1753 = vsub.f32 %v1684, %v1740
        %v1754 = vsub.f32 %v1685, %v1740
        %v1755 = vsub.f32 %v1686, %v1740
        %v1756 = vsub.f32 %v1687, %v1740
        %v1757 = vsub.f32 %v1688, %v1740
        %v1758 = vsub.f32 %v1689, %v1740
        %v1759 = vsub.f32 %v1690, %v1740
        %v1760 = vsub.f32 %v1691, %v1740
        %v1761 = vsub.f32 %v1692, %v1740
        %v1762 = vsub.f32 %v1693, %v1740
        %v1763 = vsub.f32 %v1694, %v1740
        %v1764 = vsub.f32 %v1695, %v1740
        %v1765 = vsub.f32 %v1696, %v1740
        %v1766 = vsub.f32 %v1697, %v1740
        %v1767 = vsub.f32 %v1698, %v1740
        %v1768 = vsub.f32 %v1699, %v1740
        %v1769 = vsub.f32 %v1700, %v1740
        %v1770 = vsub.f32 %v1701, %v1740
        %v1771 = vsub.f32 %v1702, %v1740
        %v1772 = vsub.f32 %v1703, %v1740
        %v1773 = vmul.f32 %v1741, 1.442695
        %v1774 = vpow.pop %v1773
        %v1775 = vmul.f32 %v1742, 1.442695
        %v1776 = vpow.pop %v1775
        %v1777 = vmul.f32 %v1743, 1.442695
        %v1778 = vpow.pop %v1777
        %v1779 = vmul.f32 %v1744, 1.442695
        %v1780 = vpow.pop %v1779
        %v1781 = vmul.f32 %v1745, 1.442695
        %v1782 = vpow.pop %v1781
        %v1783 = vmul.f32 %v1746, 1.442695
        %v1784 = vpow.pop %v1783
        %v1785 = vmul.f32 %v1747, 1.442695
        %v1786 = vpow.pop %v1785
        %v1787 = vmul.f32 %v1748, 1.442695
        %v1788 = vpow.pop %v1787
        %v1789 = vmul.f32 %v1749, 1.442695
        %v1790 = vpow.pop %v1789
        %v1791 = vmul.f32 %v1750, 1.442695
        %v1792 = vpow.pop %v1791
        %v1793 = vmul.f32 %v1751, 1.442695
        %v1794 = vpow.pop %v1793
        %v1795 = vmul.f32 %v1752, 1.442695
        %v1796 = vpow.pop %v1795
        %v1797 = vmul.f32 %v1753, 1.442695
        %v1798 = vpow.pop %v1797
        %v1799 = vmul.f32 %v1754, 1.442695
        %v1800 = vpow.pop %v1799
        %v1801 = vmul.f32 %v1755, 1.442695
        %v1802 = vpow.pop %v1801
        %v1803 = vmul.f32 %v1756, 1.442695
        %v1804 = vpow.pop %v1803
        %v1805 = vmul.f32 %v1757, 1.442695
        %v1806 = vpow.pop %v1805
        %v1807 = vmul.f32 %v1758, 1.442695
        %v1808 = vpow.pop %v1807
        %v1809 = vmul.f32 %v1759, 1.442695
        %v1810 = vpow.pop %v1809
        %v1811 = vmul.f32 %v1760, 1.442695
        %v1812 = vpow.pop %v1811
        %v1813 = vmul.f32 %v1761, 1.442695
        %v1814 = vpow.pop %v1813
        %v1815 = vmul.f32 %v1762, 1.442695
        %v1816 = vpow.pop %v1815
        %v1817 = vmul.f32 %v1763, 1.442695
        %v1818 = vpow.pop %v1817
        %v1819 = vmul.f32 %v1764, 1.442695
        %v1820 = vpow.pop %v1819
        %v1821 = vmul.f32 %v1765, 1.442695
        %v1822 = vpow.pop %v1821
        %v1823 = vmul.f32 %v1766, 1.442695
        %v1824 = vpow.pop %v1823
        %v1825 = vmul.f32 %v1767, 1.442695
        %v1826 = vpow.pop %v1825
        %v1827 = vmul.f32 %v1768, 1.442695
        %v1828 = vpow.pop %v1827
        %v1829 = vmul.f32 %v1769, 1.442695
        %v1830 = vpow.pop %v1829
        %v1831 = vmul.f32 %v1770, 1.442695
        %v1832 = vpow.pop %v1831
        %v1833 = vmul.f32 %v1771, 1.442695
        %v1834 = vpow.pop %v1833
        %v1835 = vmul.f32 %v1772, 1.442695
        %v1836 = vpow.pop %v1835
        %v1837 = vpack.c.bf16 %v1776, %v1774
        %v1838 = vpack.c.bf16 %v1780, %v1778
        %v1839 = vpack.c.bf16 %v1784, %v1782
        %v1840 = vpack.c.bf16 %v1788, %v1786
        %v1841 = vpack.c.bf16 %v1792, %v1790
        %v1842 = vpack.c.bf16 %v1796, %v1794
        %v1843 = vpack.c.bf16 %v1800, %v1798
        %v1844 = vpack.c.bf16 %v1804, %v1802
        %v1845 = vpack.c.bf16 %v1808, %v1806
        %v1846 = vpack.c.bf16 %v1812, %v1810
        %v1847 = vpack.c.bf16 %v1816, %v1814
        %v1848 = vpack.c.bf16 %v1820, %v1818
        %v1849 = vpack.c.bf16 %v1824, %v1822
        %v1850 = vpack.c.bf16 %v1828, %v1826
        %v1851 = vpack.c.bf16 %v1832, %v1830
        %v1852 = vpack.c.bf16 %v1836, %v1834
        %v1855 = vunpack.c.l.b16 %v1445
        %v1856 = vunpack.c.h.b16 %v1445
        %v1857 = vunpack.c.l.b16 %v1446
        %v1858 = vunpack.c.h.b16 %v1446
        %v1859 = vpack.c.b16 %v1857, %v1855
        %v1860 = vpack.c.b16 %v1858, %v1856
        %1863 = vmatpush.bf16.msra.mxu0 %v1844
        %1864 = vmatpush.bf16.msra.mxu0 %v1843
        %1865 = vmatpush.bf16.msra.mxu0 %v1842
        %1866 = vmatpush.bf16.msra.mxu0 %v1841
        %1867 = vmatpush.bf16.msra.mxu0 %v1840
        %1868 = vmatpush.bf16.msra.mxu0 %v1839
        %1869 = vmatpush.bf16.msra.mxu0 %v1838
        %1870 = vmatpush.bf16.msra.mxu0 %v1837
        %1871 = vmatmul.bf16.gmra.mxu0 %v1859
        %v1872 = vpop.f32.mrf.mxu0
        %v1873 = vadd.f32 0.0, %v1872
        %v1874 = vpop.f32.mrf.mxu0
        %v1875 = vadd.f32 0.0, %v1874
        %1876 = vdwg.mxu0
        %1877 = vmatpush.bf16.msra.mxu0 %v1852
        %1878 = vmatpush.bf16.msra.mxu0 %v1851
        %1879 = vmatpush.bf16.msra.mxu0 %v1850
        %1880 = vmatpush.bf16.msra.mxu0 %v1849
        %1881 = vmatpush.bf16.msra.mxu0 %v1848
        %1882 = vmatpush.bf16.msra.mxu0 %v1847
        %1883 = vmatpush.bf16.msra.mxu0 %v1846
        %1884 = vmatpush.bf16.msra.mxu0 %v1845
        %1885 = vmatmul.bf16.gmra.mxu0 %v1860
        %v1886 = vpop.f32.mrf.mxu0
        %v1887 = vadd.f32 %v1873, %v1886
        %v1888 = vpop.f32.mrf.mxu0
        %v1889 = vadd.f32 %v1875, %v1888
        %1890 = vdwg.mxu0
        %v1891 = vrcp.pop %v1889
        %v1892 = vperm.slane %v1891, 0
        %v1893 = vmul.f32 %v1887, %v1892
        %s1894 = scalar_lea.vmem %s0, 48
        %v1895 = vld [vmem:[%s1894] sm:$0xff]
        %v1896 = vld [vmem:[%s1894 + $0x8] sm:$0x11]
        %v1897 = vperm.slane %v280, 3
        %1898 = vset.pattern.permute.xlu0 3
        %1899 = vperm.xlu0 %1898, %v248
        %v1900 = vpop.permute.xlu0 %1899
        %1902 = vset.pattern.permute.xlu0 3
        %1903 = vperm.xlu0 %1902, %v249
        %v1904 = vpop.permute.xlu0 %1903
        %1906 = vset.pattern.permute.xlu0 3
        %1907 = vperm.xlu0 %1906, %v250
        %v1908 = vpop.permute.xlu0 %1907
        %1910 = vset.pattern.permute.xlu0 3
        %1911 = vperm.xlu0 %1910, %v251
        %v1912 = vpop.permute.xlu0 %1911
        %1914 = vset.pattern.permute.xlu0 3
        %1915 = vperm.xlu0 %1914, %v252
        %v1916 = vpop.permute.xlu0 %1915
        %1918 = vset.pattern.permute.xlu0 3
        %1919 = vperm.xlu0 %1918, %v253
        %v1920 = vpop.permute.xlu0 %1919
        %1922 = vset.pattern.permute.xlu0 3
        %1923 = vperm.xlu0 %1922, %v254
        %v1924 = vpop.permute.xlu0 %1923
        %1926 = vset.pattern.permute.xlu0 3
        %1927 = vperm.xlu0 %1926, %v255
        %v1928 = vpop.permute.xlu0 %1927
        %1930 = vset.pattern.permute.xlu0 3
        %1931 = vperm.xlu0 %1930, %v256
        %v1932 = vpop.permute.xlu0 %1931
        %1934 = vset.pattern.permute.xlu0 3
        %1935 = vperm.xlu0 %1934, %v257
        %v1936 = vpop.permute.xlu0 %1935
        %1938 = vset.pattern.permute.xlu0 3
        %1939 = vperm.xlu0 %1938, %v258
        %v1940 = vpop.permute.xlu0 %1939
        %1942 = vset.pattern.permute.xlu0 3
        %1943 = vperm.xlu0 %1942, %v259
        %v1944 = vpop.permute.xlu0 %1943
        %1946 = vset.pattern.permute.xlu0 3
        %1947 = vperm.xlu0 %1946, %v260
        %v1948 = vpop.permute.xlu0 %1947
        %1950 = vset.pattern.permute.xlu0 3
        %1951 = vperm.xlu0 %1950, %v261
        %v1952 = vpop.permute.xlu0 %1951
        %1954 = vset.pattern.permute.xlu0 3
        %1955 = vperm.xlu0 %1954, %v262
        %v1956 = vpop.permute.xlu0 %1955
        %1958 = vset.pattern.permute.xlu0 3
        %1959 = vperm.xlu0 %1958, %v263
        %v1960 = vpop.permute.xlu0 %1959
        %1962 = vset.pattern.permute.xlu0 3
        %1963 = vperm.xlu0 %1962, %v264
        %v1964 = vpop.permute.xlu0 %1963
        %1966 = vset.pattern.permute.xlu0 3
        %1967 = vperm.xlu0 %1966, %v265
        %v1968 = vpop.permute.xlu0 %1967
        %1970 = vset.pattern.permute.xlu0 3
        %1971 = vperm.xlu0 %1970, %v266
        %v1972 = vpop.permute.xlu0 %1971
        %1974 = vset.pattern.permute.xlu0 3
        %1975 = vperm.xlu0 %1974, %v267
        %v1976 = vpop.permute.xlu0 %1975
        %1978 = vset.pattern.permute.xlu0 3
        %1979 = vperm.xlu0 %1978, %v268
        %v1980 = vpop.permute.xlu0 %1979
        %1982 = vset.pattern.permute.xlu0 3
        %1983 = vperm.xlu0 %1982, %v269
        %v1984 = vpop.permute.xlu0 %1983
        %1986 = vset.pattern.permute.xlu0 3
        %1987 = vperm.xlu0 %1986, %v270
        %v1988 = vpop.permute.xlu0 %1987
        %1990 = vset.pattern.permute.xlu0 3
        %1991 = vperm.xlu0 %1990, %v271
        %v1992 = vpop.permute.xlu0 %1991
        %1994 = vset.pattern.permute.xlu0 3
        %1995 = vperm.xlu0 %1994, %v272
        %v1996 = vpop.permute.xlu0 %1995
        %1998 = vset.pattern.permute.xlu0 3
        %1999 = vperm.xlu0 %1998, %v273
        %v2000 = vpop.permute.xlu0 %1999
        %2002 = vset.pattern.permute.xlu0 3
        %2003 = vperm.xlu0 %2002, %v274
        %v2004 = vpop.permute.xlu0 %2003
        %2006 = vset.pattern.permute.xlu0 3
        %2007 = vperm.xlu0 %2006, %v275
        %v2008 = vpop.permute.xlu0 %2007
        %2010 = vset.pattern.permute.xlu0 3
        %2011 = vperm.xlu0 %2010, %v276
        %v2012 = vpop.permute.xlu0 %2011
        %2014 = vset.pattern.permute.xlu0 3
        %2015 = vperm.xlu0 %2014, %v277
        %v2016 = vpop.permute.xlu0 %2015
        %2018 = vset.pattern.permute.xlu0 3
        %2019 = vperm.xlu0 %2018, %v278
        %v2020 = vpop.permute.xlu0 %2019
        %2022 = vset.pattern.permute.xlu0 3
        %2023 = vperm.xlu0 %2022, %v279
        %v2024 = vpop.permute.xlu0 %2023
        %v2026 = vadd.f32 %v1897, %v1900
        %v2027 = vadd.f32 %v1897, %v1904
        %v2028 = vadd.f32 %v1897, %v1908
        %v2029 = vadd.f32 %v1897, %v1912
        %v2030 = vadd.f32 %v1897, %v1916
        %v2031 = vadd.f32 %v1897, %v1920
        %v2032 = vadd.f32 %v1897, %v1924
        %v2033 = vadd.f32 %v1897, %v1928
        %v2034 = vadd.f32 %v1897, %v1932
        %v2035 = vadd.f32 %v1897, %v1936
        %v2036 = vadd.f32 %v1897, %v1940
        %v2037 = vadd.f32 %v1897, %v1944
        %v2038 = vadd.f32 %v1897, %v1948
        %v2039 = vadd.f32 %v1897, %v1952
        %v2040 = vadd.f32 %v1897, %v1956
        %v2041 = vadd.f32 %v1897, %v1960
        %v2042 = vadd.f32 %v1897, %v1964
        %v2043 = vadd.f32 %v1897, %v1968
        %v2044 = vadd.f32 %v1897, %v1972
        %v2045 = vadd.f32 %v1897, %v1976
        %v2046 = vadd.f32 %v1897, %v1980
        %v2047 = vadd.f32 %v1897, %v1984
        %v2048 = vadd.f32 %v1897, %v1988
        %v2049 = vadd.f32 %v1897, %v1992
        %v2050 = vadd.f32 %v1897, %v1996
        %v2051 = vadd.f32 %v1897, %v2000
        %v2052 = vadd.f32 %v1897, %v2004
        %v2053 = vadd.f32 %v1897, %v2008
        %v2054 = vadd.f32 %v1897, %v2012
        %v2055 = vadd.f32 %v1897, %v2016
        %v2056 = vadd.f32 %v1897, %v2020
        %v2057 = vadd.f32 %v1897, %v2024
        %v2058 = vmul.f32 %v2026, 0.2
        %v2059 = vmul.f32 %v2027, 0.2
        %v2060 = vmul.f32 %v2028, 0.2
        %v2061 = vmul.f32 %v2029, 0.2
        %v2062 = vmul.f32 %v2030, 0.2
        %v2063 = vmul.f32 %v2031, 0.2
        %v2064 = vmul.f32 %v2032, 0.2
        %v2065 = vmul.f32 %v2033, 0.2
        %v2066 = vmul.f32 %v2034, 0.2
        %v2067 = vmul.f32 %v2035, 0.2
        %v2068 = vmul.f32 %v2036, 0.2
        %v2069 = vmul.f32 %v2037, 0.2
        %v2070 = vmul.f32 %v2038, 0.2
        %v2071 = vmul.f32 %v2039, 0.2
        %v2072 = vmul.f32 %v2040, 0.2
        %v2073 = vmul.f32 %v2041, 0.2
        %v2074 = vmul.f32 %v2042, 0.2
        %v2075 = vmul.f32 %v2043, 0.2
        %v2076 = vmul.f32 %v2044, 0.2
        %v2077 = vmul.f32 %v2045, 0.2
        %v2078 = vmul.f32 %v2046, 0.2
        %v2079 = vmul.f32 %v2047, 0.2
        %v2080 = vmul.f32 %v2048, 0.2
        %v2081 = vmul.f32 %v2049, 0.2
        %v2082 = vmul.f32 %v2050, 0.2
        %v2083 = vmul.f32 %v2051, 0.2
        %v2084 = vmul.f32 %v2052, 0.2
        %v2085 = vmul.f32 %v2053, 0.2
        %v2086 = vmul.f32 %v2054, 0.2
        %v2087 = vmul.f32 %v2055, 0.2
        %v2088 = vmul.f32 %v2056, 0.2
        %v2089 = vmul.f32 %v2057, 0.2
        %v2090 = vmax.f32 %v2026, %v2058
        %v2091 = vmax.f32 %v2027, %v2059
        %v2092 = vmax.f32 %v2028, %v2060
        %v2093 = vmax.f32 %v2029, %v2061
        %v2094 = vmax.f32 %v2030, %v2062
        %v2095 = vmax.f32 %v2031, %v2063
        %v2096 = vmax.f32 %v2032, %v2064
        %v2097 = vmax.f32 %v2033, %v2065
        %v2098 = vmax.f32 %v2034, %v2066
        %v2099 = vmax.f32 %v2035, %v2067
        %v2100 = vmax.f32 %v2036, %v2068
        %v2101 = vmax.f32 %v2037, %v2069
        %v2102 = vmax.f32 %v2038, %v2070
        %v2103 = vmax.f32 %v2039, %v2071
        %v2104 = vmax.f32 %v2040, %v2072
        %v2105 = vmax.f32 %v2041, %v2073
        %v2106 = vmax.f32 %v2042, %v2074
        %v2107 = vmax.f32 %v2043, %v2075
        %v2108 = vmax.f32 %v2044, %v2076
        %v2109 = vmax.f32 %v2045, %v2077
        %v2110 = vmax.f32 %v2046, %v2078
        %v2111 = vmax.f32 %v2047, %v2079
        %v2112 = vmax.f32 %v2048, %v2080
        %v2113 = vmax.f32 %v2049, %v2081
        %v2114 = vmax.f32 %v2050, %v2082
        %v2115 = vmax.f32 %v2051, %v2083
        %v2116 = vmax.f32 %v2052, %v2084
        %v2117 = vmax.f32 %v2053, %v2085
        %v2118 = vmax.f32 %v2054, %v2086
        %v2119 = vmax.f32 %v2055, %v2087
        %v2120 = vmax.f32 %v2056, %v2088
        %v2121 = vmax.f32 %v2057, %v2089
        %v2122 = vsel %vm740, %v2090, -1e+30
        %v2123 = vsel %vm741, %v2091, -1e+30
        %v2124 = vsel %vm742, %v2092, -1e+30
        %v2125 = vsel %vm743, %v2093, -1e+30
        %v2126 = vsel %vm744, %v2094, -1e+30
        %v2127 = vsel %vm745, %v2095, -1e+30
        %v2128 = vsel %vm746, %v2096, -1e+30
        %v2129 = vsel %vm747, %v2097, -1e+30
        %v2130 = vsel %vm748, %v2098, -1e+30
        %v2131 = vsel %vm749, %v2099, -1e+30
        %v2132 = vsel %vm750, %v2100, -1e+30
        %v2133 = vsel %vm751, %v2101, -1e+30
        %v2134 = vsel %vm752, %v2102, -1e+30
        %v2135 = vsel %vm753, %v2103, -1e+30
        %v2136 = vsel %vm754, %v2104, -1e+30
        %v2137 = vsel %vm755, %v2105, -1e+30
        %v2138 = vsel %vm756, %v2106, -1e+30
        %v2139 = vsel %vm757, %v2107, -1e+30
        %v2140 = vsel %vm758, %v2108, -1e+30
        %v2141 = vsel %vm759, %v2109, -1e+30
        %v2142 = vsel %vm760, %v2110, -1e+30
        %v2143 = vsel %vm761, %v2111, -1e+30
        %v2144 = vsel %vm762, %v2112, -1e+30
        %v2145 = vsel %vm763, %v2113, -1e+30
        %v2146 = vsel %vm764, %v2114, -1e+30
        %v2147 = vsel %vm765, %v2115, -1e+30
        %v2148 = vsel %vm766, %v2116, -1e+30
        %v2149 = vsel %vm767, %v2117, -1e+30
        %v2150 = vsel %vm768, %v2118, -1e+30
        %v2151 = vsel %vm769, %v2119, -1e+30
        %v2152 = vsel %vm770, %v2120, -1e+30
        %v2153 = vsel %vm771, %v2121, -1e+30
        %v2154 = vmax.f32 %v2122, %v2126
        %v2155 = vmax.f32 %v2123, %v2127
        %v2156 = vmax.f32 %v2124, %v2128
        %v2157 = vmax.f32 %v2125, %v2129
        %v2158 = vmax.f32 %v2154, %v2130
        %v2159 = vmax.f32 %v2155, %v2131
        %v2160 = vmax.f32 %v2156, %v2132
        %v2161 = vmax.f32 %v2157, %v2133
        %v2162 = vmax.f32 %v2158, %v2134
        %v2163 = vmax.f32 %v2159, %v2135
        %v2164 = vmax.f32 %v2160, %v2136
        %v2165 = vmax.f32 %v2161, %v2137
        %v2166 = vmax.f32 %v2162, %v2138
        %v2167 = vmax.f32 %v2163, %v2139
        %v2168 = vmax.f32 %v2164, %v2140
        %v2169 = vmax.f32 %v2165, %v2141
        %v2170 = vmax.f32 %v2166, %v2142
        %v2171 = vmax.f32 %v2167, %v2143
        %v2172 = vmax.f32 %v2168, %v2144
        %v2173 = vmax.f32 %v2169, %v2145
        %v2174 = vmax.f32 %v2170, %v2146
        %v2175 = vmax.f32 %v2171, %v2147
        %v2176 = vmax.f32 %v2172, %v2148
        %v2177 = vmax.f32 %v2173, %v2149
        %v2178 = vmax.f32 %v2174, %v2150
        %v2179 = vmax.f32 %v2175, %v2151
        %v2180 = vmax.f32 %v2176, %v2152
        %v2181 = vmax.f32 %v2177, %v2153
        %v2182 = vmax.f32 %v2178, %v2179
        %v2183 = vmax.f32 %v2180, %v2181
        %v2184 = vmax.f32 %v2182, %v2183
        %v2185 = vrot.slane %v2184, 4
        %v2186 = vmax.f32 %v2184, %v2185
        %v2187 = vrot.slane %v2186, 2
        %v2188 = vmax.f32 %v2186, %v2187
        %v2189 = vrot.slane %v2188, 1
        %v2190 = vmax.f32 %v2188, %v2189
        %v2191 = vsub.f32 %v2122, %v2190
        %v2192 = vsub.f32 %v2123, %v2190
        %v2193 = vsub.f32 %v2124, %v2190
        %v2194 = vsub.f32 %v2125, %v2190
        %v2195 = vsub.f32 %v2126, %v2190
        %v2196 = vsub.f32 %v2127, %v2190
        %v2197 = vsub.f32 %v2128, %v2190
        %v2198 = vsub.f32 %v2129, %v2190
        %v2199 = vsub.f32 %v2130, %v2190
        %v2200 = vsub.f32 %v2131, %v2190
        %v2201 = vsub.f32 %v2132, %v2190
        %v2202 = vsub.f32 %v2133, %v2190
        %v2203 = vsub.f32 %v2134, %v2190
        %v2204 = vsub.f32 %v2135, %v2190
        %v2205 = vsub.f32 %v2136, %v2190
        %v2206 = vsub.f32 %v2137, %v2190
        %v2207 = vsub.f32 %v2138, %v2190
        %v2208 = vsub.f32 %v2139, %v2190
        %v2209 = vsub.f32 %v2140, %v2190
        %v2210 = vsub.f32 %v2141, %v2190
        %v2211 = vsub.f32 %v2142, %v2190
        %v2212 = vsub.f32 %v2143, %v2190
        %v2213 = vsub.f32 %v2144, %v2190
        %v2214 = vsub.f32 %v2145, %v2190
        %v2215 = vsub.f32 %v2146, %v2190
        %v2216 = vsub.f32 %v2147, %v2190
        %v2217 = vsub.f32 %v2148, %v2190
        %v2218 = vsub.f32 %v2149, %v2190
        %v2219 = vsub.f32 %v2150, %v2190
        %v2220 = vsub.f32 %v2151, %v2190
        %v2221 = vsub.f32 %v2152, %v2190
        %v2222 = vsub.f32 %v2153, %v2190
        %v2223 = vmul.f32 %v2191, 1.442695
        %v2224 = vpow.pop %v2223
        %v2225 = vmul.f32 %v2192, 1.442695
        %v2226 = vpow.pop %v2225
        %v2227 = vmul.f32 %v2193, 1.442695
        %v2228 = vpow.pop %v2227
        %v2229 = vmul.f32 %v2194, 1.442695
        %v2230 = vpow.pop %v2229
        %v2231 = vmul.f32 %v2195, 1.442695
        %v2232 = vpow.pop %v2231
        %v2233 = vmul.f32 %v2196, 1.442695
        %v2234 = vpow.pop %v2233
        %v2235 = vmul.f32 %v2197, 1.442695
        %v2236 = vpow.pop %v2235
        %v2237 = vmul.f32 %v2198, 1.442695
        %v2238 = vpow.pop %v2237
        %v2239 = vmul.f32 %v2199, 1.442695
        %v2240 = vpow.pop %v2239
        %v2241 = vmul.f32 %v2200, 1.442695
        %v2242 = vpow.pop %v2241
        %v2243 = vmul.f32 %v2201, 1.442695
        %v2244 = vpow.pop %v2243
        %v2245 = vmul.f32 %v2202, 1.442695
        %v2246 = vpow.pop %v2245
        %v2247 = vmul.f32 %v2203, 1.442695
        %v2248 = vpow.pop %v2247
        %v2249 = vmul.f32 %v2204, 1.442695
        %v2250 = vpow.pop %v2249
        %v2251 = vmul.f32 %v2205, 1.442695
        %v2252 = vpow.pop %v2251
        %v2253 = vmul.f32 %v2206, 1.442695
        %v2254 = vpow.pop %v2253
        %v2255 = vmul.f32 %v2207, 1.442695
        %v2256 = vpow.pop %v2255
        %v2257 = vmul.f32 %v2208, 1.442695
        %v2258 = vpow.pop %v2257
        %v2259 = vmul.f32 %v2209, 1.442695
        %v2260 = vpow.pop %v2259
        %v2261 = vmul.f32 %v2210, 1.442695
        %v2262 = vpow.pop %v2261
        %v2263 = vmul.f32 %v2211, 1.442695
        %v2264 = vpow.pop %v2263
        %v2265 = vmul.f32 %v2212, 1.442695
        %v2266 = vpow.pop %v2265
        %v2267 = vmul.f32 %v2213, 1.442695
        %v2268 = vpow.pop %v2267
        %v2269 = vmul.f32 %v2214, 1.442695
        %v2270 = vpow.pop %v2269
        %v2271 = vmul.f32 %v2215, 1.442695
        %v2272 = vpow.pop %v2271
        %v2273 = vmul.f32 %v2216, 1.442695
        %v2274 = vpow.pop %v2273
        %v2275 = vmul.f32 %v2217, 1.442695
        %v2276 = vpow.pop %v2275
        %v2277 = vmul.f32 %v2218, 1.442695
        %v2278 = vpow.pop %v2277
        %v2279 = vmul.f32 %v2219, 1.442695
        %v2280 = vpow.pop %v2279
        %v2281 = vmul.f32 %v2220, 1.442695
        %v2282 = vpow.pop %v2281
        %v2283 = vmul.f32 %v2221, 1.442695
        %v2284 = vpow.pop %v2283
        %v2285 = vmul.f32 %v2222, 1.442695
        %v2286 = vpow.pop %v2285
        %v2287 = vpack.c.bf16 %v2226, %v2224
        %v2288 = vpack.c.bf16 %v2230, %v2228
        %v2289 = vpack.c.bf16 %v2234, %v2232
        %v2290 = vpack.c.bf16 %v2238, %v2236
        %v2291 = vpack.c.bf16 %v2242, %v2240
        %v2292 = vpack.c.bf16 %v2246, %v2244
        %v2293 = vpack.c.bf16 %v2250, %v2248
        %v2294 = vpack.c.bf16 %v2254, %v2252
        %v2295 = vpack.c.bf16 %v2258, %v2256
        %v2296 = vpack.c.bf16 %v2262, %v2260
        %v2297 = vpack.c.bf16 %v2266, %v2264
        %v2298 = vpack.c.bf16 %v2270, %v2268
        %v2299 = vpack.c.bf16 %v2274, %v2272
        %v2300 = vpack.c.bf16 %v2278, %v2276
        %v2301 = vpack.c.bf16 %v2282, %v2280
        %v2302 = vpack.c.bf16 %v2286, %v2284
        %v2305 = vunpack.c.l.b16 %v1895
        %v2306 = vunpack.c.h.b16 %v1895
        %v2307 = vunpack.c.l.b16 %v1896
        %v2308 = vunpack.c.h.b16 %v1896
        %v2309 = vpack.c.b16 %v2307, %v2305
        %v2310 = vpack.c.b16 %v2308, %v2306
        %2313 = vmatpush.bf16.msra.mxu0 %v2294
        %2314 = vmatpush.bf16.msra.mxu0 %v2293
        %2315 = vmatpush.bf16.msra.mxu0 %v2292
        %2316 = vmatpush.bf16.msra.mxu0 %v2291
        %2317 = vmatpush.bf16.msra.mxu0 %v2290
        %2318 = vmatpush.bf16.msra.mxu0 %v2289
        %2319 = vmatpush.bf16.msra.mxu0 %v2288
        %2320 = vmatpush.bf16.msra.mxu0 %v2287
        %2321 = vmatmul.bf16.gmra.mxu0 %v2309
        %v2322 = vpop.f32.mrf.mxu0
        %v2323 = vadd.f32 0.0, %v2322
        %v2324 = vpop.f32.mrf.mxu0
        %v2325 = vadd.f32 0.0, %v2324
        %2326 = vdwg.mxu0
        %2327 = vmatpush.bf16.msra.mxu0 %v2302
        %2328 = vmatpush.bf16.msra.mxu0 %v2301
        %2329 = vmatpush.bf16.msra.mxu0 %v2300
        %2330 = vmatpush.bf16.msra.mxu0 %v2299
        %2331 = vmatpush.bf16.msra.mxu0 %v2298
        %2332 = vmatpush.bf16.msra.mxu0 %v2297
        %2333 = vmatpush.bf16.msra.mxu0 %v2296
        %2334 = vmatpush.bf16.msra.mxu0 %v2295
        %2335 = vmatmul.bf16.gmra.mxu0 %v2310
        %v2336 = vpop.f32.mrf.mxu0
        %v2337 = vadd.f32 %v2323, %v2336
        %v2338 = vpop.f32.mrf.mxu0
        %v2339 = vadd.f32 %v2325, %v2338
        %2340 = vdwg.mxu0
        %v2341 = vrcp.pop %v2339
        %v2342 = vperm.slane %v2341, 0
        %v2343 = vmul.f32 %v2337, %v2342
        %vm2344 = vcmp.gt.f32.partialorder %v993, 0.0
        %vm2345 = vcmp.gt.f32.partialorder %v1443, 0.0
        %vm2346 = vcmp.gt.f32.partialorder %v1893, 0.0
        %vm2347 = vcmp.gt.f32.partialorder %v2343, 0.0
        %v2348 = vmul.f32 %v993, 1.442695
        %v2349 = vpow.pop %v2348
        %v2350 = vmul.f32 %v1443, 1.442695
        %v2351 = vpow.pop %v2350
        %v2352 = vmul.f32 %v1893, 1.442695
        %v2353 = vpow.pop %v2352
        %v2354 = vmul.f32 %v2343, 1.442695
        %v2355 = vpow.pop %v2354
        %v2356 = vsub.f32 %v2349, 1.0
        %v2357 = vsub.f32 %v2351, 1.0
        %v2358 = vsub.f32 %v2353, 1.0
        %v2359 = vsub.f32 %v2355, 1.0
        %v2360 = vsel %vm2344, %v993, %v2356
        %v2361 = vsel %vm2345, %v1443, %v2357
        %v2362 = vsel %vm2346, %v1893, %v2358
        %v2363 = vsel %vm2347, %v2343, %v2359
        %v2364 = vpack.c.bf16 %v2360, %v2360
        %v2365 = vpack.c.bf16 %v2361, %v2361
        %v2366 = vpack.c.bf16 %v2362, %v2362
        %v2367 = vpack.c.bf16 %v2363, %v2363
        %2368 = vst [vmem:[%s225] sm:$0xf] %v2364
        %2369 = vst [vmem:[%s225 + $0x4] sm:$0xf] %v2365
        %2370 = vst [vmem:[%s225 + $0x8] sm:$0xf] %v2366
        %2371 = vst [vmem:[%s225 + $0xc] sm:$0xf] %v2367
        %s2372 = sand.u32 %s120, 1
        %s2373 = sand.u32 %s120, 1
        %s2374 = smul.addr %s2373, 16
        %s2375 = scalar_lea.vmem [#allocation4], %s2374
        // Predicated region
        $region41: #{gat2_forward.5} parent=35 // pred_check
          %p2376 = pneg %p130
        $region42: #{gat2_forward.5} parent=35 // pred_check_branch
          %2378 = sbr.rel (%p2376) target = $region44
        $region43: #{gat2_forward.5} parent=35 // pred_region
          %s2379 = smul.addr %s18, 4
          %s2380 = scalar_lea.vmem %s4, %s2379
          // Predicated region
          $region45: #{gat2_forward.5} parent=43 // pred_check
            _
          $region46: #{gat2_forward.5} parent=43 // pred_check_branch
            %2382 = sbr.rel (0) target = $region48
          $region47: #{gat2_forward.5} parent=43 // pred_region
            // Predicated region
            $region49: #{gat2_forward.5} parent=47 // pred_check
              _
            $region50: #{gat2_forward.5} parent=47 // pred_check_branch
              %2384 = sbr.rel target = $region52
            $region51: #{gat2_forward.5} parent=47 // pred_region
              // Predicated region
              $region64: #{gat2_forward.5} parent=51 // pred_check
                _
              $region65: #{gat2_forward.5} parent=51 // pred_check_branch
                %2406 = sbr.rel (0) target = $region67
              $region66: #{gat2_forward.5} parent=51 // pred_region
                loop: start=0, step=1, limit=1
                $region68: #{gat2_forward.5} parent=66 // loop_pre_header
                  _
                $region69: #{gat2_forward.5} parent=66 // loop_header
                  %s2408 = sphi 0, %s2412
                  %p2409 = scmp.ge.s32.totalorder %s2408, 1
                  %s2413 = sphi %s2375, %s2375
                  %s2414 = sphi %s2380, %s2380
                $region70: #{gat2_forward.5} parent=66 // loop_header_branch
                  %2411 = sbr.rel (%p2409) target = $region74
                $region71: #{gat2_forward.5} parent=66 // loop_body
                  _
                $region72: #{gat2_forward.5} parent=66 // loop_footer
                  %s2412 = sadd.s32 1, %s2408
                $region73: #{gat2_forward.5} parent=66 // loop_footer_branch
                  %2407 = sbr.rel target = $region69
                $region74: #{gat2_forward.5} parent=66 // loop_exit
                  _
                %s2416 = ssub.s32 16, 1
                loop: start=0, step=1, limit=1
                $region75: #{gat2_forward.5} parent=66 // loop_pre_header
                  _
                $region76: #{gat2_forward.5} parent=66 // loop_header
                  %s2418 = sphi 0, %s2422
                  %p2419 = scmp.ge.s32.totalorder %s2418, 1
                  %s2423 = sphi %s2375, %s2375
                  %s2424 = sphi %s2380, %s2380
                $region77: #{gat2_forward.5} parent=66 // loop_header_branch
                  %2421 = sbr.rel (%p2419) target = $region81
                $region78: #{gat2_forward.5} parent=66 // loop_body
                  %v2425 = vld [vmem:[%s2423] sm:%s2416]
                  %2426 = vst [vmem:[%s2424] sm:%s2416] %v2425
                  %v2427 = vld [vmem:[%s2423 + $0x4] sm:%s2416]
                  %2428 = vst [vmem:[%s2424 + $0x8] sm:%s2416] %v2427
                  %v2429 = vld [vmem:[%s2423 + $0x8] sm:%s2416]
                  %2430 = vst [vmem:[%s2424 + $0x10] sm:%s2416] %v2429
                  %v2431 = vld [vmem:[%s2423 + $0xc] sm:%s2416]
                  %2432 = vst [vmem:[%s2424 + $0x18] sm:%s2416] %v2431
                $region79: #{gat2_forward.5} parent=66 // loop_footer
                  %s2422 = sadd.s32 1, %s2418
                $region80: #{gat2_forward.5} parent=66 // loop_footer_branch
                  %2417 = sbr.rel target = $region76
                $region81: #{gat2_forward.5} parent=66 // loop_exit
                  _
              $region67: #{gat2_forward.5} parent=51 // pred_fallthru
                _
            $region52: #{gat2_forward.5} parent=47 // pred_fallthru
              _
            // Predicated region
            $region53: #{gat2_forward.5} parent=47 // pred_check
              _
            $region54: #{gat2_forward.5} parent=47 // pred_check_branch
              %2386 = sbr.rel (0) target = $region56
            $region55: #{gat2_forward.5} parent=47 // pred_region
              %s2388 = ssub.s32 16, 1
              loop: start=0, step=1, limit=1
              $region57: #{gat2_forward.5} parent=55 // loop_pre_header
                _
              $region58: #{gat2_forward.5} parent=55 // loop_header
                %s2390 = sphi 0, %s2394
                %p2391 = scmp.ge.s32.totalorder %s2390, 1
                %s2395 = sphi %s2375, %s2375
                %s2396 = sphi %s2380, %s2380
              $region59: #{gat2_forward.5} parent=55 // loop_header_branch
                %2393 = sbr.rel (%p2391) target = $region63
              $region60: #{gat2_forward.5} parent=55 // loop_body
                %v2397 = vld [vmem:[%s2395] sm:%s2388]
                %2398 = vst [vmem:[%s2396] sm:%s2388] %v2397
                %v2399 = vld [vmem:[%s2395 + $0x4] sm:%s2388]
                %2400 = vst [vmem:[%s2396 + $0x8] sm:%s2388] %v2399
                %v2401 = vld [vmem:[%s2395 + $0x8] sm:%s2388]
                %2402 = vst [vmem:[%s2396 + $0x10] sm:%s2388] %v2401
                %v2403 = vld [vmem:[%s2395 + $0xc] sm:%s2388]
                %2404 = vst [vmem:[%s2396 + $0x18] sm:%s2388] %v2403
              $region61: #{gat2_forward.5} parent=55 // loop_footer
                %s2394 = sadd.s32 1, %s2390
              $region62: #{gat2_forward.5} parent=55 // loop_footer_branch
                %2389 = sbr.rel target = $region58
              $region63: #{gat2_forward.5} parent=55 // loop_exit
                _
            $region56: #{gat2_forward.5} parent=47 // pred_fallthru
              _
          $region48: #{gat2_forward.5} parent=43 // pred_fallthru
            _
          %2433 = vnop
        $region44: #{gat2_forward.5} parent=35 // pred_fallthru
          _
      $region36: #{gat2_forward.5} parent=5 // pred_fallthru
        _
      %p2434 = scmp.le.s32.totalorder 2, %s13
      // Predicated region
      $region82: #{gat2_forward.5} parent=5 // pred_check
        %p2435 = pneg %p2434
      $region83: #{gat2_forward.5} parent=5 // pred_check_branch
        %2437 = sbr.rel (%p2435) target = $region85
      $region84: #{gat2_forward.5} parent=5 // pred_region
        %s2438 = ssub.s32 %s13, 2
        // Predicated region
        $region86: #{gat2_forward.5} parent=84 // pred_check
          %p2439 = pneg %p136
        $region87: #{gat2_forward.5} parent=84 // pred_check_branch
          %2441 = sbr.rel (%p2439) target = $region89
        $region88: #{gat2_forward.5} parent=84 // pred_region
          %s2442 = sand.u32 %s121, 1
          %s2443 = sand.u32 %s121, 1
          %s2444 = smul.addr %s2443, 16
          %s2445 = scalar_lea.vmem [#allocation4], %s2444
        $region89: #{gat2_forward.5} parent=84 // pred_fallthru
          _
      $region85: #{gat2_forward.5} parent=5 // pred_fallthru
        _
    $region6: #{gat2_forward.5} parent=1 // loop_footer
      %s17 = sadd.s32 1, %s13
    $region7: #{gat2_forward.5} parent=1 // loop_footer_branch
      %12 = sbr.rel target = $region3
    $region8: #{gat2_forward.5} parent=1 // loop_exit
      _
    %2446 = vsyncpa [#allocation3], 1
    %s2447 = scalar_lea.sflag [#allocation3], 1
    %2448 = vsyncpa %s2447, 1

</llo_original>
